<compile_context>
chip_gen: v7x
topology: tpu7x:2x2x1
jax: 0.10.0
libtpu: 0.0.40
codegen_flags: <defaults>
</compile_context>

<pallas_src>
import math

import jax
import jax.numpy as jnp
from jax import lax
from jax.experimental import pallas as pl
from jax.experimental.pallas import tpu as pltpu

F32 = jnp.float32
BF16 = jnp.bfloat16


def _rmsnorm(x, w, eps=1e-6):
    # x: (rows, d) f32, w: (1, d) f32
    ms = jnp.mean(x * x, axis=-1, keepdims=True)
    return x * lax.rsqrt(ms + eps) * w


def _gelu_tanh(x):
    # TODO(synk): PyTorch nn.GELU default uses exact erf; tanh approximation used here.
    c = math.sqrt(2.0 / math.pi)
    return 0.5 * x * (1.0 + jnp.tanh(c * (x + 0.044715 * x * x * x)))


def transformer_block_kernel(
    # inputs
    q_ref, k_ref, v_ref,
    rms1_ref,
    wq_ref, bq_ref, wk_ref, bk_ref, wv_ref, bv_ref,
    wo_ref, bo_ref,
    rms2_ref,
    wval_ref, bval_ref, wgate_ref, bgate_ref,
    w2_ref, b2_ref,
    # output
    o_ref,
    # scratch (persists across the q-tile grid axis)
    kh_scratch, vh_scratch,
):
    qi = pl.program_id(1)
    n_heads, _, hd = wq_ref.shape          # wq: (H, d, hd) bf16
    scale = 1.0 / math.sqrt(hd)
    rms1 = rms1_ref[...]

    # ---- K/V path: RMSNorm + per-head projection once per batch element; cached ----
    @pl.when(qi == 0)
    def _():
        kn = _rmsnorm(k_ref[...], rms1).astype(BF16)       # (T, d)
        vn = _rmsnorm(v_ref[...], rms1).astype(BF16)
        for h in range(n_heads):
            kp_h = jnp.dot(kn, wk_ref[h], preferred_element_type=F32) + bk_ref[h]
            vp_h = jnp.dot(vn, wv_ref[h], preferred_element_type=F32) + bv_ref[h]
            kh_scratch[h] = kp_h.astype(BF16)              # (T, hd)
            vh_scratch[h] = vp_h.astype(BF16)

    # ---- Q path for this sequence tile ----------------------------------------------
    q = q_ref[...]                                         # (TQ, d) f32
    qn = _rmsnorm(q, rms1).astype(BF16)

    acc = jnp.zeros(q.shape, F32)                          # (TQ, d) out-proj accumulator
    for h in range(n_heads):
        qp_h = jnp.dot(qn, wq_ref[h], preferred_element_type=F32) + bq_ref[h]  # (TQ, hd)
        kh = kh_scratch[h]                                 # (T, hd) bf16
        vh = vh_scratch[h]
        # scores: contract the head dim of q and k directly (no explicit transpose)
        s = lax.dot_general(qp_h.astype(BF16), kh, (((1,), (1,)), ((), ())),
                            preferred_element_type=F32) * scale               # (TQ, T)
        m = jnp.max(s, axis=-1, keepdims=True)
        p = jnp.exp(s - m)
        p = p * pl.reciprocal(jnp.sum(p, axis=-1, keepdims=True), approx=True)
        ctx = jnp.dot(p.astype(BF16), vh, preferred_element_type=F32)          # (TQ, hd)
        # fold this head straight into the output projection (no lane concat)
        acc = acc + jnp.dot(ctx.astype(BF16), wo_ref[h], preferred_element_type=F32)
    attn_out = acc + bo_ref[...]

    # ---- residual 1 (dropout == identity in eval mode) -------------------------------
    x1 = q + attn_out

    # ---- GEGLU FFN: val / gate as separate lane-aligned matmuls ----------------------
    xn = _rmsnorm(x1, rms2_ref[...]).astype(BF16)
    val = jnp.dot(xn, wval_ref[...], preferred_element_type=F32) + bval_ref[...]
    gate = jnp.dot(xn, wgate_ref[...], preferred_element_type=F32) + bgate_ref[...]
    ff = (val * _gelu_tanh(gate)).astype(BF16)
    ffn_out = jnp.dot(ff, w2_ref[...], preferred_element_type=F32) + b2_ref[...]

    # ---- residual 2 -------------------------------------------------------------------
    o_ref[...] = (x1 + ffn_out).astype(o_ref.dtype)


def transformer_block(query, key, value, params, *, n_heads, q_tile=128):
    B, T, d = query.shape
    hd = d // n_heads
    d_ff = params["w2"].shape[1]
    TQ = min(q_tile, T)
    assert T % TQ == 0, "sequence length must be divisible by the q tile"
    nq = T // TQ

    # ---- wrapper-side layout plumbing (free): transpose / split / head-reshape, bf16 --
    in_w = params["in_w"]                                   # (3d, d), PyTorch (out, in)
    in_b = params["in_b"].reshape(1, 3 * d).astype(F32)

    def per_head_proj(w_slice, b_slice):
        # w_slice: (d, d) rows = output features (head-major); -> (H, d_in, hd)
        w_h = w_slice.reshape(n_heads, hd, d).transpose(0, 2, 1).astype(BF16)
        b_h = b_slice.reshape(n_heads, 1, hd).astype(F32)
        return w_h, b_h

    wq, bq = per_head_proj(in_w[0:d], in_b[:, 0:d])
    wk, bk = per_head_proj(in_w[d:2 * d], in_b[:, d:2 * d])
    wv, bv = per_head_proj(in_w[2 * d:3 * d], in_b[:, 2 * d:3 * d])

    wo = params["out_w"].T.reshape(n_heads, hd, d).astype(BF16)   # (H, hd, d)
    bo = params["out_b"].reshape(1, d).astype(F32)

    w1 = params["w1"]                                       # (2*d_ff, d)
    b1 = params["b1"].reshape(1, 2 * d_ff).astype(F32)
    wval = w1[0:d_ff].T.astype(BF16)                        # (d, d_ff)
    wgate = w1[d_ff:2 * d_ff].T.astype(BF16)
    bval = b1[:, 0:d_ff]
    bgate = b1[:, d_ff:2 * d_ff]

    w2 = params["w2"].T.astype(BF16)                        # (d_ff, d)
    b2 = params["b2"].reshape(1, d).astype(F32)

    rms1 = params["rms1"].reshape(1, d).astype(F32)
    rms2 = params["rms2"].reshape(1, d).astype(F32)

    q_spec = pl.BlockSpec((None, TQ, d), lambda b, qi: (b, qi, 0))
    kv_spec = pl.BlockSpec((None, T, d), lambda b, qi: (b, 0, 0))
    full = lambda shape: pl.BlockSpec(shape, lambda b, qi: (0,) * len(shape))

    return pl.pallas_call(
        transformer_block_kernel,
        out_shape=jax.ShapeDtypeStruct((B, T, d), query.dtype),
        grid_spec=pltpu.PrefetchScalarGridSpec(
            num_scalar_prefetch=0,
            grid=(B, nq),
            in_specs=[
                q_spec, kv_spec, kv_spec,
                full((1, d)),                                    # rms1
                full((n_heads, d, hd)), full((n_heads, 1, hd)),  # wq, bq
                full((n_heads, d, hd)), full((n_heads, 1, hd)),  # wk, bk
                full((n_heads, d, hd)), full((n_heads, 1, hd)),  # wv, bv
                full((n_heads, hd, d)), full((1, d)),            # wo (head-major), bo
                full((1, d)),                                    # rms2
                full((d, d_ff)), full((1, d_ff)),                # wval, bval
                full((d, d_ff)), full((1, d_ff)),                # wgate, bgate
                full((d_ff, d)), full((1, d)),                   # w2, b2
            ],
            out_specs=q_spec,
            scratch_shapes=[
                pltpu.VMEM((n_heads, T, hd), BF16),              # cached projected K heads
                pltpu.VMEM((n_heads, T, hd), BF16),              # cached projected V heads
            ],
        ),
        compiler_params=pltpu.CompilerParams(
            # batch axis shards across megacore; q-tile axis must stay sequential so the
            # qi==0 K/V projection cache is populated before later tiles of the same b.
            dimension_semantics=("parallel", "arbitrary"),
            vmem_limit_bytes=64 * 1024 * 1024,
        ),
    )(
        query, key, value,
        rms1,
        wq, bq, wk, bk, wv, bv,
        wo, bo,
        rms2,
        wval, bval, wgate, bgate,
        w2, b2,
    )


def init_params(key, d_model, d_ff):
    ks = jax.random.split(key, 8)
    scale = 0.02
    return {
        "rms1": jnp.ones((1, d_model), F32),
        "rms2": jnp.ones((1, d_model), F32),
        "in_w": scale * jax.random.normal(ks[0], (3 * d_model, d_model), F32),
        "in_b": scale * jax.random.normal(ks[1], (1, 3 * d_model), F32),
        "out_w": scale * jax.random.normal(ks[2], (d_model, d_model), F32),
        "out_b": scale * jax.random.normal(ks[3], (1, d_model), F32),
        "w1": scale * jax.random.normal(ks[4], (2 * d_ff, d_model), F32),
        "b1": scale * jax.random.normal(ks[5], (1, 2 * d_ff), F32),
        "w2": scale * jax.random.normal(ks[6], (d_model, d_ff), F32),
        "b2": scale * jax.random.normal(ks[7], (1, d_model), F32),
    }


def reference(query, key, value, params, n_heads):
    # pure-JAX f32 reference (mirrors the PyTorch module, tanh-GELU).
    B, T, d = query.shape
    hd = d // n_heads
    d_ff = params["w2"].shape[1]
    rms = lambda x, w: _rmsnorm(x, w.reshape(1, d))
    qn, kn, vn = (rms(x, params["rms1"]) for x in (query, key, value))
    W, b = params["in_w"], params["in_b"].reshape(-1)
    qp = qn @ W[0:d].T + b[0:d]
    kp = kn @ W[d:2 * d].T + b[d:2 * d]
    vp = vn @ W[2 * d:].T + b[2 * d:]
    split = lambda x: x.reshape(B, T, n_heads, hd).transpose(0, 2, 1, 3)
    qh, kh, vh = split(qp), split(kp), split(vp)
    s = jnp.einsum("bhqc,bhkc->bhqk", qh, kh) / math.sqrt(hd)
    p = jax.nn.softmax(s, axis=-1)
    ctx = jnp.einsum("bhqk,bhkc->bhqc", p, vh).transpose(0, 2, 1, 3).reshape(B, T, d)
    x1 = query + (ctx @ params["out_w"].T + params["out_b"].reshape(-1))
    xn = rms(x1, params["rms2"])
    h = xn @ params["w1"].T + params["b1"].reshape(-1)
    ff = h[..., :d_ff] * _gelu_tanh(h[..., d_ff:])
    return x1 + (ff @ params["w2"].T + params["b2"].reshape(-1))


if __name__ == "__main__":
    B, T, d_model, n_heads = 2, 8, 32, 4
    d_ff = 4 * d_model

    root = jax.random.PRNGKey(0)
    k_q, k_k, k_v, k_p = jax.random.split(root, 4)
    query = jax.random.normal(k_q, (B, T, d_model), F32)
    key_t = jax.random.normal(k_k, (B, T, d_model), F32)
    value = jax.random.normal(k_v, (B, T, d_model), F32)
    params = init_params(k_p, d_model, d_ff)

    out = transformer_block(query, key_t, value, params, n_heads=n_heads)
    jax.block_until_ready(out)
    assert out.shape == (B, T, d_model)

    ref = reference(query, key_t, value, params, n_heads)
    assert bool(jnp.allclose(out, ref, atol=3e-2, rtol=3e-2)), "kernel/reference mismatch"
    print("KERNEL_OK")
</pallas_src>

<mosaic_0001>
module attributes {stable_mosaic.version = 11 : i64} {
  func.func @transformer_block_kernel(%arg0: i32, %arg1: i32, %arg2: memref<1x8x32xf32, #tpu.memory_space<vmem>>, %arg3: memref<1x8x32xf32, #tpu.memory_space<vmem>>, %arg4: memref<1x8x32xf32, #tpu.memory_space<vmem>>, %arg5: memref<1x32xf32, #tpu.memory_space<vmem>>, %arg6: memref<4x32x8xbf16, #tpu.memory_space<vmem>>, %arg7: memref<4x1x8xf32, #tpu.memory_space<vmem>>, %arg8: memref<4x32x8xbf16, #tpu.memory_space<vmem>>, %arg9: memref<4x1x8xf32, #tpu.memory_space<vmem>>, %arg10: memref<4x32x8xbf16, #tpu.memory_space<vmem>>, %arg11: memref<4x1x8xf32, #tpu.memory_space<vmem>>, %arg12: memref<4x8x32xbf16, #tpu.memory_space<vmem>>, %arg13: memref<1x32xf32, #tpu.memory_space<vmem>>, %arg14: memref<1x32xf32, #tpu.memory_space<vmem>>, %arg15: memref<32x128xbf16, #tpu.memory_space<vmem>>, %arg16: memref<1x128xf32, #tpu.memory_space<vmem>>, %arg17: memref<32x128xbf16, #tpu.memory_space<vmem>>, %arg18: memref<1x128xf32, #tpu.memory_space<vmem>>, %arg19: memref<128x32xbf16, #tpu.memory_space<vmem>>, %arg20: memref<1x32xf32, #tpu.memory_space<vmem>>, %arg21: memref<1x8x32xf32, #tpu.memory_space<vmem>>, %arg22: memref<4x8x8xbf16, #tpu.memory_space<vmem>>, %arg23: memref<4x8x8xbf16, #tpu.memory_space<vmem>>) attributes {dimension_semantics = [#tpu.dimension_semantics<parallel>, #tpu.dimension_semantics<arbitrary>], iteration_bounds = array<i64: 2, 1>, scalar_prefetch = 0 : i64, scratch_operands = 2 : i64, tpu.core_type = #tpu.core_type<tc>, window_params = [{transform_indices = @transform_0, window_bounds = array<i64: 1, 8, 32>}, {transform_indices = @transform_1, window_bounds = array<i64: 1, 8, 32>}, {transform_indices = @transform_2, window_bounds = array<i64: 1, 8, 32>}, {pipeline_mode = #tpu.pipeline_mode<synchronous>, transform_indices = @transform_3, window_bounds = array<i64: 1, 32>}, {pipeline_mode = #tpu.pipeline_mode<synchronous>, transform_indices = @transform_4, window_bounds = array<i64: 4, 32, 8>}, {pipeline_mode = #tpu.pipeline_mode<synchronous>, transform_indices = @transform_5, window_bounds = array<i64: 4, 1, 8>}, {pipeline_mode = #tpu.pipeline_mode<synchronous>, transform_indices = @transform_6, window_bounds = array<i64: 4, 32, 8>}, {pipeline_mode = #tpu.pipeline_mode<synchronous>, transform_indices = @transform_7, window_bounds = array<i64: 4, 1, 8>}, {pipeline_mode = #tpu.pipeline_mode<synchronous>, transform_indices = @transform_8, window_bounds = array<i64: 4, 32, 8>}, {pipeline_mode = #tpu.pipeline_mode<synchronous>, transform_indices = @transform_9, window_bounds = array<i64: 4, 1, 8>}, {pipeline_mode = #tpu.pipeline_mode<synchronous>, transform_indices = @transform_10, window_bounds = array<i64: 4, 8, 32>}, {pipeline_mode = #tpu.pipeline_mode<synchronous>, transform_indices = @transform_11, window_bounds = array<i64: 1, 32>}, {pipeline_mode = #tpu.pipeline_mode<synchronous>, transform_indices = @transform_12, window_bounds = array<i64: 1, 32>}, {pipeline_mode = #tpu.pipeline_mode<synchronous>, transform_indices = @transform_13, window_bounds = array<i64: 32, 128>}, {pipeline_mode = #tpu.pipeline_mode<synchronous>, transform_indices = @transform_14, window_bounds = array<i64: 1, 128>}, {pipeline_mode = #tpu.pipeline_mode<synchronous>, transform_indices = @transform_15, window_bounds = array<i64: 32, 128>}, {pipeline_mode = #tpu.pipeline_mode<synchronous>, transform_indices = @transform_16, window_bounds = array<i64: 1, 128>}, {pipeline_mode = #tpu.pipeline_mode<synchronous>, transform_indices = @transform_17, window_bounds = array<i64: 128, 32>}, {pipeline_mode = #tpu.pipeline_mode<synchronous>, transform_indices = @transform_18, window_bounds = array<i64: 1, 32>}, {transform_indices = @transform_19, window_bounds = array<i64: 1, 8, 32>}]} {
    %c0 = arith.constant 0 : index
    %c0_0 = arith.constant 0 : index
    %0 = vector.load %arg5[%c0, %c0_0] : memref<1x32xf32, #tpu.memory_space<vmem>>, vector<1x32xf32>
    %c0_i32 = arith.constant 0 : i32
    %1 = arith.cmpi eq, %arg1, %c0_i32 : i32
    %2 = arith.extui %1 : i1 to i32
    %c0_i32_1 = arith.constant 0 : i32
    %3 = arith.cmpi ne, %2, %c0_i32_1 : i32
    scf.if %3 {
      %c0_122 = arith.constant 0 : index
      %c0_123 = arith.constant 0 : index
      %c0_124 = arith.constant 0 : index
      %200 = vector.load %arg3[%c0_122, %c0_123, %c0_124] : memref<1x8x32xf32, #tpu.memory_space<vmem>>, vector<1x8x32xf32>
      %201 = vector.shape_cast %200 : vector<1x8x32xf32> to vector<8x32xf32>
      %202 = arith.mulf %201, %201 : vector<8x32xf32>
      %cst_125 = arith.constant dense<0.000000e+00> : vector<8xf32>
      %203 = vector.multi_reduction <add>, %202, %cst_125 [1] : vector<8x32xf32> to vector<8xf32>
      %204 = vector.shape_cast %203 : vector<8xf32> to vector<8x1xf32>
      %cst_126 = arith.constant 3.200000e+01 : f32
      %205 = vector.broadcast %cst_126 : f32 to vector<8x1xf32>
      %206 = arith.divf %204, %205 : vector<8x1xf32>
      %cst_127 = arith.constant 9.99999997E-7 : f32
      %207 = vector.broadcast %cst_127 : f32 to vector<8x1xf32>
      %208 = arith.addf %206, %207 : vector<8x1xf32>
      %209 = math.rsqrt %208 : vector<8x1xf32>
      %210 = vector.broadcast %209 : vector<8x1xf32> to vector<8x32xf32>
      %211 = arith.mulf %201, %210 : vector<8x32xf32>
      %212 = vector.broadcast %0 : vector<1x32xf32> to vector<8x32xf32>
      %213 = arith.mulf %211, %212 : vector<8x32xf32>
      %214 = arith.truncf %213 : vector<8x32xf32> to vector<8x32xbf16>
      %c0_128 = arith.constant 0 : index
      %c0_129 = arith.constant 0 : index
      %c0_130 = arith.constant 0 : index
      %215 = vector.load %arg4[%c0_128, %c0_129, %c0_130] : memref<1x8x32xf32, #tpu.memory_space<vmem>>, vector<1x8x32xf32>
      %216 = vector.shape_cast %215 : vector<1x8x32xf32> to vector<8x32xf32>
      %217 = arith.mulf %216, %216 : vector<8x32xf32>
      %cst_131 = arith.constant dense<0.000000e+00> : vector<8xf32>
      %218 = vector.multi_reduction <add>, %217, %cst_131 [1] : vector<8x32xf32> to vector<8xf32>
      %219 = vector.shape_cast %218 : vector<8xf32> to vector<8x1xf32>
      %cst_132 = arith.constant 3.200000e+01 : f32
      %220 = vector.broadcast %cst_132 : f32 to vector<8x1xf32>
      %221 = arith.divf %219, %220 : vector<8x1xf32>
      %cst_133 = arith.constant 9.99999997E-7 : f32
      %222 = vector.broadcast %cst_133 : f32 to vector<8x1xf32>
      %223 = arith.addf %221, %222 : vector<8x1xf32>
      %224 = math.rsqrt %223 : vector<8x1xf32>
      %225 = vector.broadcast %224 : vector<8x1xf32> to vector<8x32xf32>
      %226 = arith.mulf %216, %225 : vector<8x32xf32>
      %227 = vector.broadcast %0 : vector<1x32xf32> to vector<8x32xf32>
      %228 = arith.mulf %226, %227 : vector<8x32xf32>
      %229 = arith.truncf %228 : vector<8x32xf32> to vector<8x32xbf16>
      %c0_134 = arith.constant 0 : index
      %c0_135 = arith.constant 0 : index
      %c0_136 = arith.constant 0 : index
      %230 = vector.load %arg8[%c0_134, %c0_135, %c0_136] : memref<4x32x8xbf16, #tpu.memory_space<vmem>>, vector<1x32x8xbf16>
      %231 = vector.shape_cast %230 : vector<1x32x8xbf16> to vector<32x8xbf16>
      %cst_137 = arith.constant dense<0.000000e+00> : vector<8x8xf32>
      %232 = tpu.matmul %214, %231, %cst_137 {dimension_numbers = #tpu.dot_dimension_numbers<[1], [0], [0], [1], [0, 0, 1, 1], [], []>} : vector<8x32xbf16>, vector<32x8xbf16>, vector<8x8xf32> -> vector<8x8xf32>
      %c0_138 = arith.constant 0 : index
      %c0_139 = arith.constant 0 : index
      %c0_140 = arith.constant 0 : index
      %233 = vector.load %arg9[%c0_138, %c0_139, %c0_140] : memref<4x1x8xf32, #tpu.memory_space<vmem>>, vector<1x1x8xf32>
      %234 = vector.shape_cast %233 : vector<1x1x8xf32> to vector<1x8xf32>
      %235 = vector.broadcast %234 : vector<1x8xf32> to vector<8x8xf32>
      %236 = arith.addf %232, %235 : vector<8x8xf32>
      %c0_141 = arith.constant 0 : index
      %c0_142 = arith.constant 0 : index
      %c0_143 = arith.constant 0 : index
      %237 = vector.load %arg10[%c0_141, %c0_142, %c0_143] : memref<4x32x8xbf16, #tpu.memory_space<vmem>>, vector<1x32x8xbf16>
      %238 = vector.shape_cast %237 : vector<1x32x8xbf16> to vector<32x8xbf16>
      %cst_144 = arith.constant dense<0.000000e+00> : vector<8x8xf32>
      %239 = tpu.matmul %229, %238, %cst_144 {dimension_numbers = #tpu.dot_dimension_numbers<[1], [0], [0], [1], [0, 0, 1, 1], [], []>} : vector<8x32xbf16>, vector<32x8xbf16>, vector<8x8xf32> -> vector<8x8xf32>
      %c0_145 = arith.constant 0 : index
      %c0_146 = arith.constant 0 : index
      %c0_147 = arith.constant 0 : index
      %240 = vector.load %arg11[%c0_145, %c0_146, %c0_147] : memref<4x1x8xf32, #tpu.memory_space<vmem>>, vector<1x1x8xf32>
      %241 = vector.shape_cast %240 : vector<1x1x8xf32> to vector<1x8xf32>
      %242 = vector.broadcast %241 : vector<1x8xf32> to vector<8x8xf32>
      %243 = arith.addf %239, %242 : vector<8x8xf32>
      %244 = arith.truncf %236 : vector<8x8xf32> to vector<8x8xbf16>
      %c0_148 = arith.constant 0 : index
      %c0_149 = arith.constant 0 : index
      %c0_150 = arith.constant 0 : index
      %245 = vector.load %arg22[%c0_148, %c0_149, %c0_150] : memref<4x8x8xbf16, #tpu.memory_space<vmem>>, vector<1x8x8xbf16>
      %246 = vector.shape_cast %245 : vector<1x8x8xbf16> to vector<8x8xbf16>
      %247 = vector.shape_cast %244 : vector<8x8xbf16> to vector<1x8x8xbf16>
      tpu.vector_store %arg22[%c0_148, %c0_149, %c0_150], %247 {strides = array<i32>} : memref<4x8x8xbf16, #tpu.memory_space<vmem>>, vector<1x8x8xbf16>,
      %248 = arith.truncf %243 : vector<8x8xf32> to vector<8x8xbf16>
      %c0_151 = arith.constant 0 : index
      %c0_152 = arith.constant 0 : index
      %c0_153 = arith.constant 0 : index
      %249 = vector.load %arg23[%c0_151, %c0_152, %c0_153] : memref<4x8x8xbf16, #tpu.memory_space<vmem>>, vector<1x8x8xbf16>
      %250 = vector.shape_cast %249 : vector<1x8x8xbf16> to vector<8x8xbf16>
      %251 = vector.shape_cast %248 : vector<8x8xbf16> to vector<1x8x8xbf16>
      tpu.vector_store %arg23[%c0_151, %c0_152, %c0_153], %251 {strides = array<i32>} : memref<4x8x8xbf16, #tpu.memory_space<vmem>>, vector<1x8x8xbf16>,
      %c1_154 = arith.constant 1 : index
      %c0_155 = arith.constant 0 : index
      %c0_156 = arith.constant 0 : index
      %252 = vector.load %arg8[%c1_154, %c0_155, %c0_156] : memref<4x32x8xbf16, #tpu.memory_space<vmem>>, vector<1x32x8xbf16>
      %253 = vector.shape_cast %252 : vector<1x32x8xbf16> to vector<32x8xbf16>
      %cst_157 = arith.constant dense<0.000000e+00> : vector<8x8xf32>
      %254 = tpu.matmul %214, %253, %cst_157 {dimension_numbers = #tpu.dot_dimension_numbers<[1], [0], [0], [1], [0, 0, 1, 1], [], []>} : vector<8x32xbf16>, vector<32x8xbf16>, vector<8x8xf32> -> vector<8x8xf32>
      %c1_158 = arith.constant 1 : index
      %c0_159 = arith.constant 0 : index
      %c0_160 = arith.constant 0 : index
      %255 = vector.load %arg9[%c1_158, %c0_159, %c0_160] : memref<4x1x8xf32, #tpu.memory_space<vmem>>, vector<1x1x8xf32>
      %256 = vector.shape_cast %255 : vector<1x1x8xf32> to vector<1x8xf32>
      %257 = vector.broadcast %256 : vector<1x8xf32> to vector<8x8xf32>
      %258 = arith.addf %254, %257 : vector<8x8xf32>
      %c1_161 = arith.constant 1 : index
      %c0_162 = arith.constant 0 : index
      %c0_163 = arith.constant 0 : index
      %259 = vector.load %arg10[%c1_161, %c0_162, %c0_163] : memref<4x32x8xbf16, #tpu.memory_space<vmem>>, vector<1x32x8xbf16>
      %260 = vector.shape_cast %259 : vector<1x32x8xbf16> to vector<32x8xbf16>
      %cst_164 = arith.constant dense<0.000000e+00> : vector<8x8xf32>
      %261 = tpu.matmul %229, %260, %cst_164 {dimension_numbers = #tpu.dot_dimension_numbers<[1], [0], [0], [1], [0, 0, 1, 1], [], []>} : vector<8x32xbf16>, vector<32x8xbf16>, vector<8x8xf32> -> vector<8x8xf32>
      %c1_165 = arith.constant 1 : index
      %c0_166 = arith.constant 0 : index
      %c0_167 = arith.constant 0 : index
      %262 = vector.load %arg11[%c1_165, %c0_166, %c0_167] : memref<4x1x8xf32, #tpu.memory_space<vmem>>, vector<1x1x8xf32>
      %263 = vector.shape_cast %262 : vector<1x1x8xf32> to vector<1x8xf32>
      %264 = vector.broadcast %263 : vector<1x8xf32> to vector<8x8xf32>
      %265 = arith.addf %261, %264 : vector<8x8xf32>
      %266 = arith.truncf %258 : vector<8x8xf32> to vector<8x8xbf16>
      %c1_168 = arith.constant 1 : index
      %c0_169 = arith.constant 0 : index
      %c0_170 = arith.constant 0 : index
      %267 = vector.load %arg22[%c1_168, %c0_169, %c0_170] : memref<4x8x8xbf16, #tpu.memory_space<vmem>>, vector<1x8x8xbf16>
      %268 = vector.shape_cast %267 : vector<1x8x8xbf16> to vector<8x8xbf16>
      %269 = vector.shape_cast %266 : vector<8x8xbf16> to vector<1x8x8xbf16>
      tpu.vector_store %arg22[%c1_168, %c0_169, %c0_170], %269 {strides = array<i32>} : memref<4x8x8xbf16, #tpu.memory_space<vmem>>, vector<1x8x8xbf16>,
      %270 = arith.truncf %265 : vector<8x8xf32> to vector<8x8xbf16>
      %c1_171 = arith.constant 1 : index
      %c0_172 = arith.constant 0 : index
      %c0_173 = arith.constant 0 : index
      %271 = vector.load %arg23[%c1_171, %c0_172, %c0_173] : memref<4x8x8xbf16, #tpu.memory_space<vmem>>, vector<1x8x8xbf16>
      %272 = vector.shape_cast %271 : vector<1x8x8xbf16> to vector<8x8xbf16>
      %273 = vector.shape_cast %270 : vector<8x8xbf16> to vector<1x8x8xbf16>
      tpu.vector_store %arg23[%c1_171, %c0_172, %c0_173], %273 {strides = array<i32>} : memref<4x8x8xbf16, #tpu.memory_space<vmem>>, vector<1x8x8xbf16>,
      %c2_174 = arith.constant 2 : index
      %c0_175 = arith.constant 0 : index
      %c0_176 = arith.constant 0 : index
      %274 = vector.load %arg8[%c2_174, %c0_175, %c0_176] : memref<4x32x8xbf16, #tpu.memory_space<vmem>>, vector<1x32x8xbf16>
      %275 = vector.shape_cast %274 : vector<1x32x8xbf16> to vector<32x8xbf16>
      %cst_177 = arith.constant dense<0.000000e+00> : vector<8x8xf32>
      %276 = tpu.matmul %214, %275, %cst_177 {dimension_numbers = #tpu.dot_dimension_numbers<[1], [0], [0], [1], [0, 0, 1, 1], [], []>} : vector<8x32xbf16>, vector<32x8xbf16>, vector<8x8xf32> -> vector<8x8xf32>
      %c2_178 = arith.constant 2 : index
      %c0_179 = arith.constant 0 : index
      %c0_180 = arith.constant 0 : index
      %277 = vector.load %arg9[%c2_178, %c0_179, %c0_180] : memref<4x1x8xf32, #tpu.memory_space<vmem>>, vector<1x1x8xf32>
      %278 = vector.shape_cast %277 : vector<1x1x8xf32> to vector<1x8xf32>
      %279 = vector.broadcast %278 : vector<1x8xf32> to vector<8x8xf32>
      %280 = arith.addf %276, %279 : vector<8x8xf32>
      %c2_181 = arith.constant 2 : index
      %c0_182 = arith.constant 0 : index
      %c0_183 = arith.constant 0 : index
      %281 = vector.load %arg10[%c2_181, %c0_182, %c0_183] : memref<4x32x8xbf16, #tpu.memory_space<vmem>>, vector<1x32x8xbf16>
      %282 = vector.shape_cast %281 : vector<1x32x8xbf16> to vector<32x8xbf16>
      %cst_184 = arith.constant dense<0.000000e+00> : vector<8x8xf32>
      %283 = tpu.matmul %229, %282, %cst_184 {dimension_numbers = #tpu.dot_dimension_numbers<[1], [0], [0], [1], [0, 0, 1, 1], [], []>} : vector<8x32xbf16>, vector<32x8xbf16>, vector<8x8xf32> -> vector<8x8xf32>
      %c2_185 = arith.constant 2 : index
      %c0_186 = arith.constant 0 : index
      %c0_187 = arith.constant 0 : index
      %284 = vector.load %arg11[%c2_185, %c0_186, %c0_187] : memref<4x1x8xf32, #tpu.memory_space<vmem>>, vector<1x1x8xf32>
      %285 = vector.shape_cast %284 : vector<1x1x8xf32> to vector<1x8xf32>
      %286 = vector.broadcast %285 : vector<1x8xf32> to vector<8x8xf32>
      %287 = arith.addf %283, %286 : vector<8x8xf32>
      %288 = arith.truncf %280 : vector<8x8xf32> to vector<8x8xbf16>
      %c2_188 = arith.constant 2 : index
      %c0_189 = arith.constant 0 : index
      %c0_190 = arith.constant 0 : index
      %289 = vector.load %arg22[%c2_188, %c0_189, %c0_190] : memref<4x8x8xbf16, #tpu.memory_space<vmem>>, vector<1x8x8xbf16>
      %290 = vector.shape_cast %289 : vector<1x8x8xbf16> to vector<8x8xbf16>
      %291 = vector.shape_cast %288 : vector<8x8xbf16> to vector<1x8x8xbf16>
      tpu.vector_store %arg22[%c2_188, %c0_189, %c0_190], %291 {strides = array<i32>} : memref<4x8x8xbf16, #tpu.memory_space<vmem>>, vector<1x8x8xbf16>,
      %292 = arith.truncf %287 : vector<8x8xf32> to vector<8x8xbf16>
      %c2_191 = arith.constant 2 : index
      %c0_192 = arith.constant 0 : index
      %c0_193 = arith.constant 0 : index
      %293 = vector.load %arg23[%c2_191, %c0_192, %c0_193] : memref<4x8x8xbf16, #tpu.memory_space<vmem>>, vector<1x8x8xbf16>
      %294 = vector.shape_cast %293 : vector<1x8x8xbf16> to vector<8x8xbf16>
      %295 = vector.shape_cast %292 : vector<8x8xbf16> to vector<1x8x8xbf16>
      tpu.vector_store %arg23[%c2_191, %c0_192, %c0_193], %295 {strides = array<i32>} : memref<4x8x8xbf16, #tpu.memory_space<vmem>>, vector<1x8x8xbf16>,
      %c3_194 = arith.constant 3 : index
      %c0_195 = arith.constant 0 : index
      %c0_196 = arith.constant 0 : index
      %296 = vector.load %arg8[%c3_194, %c0_195, %c0_196] : memref<4x32x8xbf16, #tpu.memory_space<vmem>>, vector<1x32x8xbf16>
      %297 = vector.shape_cast %296 : vector<1x32x8xbf16> to vector<32x8xbf16>
      %cst_197 = arith.constant dense<0.000000e+00> : vector<8x8xf32>
      %298 = tpu.matmul %214, %297, %cst_197 {dimension_numbers = #tpu.dot_dimension_numbers<[1], [0], [0], [1], [0, 0, 1, 1], [], []>} : vector<8x32xbf16>, vector<32x8xbf16>, vector<8x8xf32> -> vector<8x8xf32>
      %c3_198 = arith.constant 3 : index
      %c0_199 = arith.constant 0 : index
      %c0_200 = arith.constant 0 : index
      %299 = vector.load %arg9[%c3_198, %c0_199, %c0_200] : memref<4x1x8xf32, #tpu.memory_space<vmem>>, vector<1x1x8xf32>
      %300 = vector.shape_cast %299 : vector<1x1x8xf32> to vector<1x8xf32>
      %301 = vector.broadcast %300 : vector<1x8xf32> to vector<8x8xf32>
      %302 = arith.addf %298, %301 : vector<8x8xf32>
      %c3_201 = arith.constant 3 : index
      %c0_202 = arith.constant 0 : index
      %c0_203 = arith.constant 0 : index
      %303 = vector.load %arg10[%c3_201, %c0_202, %c0_203] : memref<4x32x8xbf16, #tpu.memory_space<vmem>>, vector<1x32x8xbf16>
      %304 = vector.shape_cast %303 : vector<1x32x8xbf16> to vector<32x8xbf16>
      %cst_204 = arith.constant dense<0.000000e+00> : vector<8x8xf32>
      %305 = tpu.matmul %229, %304, %cst_204 {dimension_numbers = #tpu.dot_dimension_numbers<[1], [0], [0], [1], [0, 0, 1, 1], [], []>} : vector<8x32xbf16>, vector<32x8xbf16>, vector<8x8xf32> -> vector<8x8xf32>
      %c3_205 = arith.constant 3 : index
      %c0_206 = arith.constant 0 : index
      %c0_207 = arith.constant 0 : index
      %306 = vector.load %arg11[%c3_205, %c0_206, %c0_207] : memref<4x1x8xf32, #tpu.memory_space<vmem>>, vector<1x1x8xf32>
      %307 = vector.shape_cast %306 : vector<1x1x8xf32> to vector<1x8xf32>
      %308 = vector.broadcast %307 : vector<1x8xf32> to vector<8x8xf32>
      %309 = arith.addf %305, %308 : vector<8x8xf32>
      %310 = arith.truncf %302 : vector<8x8xf32> to vector<8x8xbf16>
      %c3_208 = arith.constant 3 : index
      %c0_209 = arith.constant 0 : index
      %c0_210 = arith.constant 0 : index
      %311 = vector.load %arg22[%c3_208, %c0_209, %c0_210] : memref<4x8x8xbf16, #tpu.memory_space<vmem>>, vector<1x8x8xbf16>
      %312 = vector.shape_cast %311 : vector<1x8x8xbf16> to vector<8x8xbf16>
      %313 = vector.shape_cast %310 : vector<8x8xbf16> to vector<1x8x8xbf16>
      tpu.vector_store %arg22[%c3_208, %c0_209, %c0_210], %313 {strides = array<i32>} : memref<4x8x8xbf16, #tpu.memory_space<vmem>>, vector<1x8x8xbf16>,
      %314 = arith.truncf %309 : vector<8x8xf32> to vector<8x8xbf16>
      %c3_211 = arith.constant 3 : index
      %c0_212 = arith.constant 0 : index
      %c0_213 = arith.constant 0 : index
      %315 = vector.load %arg23[%c3_211, %c0_212, %c0_213] : memref<4x8x8xbf16, #tpu.memory_space<vmem>>, vector<1x8x8xbf16>
      %316 = vector.shape_cast %315 : vector<1x8x8xbf16> to vector<8x8xbf16>
      %317 = vector.shape_cast %314 : vector<8x8xbf16> to vector<1x8x8xbf16>
      tpu.vector_store %arg23[%c3_211, %c0_212, %c0_213], %317 {strides = array<i32>} : memref<4x8x8xbf16, #tpu.memory_space<vmem>>, vector<1x8x8xbf16>,
    } else {
    }
    %c0_2 = arith.constant 0 : index
    %c0_3 = arith.constant 0 : index
    %c0_4 = arith.constant 0 : index
    %4 = vector.load %arg2[%c0_2, %c0_3, %c0_4] : memref<1x8x32xf32, #tpu.memory_space<vmem>>, vector<1x8x32xf32>
    %5 = vector.shape_cast %4 : vector<1x8x32xf32> to vector<8x32xf32>
    %6 = arith.mulf %5, %5 : vector<8x32xf32>
    %cst = arith.constant dense<0.000000e+00> : vector<8xf32>
    %7 = vector.multi_reduction <add>, %6, %cst [1] : vector<8x32xf32> to vector<8xf32>
    %8 = vector.shape_cast %7 : vector<8xf32> to vector<8x1xf32>
    %cst_5 = arith.constant 3.200000e+01 : f32
    %9 = vector.broadcast %cst_5 : f32 to vector<8x1xf32>
    %10 = arith.divf %8, %9 : vector<8x1xf32>
    %cst_6 = arith.constant 9.99999997E-7 : f32
    %11 = vector.broadcast %cst_6 : f32 to vector<8x1xf32>
    %12 = arith.addf %10, %11 : vector<8x1xf32>
    %13 = math.rsqrt %12 : vector<8x1xf32>
    %14 = vector.broadcast %13 : vector<8x1xf32> to vector<8x32xf32>
    %15 = arith.mulf %5, %14 : vector<8x32xf32>
    %16 = vector.broadcast %0 : vector<1x32xf32> to vector<8x32xf32>
    %17 = arith.mulf %15, %16 : vector<8x32xf32>
    %18 = arith.truncf %17 : vector<8x32xf32> to vector<8x32xbf16>
    %cst_7 = arith.constant 0.000000e+00 : f32
    %19 = vector.broadcast %cst_7 : f32 to vector<8x32xf32>
    %c0_8 = arith.constant 0 : index
    %c0_9 = arith.constant 0 : index
    %c0_10 = arith.constant 0 : index
    %20 = vector.load %arg6[%c0_8, %c0_9, %c0_10] : memref<4x32x8xbf16, #tpu.memory_space<vmem>>, vector<1x32x8xbf16>
    %21 = vector.shape_cast %20 : vector<1x32x8xbf16> to vector<32x8xbf16>
    %cst_11 = arith.constant dense<0.000000e+00> : vector<8x8xf32>
    %22 = tpu.matmul %18, %21, %cst_11 {dimension_numbers = #tpu.dot_dimension_numbers<[1], [0], [0], [1], [0, 0, 1, 1], [], []>} : vector<8x32xbf16>, vector<32x8xbf16>, vector<8x8xf32> -> vector<8x8xf32>
    %c0_12 = arith.constant 0 : index
    %c0_13 = arith.constant 0 : index
    %c0_14 = arith.constant 0 : index
    %23 = vector.load %arg7[%c0_12, %c0_13, %c0_14] : memref<4x1x8xf32, #tpu.memory_space<vmem>>, vector<1x1x8xf32>
    %24 = vector.shape_cast %23 : vector<1x1x8xf32> to vector<1x8xf32>
    %25 = vector.broadcast %24 : vector<1x8xf32> to vector<8x8xf32>
    %26 = arith.addf %22, %25 : vector<8x8xf32>
    %c0_15 = arith.constant 0 : index
    %c0_16 = arith.constant 0 : index
    %c0_17 = arith.constant 0 : index
    %27 = vector.load %arg22[%c0_15, %c0_16, %c0_17] : memref<4x8x8xbf16, #tpu.memory_space<vmem>>, vector<1x8x8xbf16>
    %28 = vector.shape_cast %27 : vector<1x8x8xbf16> to vector<8x8xbf16>
    %c0_18 = arith.constant 0 : index
    %c0_19 = arith.constant 0 : index
    %c0_20 = arith.constant 0 : index
    %29 = vector.load %arg23[%c0_18, %c0_19, %c0_20] : memref<4x8x8xbf16, #tpu.memory_space<vmem>>, vector<1x8x8xbf16>
    %30 = vector.shape_cast %29 : vector<1x8x8xbf16> to vector<8x8xbf16>
    %31 = arith.truncf %26 : vector<8x8xf32> to vector<8x8xbf16>
    %cst_21 = arith.constant dense<0.000000e+00> : vector<8x8xf32>
    %32 = tpu.matmul %31, %28, %cst_21 {dimension_numbers = #tpu.dot_dimension_numbers<[1], [1], [0], [0], [0, 0, 1, 0], [], []>} : vector<8x8xbf16>, vector<8x8xbf16>, vector<8x8xf32> -> vector<8x8xf32>
    %cst_22 = arith.constant 0.353553385 : f32
    %33 = vector.broadcast %cst_22 : f32 to vector<8x8xf32>
    %34 = arith.mulf %32, %33 : vector<8x8xf32>
    %cst_23 = arith.constant dense<0xFF800000> : vector<8xf32>
    %35 = vector.multi_reduction <maximumf>, %34, %cst_23 [1] : vector<8x8xf32> to vector<8xf32>
    %36 = vector.shape_cast %35 : vector<8xf32> to vector<8x1xf32>
    %37 = vector.broadcast %36 : vector<8x1xf32> to vector<8x8xf32>
    %38 = arith.subf %34, %37 : vector<8x8xf32>
    %39 = math.exp %38 : vector<8x8xf32>
    %cst_24 = arith.constant dense<0.000000e+00> : vector<8xf32>
    %40 = vector.multi_reduction <add>, %39, %cst_24 [1] : vector<8x8xf32> to vector<8xf32>
    %41 = vector.shape_cast %40 : vector<8xf32> to vector<8x1xf32>
    %42 = tpu.reciprocal %41 {approx = true} : vector<8x1xf32> -> vector<8x1xf32>
    %43 = vector.broadcast %42 : vector<8x1xf32> to vector<8x8xf32>
    %44 = arith.mulf %39, %43 : vector<8x8xf32>
    %45 = arith.truncf %44 : vector<8x8xf32> to vector<8x8xbf16>
    %cst_25 = arith.constant dense<0.000000e+00> : vector<8x8xf32>
    %46 = tpu.matmul %45, %30, %cst_25 {dimension_numbers = #tpu.dot_dimension_numbers<[1], [0], [0], [1], [0, 0, 1, 1], [], []>} : vector<8x8xbf16>, vector<8x8xbf16>, vector<8x8xf32> -> vector<8x8xf32>
    %47 = arith.truncf %46 : vector<8x8xf32> to vector<8x8xbf16>
    %c0_26 = arith.constant 0 : index
    %c0_27 = arith.constant 0 : index
    %c0_28 = arith.constant 0 : index
    %48 = vector.load %arg12[%c0_26, %c0_27, %c0_28] : memref<4x8x32xbf16, #tpu.memory_space<vmem>>, vector<1x8x32xbf16>
    %49 = vector.shape_cast %48 : vector<1x8x32xbf16> to vector<8x32xbf16>
    %cst_29 = arith.constant dense<0.000000e+00> : vector<8x32xf32>
    %50 = tpu.matmul %47, %49, %cst_29 {dimension_numbers = #tpu.dot_dimension_numbers<[1], [0], [0], [1], [0, 0, 1, 1], [], []>} : vector<8x8xbf16>, vector<8x32xbf16>, vector<8x32xf32> -> vector<8x32xf32>
    %51 = arith.addf %19, %50 : vector<8x32xf32>
    %c1 = arith.constant 1 : index
    %c0_30 = arith.constant 0 : index
    %c0_31 = arith.constant 0 : index
    %52 = vector.load %arg6[%c1, %c0_30, %c0_31] : memref<4x32x8xbf16, #tpu.memory_space<vmem>>, vector<1x32x8xbf16>
    %53 = vector.shape_cast %52 : vector<1x32x8xbf16> to vector<32x8xbf16>
    %cst_32 = arith.constant dense<0.000000e+00> : vector<8x8xf32>
    %54 = tpu.matmul %18, %53, %cst_32 {dimension_numbers = #tpu.dot_dimension_numbers<[1], [0], [0], [1], [0, 0, 1, 1], [], []>} : vector<8x32xbf16>, vector<32x8xbf16>, vector<8x8xf32> -> vector<8x8xf32>
    %c1_33 = arith.constant 1 : index
    %c0_34 = arith.constant 0 : index
    %c0_35 = arith.constant 0 : index
    %55 = vector.load %arg7[%c1_33, %c0_34, %c0_35] : memref<4x1x8xf32, #tpu.memory_space<vmem>>, vector<1x1x8xf32>
    %56 = vector.shape_cast %55 : vector<1x1x8xf32> to vector<1x8xf32>
    %57 = vector.broadcast %56 : vector<1x8xf32> to vector<8x8xf32>
    %58 = arith.addf %54, %57 : vector<8x8xf32>
    %c1_36 = arith.constant 1 : index
    %c0_37 = arith.constant 0 : index
    %c0_38 = arith.constant 0 : index
    %59 = vector.load %arg22[%c1_36, %c0_37, %c0_38] : memref<4x8x8xbf16, #tpu.memory_space<vmem>>, vector<1x8x8xbf16>
    %60 = vector.shape_cast %59 : vector<1x8x8xbf16> to vector<8x8xbf16>
    %c1_39 = arith.constant 1 : index
    %c0_40 = arith.constant 0 : index
    %c0_41 = arith.constant 0 : index
    %61 = vector.load %arg23[%c1_39, %c0_40, %c0_41] : memref<4x8x8xbf16, #tpu.memory_space<vmem>>, vector<1x8x8xbf16>
    %62 = vector.shape_cast %61 : vector<1x8x8xbf16> to vector<8x8xbf16>
    %63 = arith.truncf %58 : vector<8x8xf32> to vector<8x8xbf16>
    %cst_42 = arith.constant dense<0.000000e+00> : vector<8x8xf32>
    %64 = tpu.matmul %63, %60, %cst_42 {dimension_numbers = #tpu.dot_dimension_numbers<[1], [1], [0], [0], [0, 0, 1, 0], [], []>} : vector<8x8xbf16>, vector<8x8xbf16>, vector<8x8xf32> -> vector<8x8xf32>
    %cst_43 = arith.constant 0.353553385 : f32
    %65 = vector.broadcast %cst_43 : f32 to vector<8x8xf32>
    %66 = arith.mulf %64, %65 : vector<8x8xf32>
    %cst_44 = arith.constant dense<0xFF800000> : vector<8xf32>
    %67 = vector.multi_reduction <maximumf>, %66, %cst_44 [1] : vector<8x8xf32> to vector<8xf32>
    %68 = vector.shape_cast %67 : vector<8xf32> to vector<8x1xf32>
    %69 = vector.broadcast %68 : vector<8x1xf32> to vector<8x8xf32>
    %70 = arith.subf %66, %69 : vector<8x8xf32>
    %71 = math.exp %70 : vector<8x8xf32>
    %cst_45 = arith.constant dense<0.000000e+00> : vector<8xf32>
    %72 = vector.multi_reduction <add>, %71, %cst_45 [1] : vector<8x8xf32> to vector<8xf32>
    %73 = vector.shape_cast %72 : vector<8xf32> to vector<8x1xf32>
    %74 = tpu.reciprocal %73 {approx = true} : vector<8x1xf32> -> vector<8x1xf32>
    %75 = vector.broadcast %74 : vector<8x1xf32> to vector<8x8xf32>
    %76 = arith.mulf %71, %75 : vector<8x8xf32>
    %77 = arith.truncf %76 : vector<8x8xf32> to vector<8x8xbf16>
    %cst_46 = arith.constant dense<0.000000e+00> : vector<8x8xf32>
    %78 = tpu.matmul %77, %62, %cst_46 {dimension_numbers = #tpu.dot_dimension_numbers<[1], [0], [0], [1], [0, 0, 1, 1], [], []>} : vector<8x8xbf16>, vector<8x8xbf16>, vector<8x8xf32> -> vector<8x8xf32>
    %79 = arith.truncf %78 : vector<8x8xf32> to vector<8x8xbf16>
    %c1_47 = arith.constant 1 : index
    %c0_48 = arith.constant 0 : index
    %c0_49 = arith.constant 0 : index
    %80 = vector.load %arg12[%c1_47, %c0_48, %c0_49] : memref<4x8x32xbf16, #tpu.memory_space<vmem>>, vector<1x8x32xbf16>
    %81 = vector.shape_cast %80 : vector<1x8x32xbf16> to vector<8x32xbf16>
    %cst_50 = arith.constant dense<0.000000e+00> : vector<8x32xf32>
    %82 = tpu.matmul %79, %81, %cst_50 {dimension_numbers = #tpu.dot_dimension_numbers<[1], [0], [0], [1], [0, 0, 1, 1], [], []>} : vector<8x8xbf16>, vector<8x32xbf16>, vector<8x32xf32> -> vector<8x32xf32>
    %83 = arith.addf %51, %82 : vector<8x32xf32>
    %c2 = arith.constant 2 : index
    %c0_51 = arith.constant 0 : index
    %c0_52 = arith.constant 0 : index
    %84 = vector.load %arg6[%c2, %c0_51, %c0_52] : memref<4x32x8xbf16, #tpu.memory_space<vmem>>, vector<1x32x8xbf16>
    %85 = vector.shape_cast %84 : vector<1x32x8xbf16> to vector<32x8xbf16>
    %cst_53 = arith.constant dense<0.000000e+00> : vector<8x8xf32>
    %86 = tpu.matmul %18, %85, %cst_53 {dimension_numbers = #tpu.dot_dimension_numbers<[1], [0], [0], [1], [0, 0, 1, 1], [], []>} : vector<8x32xbf16>, vector<32x8xbf16>, vector<8x8xf32> -> vector<8x8xf32>
    %c2_54 = arith.constant 2 : index
    %c0_55 = arith.constant 0 : index
    %c0_56 = arith.constant 0 : index
    %87 = vector.load %arg7[%c2_54, %c0_55, %c0_56] : memref<4x1x8xf32, #tpu.memory_space<vmem>>, vector<1x1x8xf32>
    %88 = vector.shape_cast %87 : vector<1x1x8xf32> to vector<1x8xf32>
    %89 = vector.broadcast %88 : vector<1x8xf32> to vector<8x8xf32>
    %90 = arith.addf %86, %89 : vector<8x8xf32>
    %c2_57 = arith.constant 2 : index
    %c0_58 = arith.constant 0 : index
    %c0_59 = arith.constant 0 : index
    %91 = vector.load %arg22[%c2_57, %c0_58, %c0_59] : memref<4x8x8xbf16, #tpu.memory_space<vmem>>, vector<1x8x8xbf16>
    %92 = vector.shape_cast %91 : vector<1x8x8xbf16> to vector<8x8xbf16>
    %c2_60 = arith.constant 2 : index
    %c0_61 = arith.constant 0 : index
    %c0_62 = arith.constant 0 : index
    %93 = vector.load %arg23[%c2_60, %c0_61, %c0_62] : memref<4x8x8xbf16, #tpu.memory_space<vmem>>, vector<1x8x8xbf16>
    %94 = vector.shape_cast %93 : vector<1x8x8xbf16> to vector<8x8xbf16>
    %95 = arith.truncf %90 : vector<8x8xf32> to vector<8x8xbf16>
    %cst_63 = arith.constant dense<0.000000e+00> : vector<8x8xf32>
    %96 = tpu.matmul %95, %92, %cst_63 {dimension_numbers = #tpu.dot_dimension_numbers<[1], [1], [0], [0], [0, 0, 1, 0], [], []>} : vector<8x8xbf16>, vector<8x8xbf16>, vector<8x8xf32> -> vector<8x8xf32>
    %cst_64 = arith.constant 0.353553385 : f32
    %97 = vector.broadcast %cst_64 : f32 to vector<8x8xf32>
    %98 = arith.mulf %96, %97 : vector<8x8xf32>
    %cst_65 = arith.constant dense<0xFF800000> : vector<8xf32>
    %99 = vector.multi_reduction <maximumf>, %98, %cst_65 [1] : vector<8x8xf32> to vector<8xf32>
    %100 = vector.shape_cast %99 : vector<8xf32> to vector<8x1xf32>
    %101 = vector.broadcast %100 : vector<8x1xf32> to vector<8x8xf32>
    %102 = arith.subf %98, %101 : vector<8x8xf32>
    %103 = math.exp %102 : vector<8x8xf32>
    %cst_66 = arith.constant dense<0.000000e+00> : vector<8xf32>
    %104 = vector.multi_reduction <add>, %103, %cst_66 [1] : vector<8x8xf32> to vector<8xf32>
    %105 = vector.shape_cast %104 : vector<8xf32> to vector<8x1xf32>
    %106 = tpu.reciprocal %105 {approx = true} : vector<8x1xf32> -> vector<8x1xf32>
    %107 = vector.broadcast %106 : vector<8x1xf32> to vector<8x8xf32>
    %108 = arith.mulf %103, %107 : vector<8x8xf32>
    %109 = arith.truncf %108 : vector<8x8xf32> to vector<8x8xbf16>
    %cst_67 = arith.constant dense<0.000000e+00> : vector<8x8xf32>
    %110 = tpu.matmul %109, %94, %cst_67 {dimension_numbers = #tpu.dot_dimension_numbers<[1], [0], [0], [1], [0, 0, 1, 1], [], []>} : vector<8x8xbf16>, vector<8x8xbf16>, vector<8x8xf32> -> vector<8x8xf32>
    %111 = arith.truncf %110 : vector<8x8xf32> to vector<8x8xbf16>
    %c2_68 = arith.constant 2 : index
    %c0_69 = arith.constant 0 : index
    %c0_70 = arith.constant 0 : index
    %112 = vector.load %arg12[%c2_68, %c0_69, %c0_70] : memref<4x8x32xbf16, #tpu.memory_space<vmem>>, vector<1x8x32xbf16>
    %113 = vector.shape_cast %112 : vector<1x8x32xbf16> to vector<8x32xbf16>
    %cst_71 = arith.constant dense<0.000000e+00> : vector<8x32xf32>
    %114 = tpu.matmul %111, %113, %cst_71 {dimension_numbers = #tpu.dot_dimension_numbers<[1], [0], [0], [1], [0, 0, 1, 1], [], []>} : vector<8x8xbf16>, vector<8x32xbf16>, vector<8x32xf32> -> vector<8x32xf32>
    %115 = arith.addf %83, %114 : vector<8x32xf32>
    %c3 = arith.constant 3 : index
    %c0_72 = arith.constant 0 : index
    %c0_73 = arith.constant 0 : index
    %116 = vector.load %arg6[%c3, %c0_72, %c0_73] : memref<4x32x8xbf16, #tpu.memory_space<vmem>>, vector<1x32x8xbf16>
    %117 = vector.shape_cast %116 : vector<1x32x8xbf16> to vector<32x8xbf16>
    %cst_74 = arith.constant dense<0.000000e+00> : vector<8x8xf32>
    %118 = tpu.matmul %18, %117, %cst_74 {dimension_numbers = #tpu.dot_dimension_numbers<[1], [0], [0], [1], [0, 0, 1, 1], [], []>} : vector<8x32xbf16>, vector<32x8xbf16>, vector<8x8xf32> -> vector<8x8xf32>
    %c3_75 = arith.constant 3 : index
    %c0_76 = arith.constant 0 : index
    %c0_77 = arith.constant 0 : index
    %119 = vector.load %arg7[%c3_75, %c0_76, %c0_77] : memref<4x1x8xf32, #tpu.memory_space<vmem>>, vector<1x1x8xf32>
    %120 = vector.shape_cast %119 : vector<1x1x8xf32> to vector<1x8xf32>
    %121 = vector.broadcast %120 : vector<1x8xf32> to vector<8x8xf32>
    %122 = arith.addf %118, %121 : vector<8x8xf32>
    %c3_78 = arith.constant 3 : index
    %c0_79 = arith.constant 0 : index
    %c0_80 = arith.constant 0 : index
    %123 = vector.load %arg22[%c3_78, %c0_79, %c0_80] : memref<4x8x8xbf16, #tpu.memory_space<vmem>>, vector<1x8x8xbf16>
    %124 = vector.shape_cast %123 : vector<1x8x8xbf16> to vector<8x8xbf16>
    %c3_81 = arith.constant 3 : index
    %c0_82 = arith.constant 0 : index
    %c0_83 = arith.constant 0 : index
    %125 = vector.load %arg23[%c3_81, %c0_82, %c0_83] : memref<4x8x8xbf16, #tpu.memory_space<vmem>>, vector<1x8x8xbf16>
    %126 = vector.shape_cast %125 : vector<1x8x8xbf16> to vector<8x8xbf16>
    %127 = arith.truncf %122 : vector<8x8xf32> to vector<8x8xbf16>
    %cst_84 = arith.constant dense<0.000000e+00> : vector<8x8xf32>
    %128 = tpu.matmul %127, %124, %cst_84 {dimension_numbers = #tpu.dot_dimension_numbers<[1], [1], [0], [0], [0, 0, 1, 0], [], []>} : vector<8x8xbf16>, vector<8x8xbf16>, vector<8x8xf32> -> vector<8x8xf32>
    %cst_85 = arith.constant 0.353553385 : f32
    %129 = vector.broadcast %cst_85 : f32 to vector<8x8xf32>
    %130 = arith.mulf %128, %129 : vector<8x8xf32>
    %cst_86 = arith.constant dense<0xFF800000> : vector<8xf32>
    %131 = vector.multi_reduction <maximumf>, %130, %cst_86 [1] : vector<8x8xf32> to vector<8xf32>
    %132 = vector.shape_cast %131 : vector<8xf32> to vector<8x1xf32>
    %133 = vector.broadcast %132 : vector<8x1xf32> to vector<8x8xf32>
    %134 = arith.subf %130, %133 : vector<8x8xf32>
    %135 = math.exp %134 : vector<8x8xf32>
    %cst_87 = arith.constant dense<0.000000e+00> : vector<8xf32>
    %136 = vector.multi_reduction <add>, %135, %cst_87 [1] : vector<8x8xf32> to vector<8xf32>
    %137 = vector.shape_cast %136 : vector<8xf32> to vector<8x1xf32>
    %138 = tpu.reciprocal %137 {approx = true} : vector<8x1xf32> -> vector<8x1xf32>
    %139 = vector.broadcast %138 : vector<8x1xf32> to vector<8x8xf32>
    %140 = arith.mulf %135, %139 : vector<8x8xf32>
    %141 = arith.truncf %140 : vector<8x8xf32> to vector<8x8xbf16>
    %cst_88 = arith.constant dense<0.000000e+00> : vector<8x8xf32>
    %142 = tpu.matmul %141, %126, %cst_88 {dimension_numbers = #tpu.dot_dimension_numbers<[1], [0], [0], [1], [0, 0, 1, 1], [], []>} : vector<8x8xbf16>, vector<8x8xbf16>, vector<8x8xf32> -> vector<8x8xf32>
    %143 = arith.truncf %142 : vector<8x8xf32> to vector<8x8xbf16>
    %c3_89 = arith.constant 3 : index
    %c0_90 = arith.constant 0 : index
    %c0_91 = arith.constant 0 : index
    %144 = vector.load %arg12[%c3_89, %c0_90, %c0_91] : memref<4x8x32xbf16, #tpu.memory_space<vmem>>, vector<1x8x32xbf16>
    %145 = vector.shape_cast %144 : vector<1x8x32xbf16> to vector<8x32xbf16>
    %cst_92 = arith.constant dense<0.000000e+00> : vector<8x32xf32>
    %146 = tpu.matmul %143, %145, %cst_92 {dimension_numbers = #tpu.dot_dimension_numbers<[1], [0], [0], [1], [0, 0, 1, 1], [], []>} : vector<8x8xbf16>, vector<8x32xbf16>, vector<8x32xf32> -> vector<8x32xf32>
    %147 = arith.addf %115, %146 : vector<8x32xf32>
    %c0_93 = arith.constant 0 : index
    %c0_94 = arith.constant 0 : index
    %148 = vector.load %arg13[%c0_93, %c0_94] : memref<1x32xf32, #tpu.memory_space<vmem>>, vector<1x32xf32>
    %149 = vector.broadcast %148 : vector<1x32xf32> to vector<8x32xf32>
    %150 = arith.addf %147, %149 : vector<8x32xf32>
    %151 = arith.addf %5, %150 : vector<8x32xf32>
    %c0_95 = arith.constant 0 : index
    %c0_96 = arith.constant 0 : index
    %152 = vector.load %arg14[%c0_95, %c0_96] : memref<1x32xf32, #tpu.memory_space<vmem>>, vector<1x32xf32>
    %153 = arith.mulf %151, %151 : vector<8x32xf32>
    %cst_97 = arith.constant dense<0.000000e+00> : vector<8xf32>
    %154 = vector.multi_reduction <add>, %153, %cst_97 [1] : vector<8x32xf32> to vector<8xf32>
    %155 = vector.shape_cast %154 : vector<8xf32> to vector<8x1xf32>
    %cst_98 = arith.constant 3.200000e+01 : f32
    %156 = vector.broadcast %cst_98 : f32 to vector<8x1xf32>
    %157 = arith.divf %155, %156 : vector<8x1xf32>
    %cst_99 = arith.constant 9.99999997E-7 : f32
    %158 = vector.broadcast %cst_99 : f32 to vector<8x1xf32>
    %159 = arith.addf %157, %158 : vector<8x1xf32>
    %160 = math.rsqrt %159 : vector<8x1xf32>
    %161 = vector.broadcast %160 : vector<8x1xf32> to vector<8x32xf32>
    %162 = arith.mulf %151, %161 : vector<8x32xf32>
    %163 = vector.broadcast %152 : vector<1x32xf32> to vector<8x32xf32>
    %164 = arith.mulf %162, %163 : vector<8x32xf32>
    %165 = arith.truncf %164 : vector<8x32xf32> to vector<8x32xbf16>
    %c0_100 = arith.constant 0 : index
    %c0_101 = arith.constant 0 : index
    %166 = vector.load %arg15[%c0_100, %c0_101] : memref<32x128xbf16, #tpu.memory_space<vmem>>, vector<32x128xbf16>
    %cst_102 = arith.constant dense<0.000000e+00> : vector<8x128xf32>
    %167 = tpu.matmul %165, %166, %cst_102 {dimension_numbers = #tpu.dot_dimension_numbers<[1], [0], [0], [1], [0, 0, 1, 1], [], []>} : vector<8x32xbf16>, vector<32x128xbf16>, vector<8x128xf32> -> vector<8x128xf32>
    %c0_103 = arith.constant 0 : index
    %c0_104 = arith.constant 0 : index
    %168 = vector.load %arg16[%c0_103, %c0_104] : memref<1x128xf32, #tpu.memory_space<vmem>>, vector<1x128xf32>
    %169 = vector.broadcast %168 : vector<1x128xf32> to vector<8x128xf32>
    %170 = arith.addf %167, %169 : vector<8x128xf32>
    %c0_105 = arith.constant 0 : index
    %c0_106 = arith.constant 0 : index
    %171 = vector.load %arg17[%c0_105, %c0_106] : memref<32x128xbf16, #tpu.memory_space<vmem>>, vector<32x128xbf16>
    %cst_107 = arith.constant dense<0.000000e+00> : vector<8x128xf32>
    %172 = tpu.matmul %165, %171, %cst_107 {dimension_numbers = #tpu.dot_dimension_numbers<[1], [0], [0], [1], [0, 0, 1, 1], [], []>} : vector<8x32xbf16>, vector<32x128xbf16>, vector<8x128xf32> -> vector<8x128xf32>
    %c0_108 = arith.constant 0 : index
    %c0_109 = arith.constant 0 : index
    %173 = vector.load %arg18[%c0_108, %c0_109] : memref<1x128xf32, #tpu.memory_space<vmem>>, vector<1x128xf32>
    %174 = vector.broadcast %173 : vector<1x128xf32> to vector<8x128xf32>
    %175 = arith.addf %172, %174 : vector<8x128xf32>
    %cst_110 = arith.constant 5.000000e-01 : f32
    %176 = vector.broadcast %cst_110 : f32 to vector<8x128xf32>
    %177 = arith.mulf %176, %175 : vector<8x128xf32>
    %cst_111 = arith.constant 4.471500e-02 : f32
    %178 = vector.broadcast %cst_111 : f32 to vector<8x128xf32>
    %179 = arith.mulf %178, %175 : vector<8x128xf32>
    %180 = arith.mulf %179, %175 : vector<8x128xf32>
    %181 = arith.mulf %180, %175 : vector<8x128xf32>
    %182 = arith.addf %175, %181 : vector<8x128xf32>
    %cst_112 = arith.constant 0.797884583 : f32
    %183 = vector.broadcast %cst_112 : f32 to vector<8x128xf32>
    %184 = arith.mulf %183, %182 : vector<8x128xf32>
    %185 = math.tanh %184 : vector<8x128xf32>
    %cst_113 = arith.constant 1.000000e+00 : f32
    %186 = vector.broadcast %cst_113 : f32 to vector<8x128xf32>
    %187 = arith.addf %186, %185 : vector<8x128xf32>
    %188 = arith.mulf %177, %187 : vector<8x128xf32>
    %189 = arith.mulf %170, %188 : vector<8x128xf32>
    %190 = arith.truncf %189 : vector<8x128xf32> to vector<8x128xbf16>
    %c0_114 = arith.constant 0 : index
    %c0_115 = arith.constant 0 : index
    %191 = vector.load %arg19[%c0_114, %c0_115] : memref<128x32xbf16, #tpu.memory_space<vmem>>, vector<128x32xbf16>
    %cst_116 = arith.constant dense<0.000000e+00> : vector<8x32xf32>
    %192 = tpu.matmul %190, %191, %cst_116 {dimension_numbers = #tpu.dot_dimension_numbers<[1], [0], [0], [1], [0, 0, 1, 1], [], []>} : vector<8x128xbf16>, vector<128x32xbf16>, vector<8x32xf32> -> vector<8x32xf32>
    %c0_117 = arith.constant 0 : index
    %c0_118 = arith.constant 0 : index
    %193 = vector.load %arg20[%c0_117, %c0_118] : memref<1x32xf32, #tpu.memory_space<vmem>>, vector<1x32xf32>
    %194 = vector.broadcast %193 : vector<1x32xf32> to vector<8x32xf32>
    %195 = arith.addf %192, %194 : vector<8x32xf32>
    %196 = arith.addf %151, %195 : vector<8x32xf32>
    %c0_119 = arith.constant 0 : index
    %c0_120 = arith.constant 0 : index
    %c0_121 = arith.constant 0 : index
    %197 = vector.load %arg21[%c0_119, %c0_120, %c0_121] : memref<1x8x32xf32, #tpu.memory_space<vmem>>, vector<1x8x32xf32>
    %198 = vector.shape_cast %197 : vector<1x8x32xf32> to vector<8x32xf32>
    %199 = vector.shape_cast %196 : vector<8x32xf32> to vector<1x8x32xf32>
    tpu.vector_store %arg21[%c0_119, %c0_120, %c0_121], %199 {strides = array<i32>} : memref<1x8x32xf32, #tpu.memory_space<vmem>>, vector<1x8x32xf32>,
    return
  }
  func.func @transform_0(%arg0: i32, %arg1: i32) -> (i32, i32, i32) {
    %c0_i32 = arith.constant 0 : i32
    %c0_i32_0 = arith.constant 0 : i32
    return %arg0, %arg1, %c0_i32 : i32, i32, i32
  }
  func.func @transform_1(%arg0: i32, %arg1: i32) -> (i32, i32, i32) {
    %c0_i32 = arith.constant 0 : i32
    %c0_i32_0 = arith.constant 0 : i32
    %c0_i32_1 = arith.constant 0 : i32
    return %arg0, %c0_i32, %c0_i32_0 : i32, i32, i32
  }
  func.func @transform_2(%arg0: i32, %arg1: i32) -> (i32, i32, i32) {
    %c0_i32 = arith.constant 0 : i32
    %c0_i32_0 = arith.constant 0 : i32
    %c0_i32_1 = arith.constant 0 : i32
    return %arg0, %c0_i32, %c0_i32_0 : i32, i32, i32
  }
  func.func @transform_3(%arg0: i32, %arg1: i32) -> (i32, i32) {
    %c0_i32 = arith.constant 0 : i32
    %c0_i32_0 = arith.constant 0 : i32
    %c0_i32_1 = arith.constant 0 : i32
    return %c0_i32, %c0_i32_0 : i32, i32
  }
  func.func @transform_4(%arg0: i32, %arg1: i32) -> (i32, i32, i32) {
    %c0_i32 = arith.constant 0 : i32
    %c0_i32_0 = arith.constant 0 : i32
    %c0_i32_1 = arith.constant 0 : i32
    %c0_i32_2 = arith.constant 0 : i32
    return %c0_i32, %c0_i32_0, %c0_i32_1 : i32, i32, i32
  }
  func.func @transform_5(%arg0: i32, %arg1: i32) -> (i32, i32, i32) {
    %c0_i32 = arith.constant 0 : i32
    %c0_i32_0 = arith.constant 0 : i32
    %c0_i32_1 = arith.constant 0 : i32
    %c0_i32_2 = arith.constant 0 : i32
    return %c0_i32, %c0_i32_0, %c0_i32_1 : i32, i32, i32
  }
  func.func @transform_6(%arg0: i32, %arg1: i32) -> (i32, i32, i32) {
    %c0_i32 = arith.constant 0 : i32
    %c0_i32_0 = arith.constant 0 : i32
    %c0_i32_1 = arith.constant 0 : i32
    %c0_i32_2 = arith.constant 0 : i32
    return %c0_i32, %c0_i32_0, %c0_i32_1 : i32, i32, i32
  }
  func.func @transform_7(%arg0: i32, %arg1: i32) -> (i32, i32, i32) {
    %c0_i32 = arith.constant 0 : i32
    %c0_i32_0 = arith.constant 0 : i32
    %c0_i32_1 = arith.constant 0 : i32
    %c0_i32_2 = arith.constant 0 : i32
    return %c0_i32, %c0_i32_0, %c0_i32_1 : i32, i32, i32
  }
  func.func @transform_8(%arg0: i32, %arg1: i32) -> (i32, i32, i32) {
    %c0_i32 = arith.constant 0 : i32
    %c0_i32_0 = arith.constant 0 : i32
    %c0_i32_1 = arith.constant 0 : i32
    %c0_i32_2 = arith.constant 0 : i32
    return %c0_i32, %c0_i32_0, %c0_i32_1 : i32, i32, i32
  }
  func.func @transform_9(%arg0: i32, %arg1: i32) -> (i32, i32, i32) {
    %c0_i32 = arith.constant 0 : i32
    %c0_i32_0 = arith.constant 0 : i32
    %c0_i32_1 = arith.constant 0 : i32
    %c0_i32_2 = arith.constant 0 : i32
    return %c0_i32, %c0_i32_0, %c0_i32_1 : i32, i32, i32
  }
  func.func @transform_10(%arg0: i32, %arg1: i32) -> (i32, i32, i32) {
    %c0_i32 = arith.constant 0 : i32
    %c0_i32_0 = arith.constant 0 : i32
    %c0_i32_1 = arith.constant 0 : i32
    %c0_i32_2 = arith.constant 0 : i32
    return %c0_i32, %c0_i32_0, %c0_i32_1 : i32, i32, i32
  }
  func.func @transform_11(%arg0: i32, %arg1: i32) -> (i32, i32) {
    %c0_i32 = arith.constant 0 : i32
    %c0_i32_0 = arith.constant 0 : i32
    %c0_i32_1 = arith.constant 0 : i32
    return %c0_i32, %c0_i32_0 : i32, i32
  }
  func.func @transform_12(%arg0: i32, %arg1: i32) -> (i32, i32) {
    %c0_i32 = arith.constant 0 : i32
    %c0_i32_0 = arith.constant 0 : i32
    %c0_i32_1 = arith.constant 0 : i32
    return %c0_i32, %c0_i32_0 : i32, i32
  }
  func.func @transform_13(%arg0: i32, %arg1: i32) -> (i32, i32) {
    %c0_i32 = arith.constant 0 : i32
    %c0_i32_0 = arith.constant 0 : i32
    %c0_i32_1 = arith.constant 0 : i32
    return %c0_i32, %c0_i32_0 : i32, i32
  }
  func.func @transform_14(%arg0: i32, %arg1: i32) -> (i32, i32) {
    %c0_i32 = arith.constant 0 : i32
    %c0_i32_0 = arith.constant 0 : i32
    %c0_i32_1 = arith.constant 0 : i32
    return %c0_i32, %c0_i32_0 : i32, i32
  }
  func.func @transform_15(%arg0: i32, %arg1: i32) -> (i32, i32) {
    %c0_i32 = arith.constant 0 : i32
    %c0_i32_0 = arith.constant 0 : i32
    %c0_i32_1 = arith.constant 0 : i32
    return %c0_i32, %c0_i32_0 : i32, i32
  }
  func.func @transform_16(%arg0: i32, %arg1: i32) -> (i32, i32) {
    %c0_i32 = arith.constant 0 : i32
    %c0_i32_0 = arith.constant 0 : i32
    %c0_i32_1 = arith.constant 0 : i32
    return %c0_i32, %c0_i32_0 : i32, i32
  }
  func.func @transform_17(%arg0: i32, %arg1: i32) -> (i32, i32) {
    %c0_i32 = arith.constant 0 : i32
    %c0_i32_0 = arith.constant 0 : i32
    %c0_i32_1 = arith.constant 0 : i32
    return %c0_i32, %c0_i32_0 : i32, i32
  }
  func.func @transform_18(%arg0: i32, %arg1: i32) -> (i32, i32) {
    %c0_i32 = arith.constant 0 : i32
    %c0_i32_0 = arith.constant 0 : i32
    %c0_i32_1 = arith.constant 0 : i32
    return %c0_i32, %c0_i32_0 : i32, i32
  }
  func.func @transform_19(%arg0: i32, %arg1: i32) -> (i32, i32, i32) {
    %c0_i32 = arith.constant 0 : i32
    %c0_i32_0 = arith.constant 0 : i32
    return %arg0, %arg1, %c0_i32 : i32, i32, i32
  }
}

</mosaic_0001>

<llo_original>
// kernel: tpu_custom_call.1
$region0: #{tpu_custom_call.1}
  #allocation0 [shape = 'u32[]', space=smem, size = 0x4, offset = 0x4, fixed_abs, tag = 'smem constant byte address 0x4 - core index']
  #allocation1 [shape = 'u32[144,128]{1,0:T(1,128)}', space=vmem, size = 0x12000, scoped, tag = 'internal scratch']
  #allocation2 [shape = 'bf16[4,8,8]{2,1,0:T(8,128)(2,1)}', space=vmem, size = 0x2000, scoped, tag = 'scratch operand']
  #allocation3 [shape = 'bf16[4,8,8]{2,1,0:T(8,128)(2,1)}', space=vmem, size = 0x2000, scoped, tag = 'scratch operand']
  %s0 = inlined_call_operand.hbm [shape: f32[2,8,32], index: 0, kind: input, shape index: {}]
  %s1 = inlined_call_operand.hbm [shape: f32[2,8,32], index: 1, kind: input, shape index: {}]
  %s2 = inlined_call_operand.hbm [shape: f32[2,8,32], index: 2, kind: input, shape index: {}]
  %s3 = inlined_call_operand.hbm [shape: f32[1,32], index: 3, kind: input, shape index: {}]
  %s4 = inlined_call_operand.hbm [shape: bf16[4,32,8], index: 4, kind: input, shape index: {}]
  %s5 = inlined_call_operand.hbm [shape: f32[4,1,8], index: 5, kind: input, shape index: {}]
  %s6 = inlined_call_operand.hbm [shape: bf16[4,32,8], index: 6, kind: input, shape index: {}]
  %s7 = inlined_call_operand.hbm [shape: f32[4,1,8], index: 7, kind: input, shape index: {}]
  %s8 = inlined_call_operand.hbm [shape: bf16[4,32,8], index: 8, kind: input, shape index: {}]
  %s9 = inlined_call_operand.hbm [shape: f32[4,1,8], index: 9, kind: input, shape index: {}]
  %s10 = inlined_call_operand.hbm [shape: bf16[4,8,32], index: 10, kind: input, shape index: {}]
  %s11 = inlined_call_operand.hbm [shape: f32[1,32], index: 11, kind: input, shape index: {}]
  %s12 = inlined_call_operand.hbm [shape: f32[1,32], index: 12, kind: input, shape index: {}]
  %s13 = inlined_call_operand.hbm [shape: bf16[32,128], index: 13, kind: input, shape index: {}]
  %s14 = inlined_call_operand.hbm [shape: f32[1,128], index: 14, kind: input, shape index: {}]
  %s15 = inlined_call_operand.hbm [shape: bf16[32,128], index: 15, kind: input, shape index: {}]
  %s16 = inlined_call_operand.hbm [shape: f32[1,128], index: 16, kind: input, shape index: {}]
  %s17 = inlined_call_operand.hbm [shape: bf16[128,32], index: 17, kind: input, shape index: {}]
  %s18 = inlined_call_operand.hbm [shape: f32[1,32], index: 18, kind: input, shape index: {}]
  %s19 = inlined_call_operand.hbm [shape: f32[2,8,32], index: 19, kind: output, shape index: {}]
  %s20 = sld [smem:[#allocation0]]
  $region189: #{tpu_custom_call.1} parent=0
    _
  %s22 = ssub.s32 1, %s20
  %s23 = scalar_select 0, %s22, %s20
  $region1: #{tpu_custom_call.1} parent=0
    #allocation4 [shape = 'u8[8192]{0}', space=vmem, size = 0x2000, scoped, tag = 'input window, operand 0']
    #allocation5 [shape = 's32[2]{0}', space=sflag, size = 0x8, scoped, tag = 'scoped memory for tpu_custom_call.1']
    #allocation6 [shape = 's32[2]{0}', space=sflag, size = 0x8, scoped, tag = 'scoped memory for tpu_custom_call.1']
    #allocation7 [shape = 'u8[8192]{0}', space=vmem, size = 0x2000, scoped, tag = 'input window, operand 1']
    #allocation8 [shape = 's32[2]{0}', space=sflag, size = 0x8, scoped, tag = 'scoped memory for tpu_custom_call.1']
    #allocation9 [shape = 'u8[8192]{0}', space=vmem, size = 0x2000, scoped, tag = 'input window, operand 2']
    #allocation10 [shape = 'u8[512]{0}', space=vmem, size = 0x400, scoped, tag = 'input window, operand 3, single buffered']
    #allocation11 [shape = 's32[1]{0}', space=sflag, size = 0x4, scoped, tag = 'scoped memory for tpu_custom_call.1']
    #allocation12 [shape = 'u8[32768]{0}', space=vmem, size = 0x8000, scoped, tag = 'input window, operand 4, single buffered']
    #allocation13 [shape = 'u8[2048]{0}', space=vmem, size = 0x800, scoped, tag = 'input window, operand 5, single buffered']
    #allocation14 [shape = 's32[1]{0}', space=sflag, size = 0x4, scoped, tag = 'scoped memory for tpu_custom_call.1']
    #allocation15 [shape = 'u8[32768]{0}', space=vmem, size = 0x8000, scoped, tag = 'input window, operand 6, single buffered']
    #allocation16 [shape = 'u8[2048]{0}', space=vmem, size = 0x800, scoped, tag = 'input window, operand 7, single buffered']
    #allocation17 [shape = 's32[1]{0}', space=sflag, size = 0x4, scoped, tag = 'scoped memory for tpu_custom_call.1']
    #allocation18 [shape = 'u8[32768]{0}', space=vmem, size = 0x8000, scoped, tag = 'input window, operand 8, single buffered']
    #allocation19 [shape = 'u8[2048]{0}', space=vmem, size = 0x800, scoped, tag = 'input window, operand 9, single buffered']
    #allocation20 [shape = 's32[1]{0}', space=sflag, size = 0x4, scoped, tag = 'scoped memory for tpu_custom_call.1']
    #allocation21 [shape = 'u8[8192]{0}', space=vmem, size = 0x2000, scoped, tag = 'input window, operand 10, single buffered']
    #allocation22 [shape = 'u8[512]{0}', space=vmem, size = 0x400, scoped, tag = 'input window, operand 11, single buffered']
    #allocation23 [shape = 's32[1]{0}', space=sflag, size = 0x4, scoped, tag = 'scoped memory for tpu_custom_call.1']
    #allocation24 [shape = 'u8[512]{0}', space=vmem, size = 0x400, scoped, tag = 'input window, operand 12, single buffered']
    #allocation25 [shape = 'u8[8192]{0}', space=vmem, size = 0x2000, scoped, tag = 'input window, operand 13, single buffered']
    #allocation26 [shape = 's32[1]{0}', space=sflag, size = 0x4, scoped, tag = 'scoped memory for tpu_custom_call.1']
    #allocation27 [shape = 'u8[512]{0}', space=vmem, size = 0x400, scoped, tag = 'input window, operand 14, single buffered']
    #allocation28 [shape = 'u8[8192]{0}', space=vmem, size = 0x2000, scoped, tag = 'input window, operand 15, single buffered']
    #allocation29 [shape = 's32[1]{0}', space=sflag, size = 0x4, scoped, tag = 'scoped memory for tpu_custom_call.1']
    #allocation30 [shape = 'u8[512]{0}', space=vmem, size = 0x400, scoped, tag = 'input window, operand 16, single buffered']
    #allocation31 [shape = 'u8[32768]{0}', space=vmem, size = 0x8000, scoped, tag = 'input window, operand 17, single buffered']
    #allocation32 [shape = 's32[1]{0}', space=sflag, size = 0x4, scoped, tag = 'scoped memory for tpu_custom_call.1']
    #allocation33 [shape = 'u8[512]{0}', space=vmem, size = 0x400, scoped, tag = 'input window, operand 18, single buffered']
    #allocation34 [shape = 'u8[8192]{0}', space=vmem, size = 0x2000, scoped, tag = 'output window, operand 0']
    %24 = vsyncpa [#allocation5], 0
    %s25 = scalar_lea.sflag [#allocation5], 1
    %26 = vsyncpa %s25, 0
    %27 = vsyncpa [#allocation8], 0
    %s28 = scalar_lea.sflag [#allocation8], 1
    %29 = vsyncpa %s28, 0
    %30 = vsyncpa [#allocation11], 0
    %31 = vsyncpa [#allocation14], 0
    %32 = vsyncpa [#allocation17], 0
    %33 = vsyncpa [#allocation20], 0
    %34 = vsyncpa [#allocation23], 0
    %35 = vsyncpa [#allocation26], 0
    %36 = vsyncpa [#allocation29], 0
    %37 = vsyncpa [#allocation32], 0
    %38 = vsyncpa [#allocation6], 0
    %s39 = scalar_lea.sflag [#allocation6], 1
    %40 = vsyncpa %s39, 0
    loop: start=0, step=1, limit=4
    $region2: #{tpu_custom_call.1} parent=1 // loop_pre_header
      _
    $region3: #{tpu_custom_call.1} parent=1 // loop_header
      %s42 = sphi 0, %s46
      %p43 = scmp.ge.s32.totalorder %s42, 4
      %s49 = sphi 0, %s61
      %s50 = sphi 0, %s57
      %s51 = sphi 0, %s49
      %s52 = sphi 0, %s50
      %s53 = sphi 0, %s51
      %s54 = sphi 0, %s52
      %s66 = sphi 0, %s68
      %s69 = sphi 0, %s66
      %s70 = sphi 0, %s69
      %s86 = sphi 0, %s70
      %s92 = sphi 0, %s94
      %s95 = sphi 0, %s92
      %s96 = sphi 0, %s95
      %s112 = sphi 0, %s96
      %s118 = sphi 0, %s120
      %s121 = sphi 0, %s118
      %s122 = sphi 0, %s121
      %s138 = sphi 0, %s122
      %s142 = sphi 0, %s142
      %s144 = sphi 0, %s142
      %s145 = sphi 0, %s144
      %s159 = sphi 0, %s145
      %s163 = sphi 0, %s163
      %s165 = sphi 0, %s163
      %s166 = sphi 0, %s165
      %s180 = sphi 0, %s166
      %s184 = sphi 0, %s184
      %s186 = sphi 0, %s184
      %s187 = sphi 0, %s186
      %s201 = sphi 0, %s187
      %s205 = sphi 0, %s205
      %s207 = sphi 0, %s205
      %s208 = sphi 0, %s207
      %s222 = sphi 0, %s208
      %s226 = sphi 0, %s226
      %s228 = sphi 0, %s226
      %s229 = sphi 0, %s228
      %s243 = sphi 0, %s229
      %s247 = sphi 0, %s247
      %s249 = sphi 0, %s247
      %s250 = sphi 0, %s249
      %s264 = sphi 0, %s250
      %s268 = sphi 0, %s268
      %s270 = sphi 0, %s268
      %s271 = sphi 0, %s270
      %s285 = sphi 0, %s271
      %s289 = sphi 0, %s289
      %s291 = sphi 0, %s289
      %s292 = sphi 0, %s291
      %s306 = sphi 0, %s292
      %s310 = sphi 0, %s310
      %s312 = sphi 0, %s310
      %s313 = sphi 0, %s312
      %s327 = sphi 0, %s313
      %s331 = sphi 0, %s331
      %s333 = sphi 0, %s331
      %s334 = sphi 0, %s333
      %s348 = sphi 0, %s334
      %s352 = sphi 0, %s352
      %s354 = sphi 0, %s352
      %s355 = sphi 0, %s354
      %s369 = sphi 0, %s355
      %s373 = sphi 0, %s373
      %s375 = sphi 0, %s373
      %s376 = sphi 0, %s375
      %s390 = sphi 0, %s376
      %s394 = sphi 0, %s394
      %s396 = sphi 0, %s394
      %s397 = sphi 0, %s396
      %s411 = sphi 0, %s397
      %s415 = sphi 0, %s415
      %s417 = sphi 0, %s415
      %s418 = sphi 0, %s417
      %s432 = sphi 0, %s418
      %s436 = sphi 0, %s436
      %s438 = sphi 0, %s436
      %s439 = sphi 0, %s438
      %s453 = sphi 0, %s439
      %s457 = sphi 0, %s457
      %s459 = sphi 0, %s457
      %s460 = sphi 0, %s459
      %s474 = sphi 0, %s460
      %s482 = sphi 0, %s484
      %s485 = sphi 0, %s482
      %s486 = sphi 0, %s485
      %s502 = sphi 0, %s486
    $region4: #{tpu_custom_call.1} parent=1 // loop_header_branch
      %45 = sbr.rel (%p43) target = $region8
    $region5: #{tpu_custom_call.1} parent=1 // loop_body
      %s47 = ssub.s32 %s42, 1
      %s48 = ssub.s32 %s42, 2
      %s55 = sadd.s32 1, %s50
      %p56 = scmp.ge.s32.totalorder %s55, 1
      %s57 = scalar_select %p56, 0, %s55
      %s58 = sadd.s32 1, %s49
      %s59 = scalar_select %p56, %s58, %s49
      %p60 = scmp.ge.s32.totalorder %s59, 2
      %s61 = scalar_select %p60, 0, %s59
      %s62 = ssub.s32 %s49, %s61
      %s63 = ssub.s32 %s50, %s57
      %s64 = sor.u32 %s62, %s63
      %p65 = scmp.eq.s32.totalorder %s64, 0
      %s67 = sadd.s32 %s66, 1
      %s68 = scalar_select %p65, %s66, %s67
      %p71 = pneg %p65
      %p72 = scmp.eq.s32.totalorder %s42, 1
      %p73 = por %p71, %p72
      %p74 = scmp.ne.s32.totalorder %s66, %s69
      %p75 = scmp.eq.s32.totalorder %s42, 0
      %p76 = por %p74, %p75
      %p77 = scmp.ne.s32.totalorder %s66, %s69
      %p78 = scmp.eq.s32.totalorder %s47, 1
      %p79 = por %p77, %p78
      %p80 = scmp.ne.s32.totalorder %s69, %s70
      %p81 = scmp.eq.s32.totalorder %s47, 0
      %p82 = por %p80, %p81
      %p83 = scmp.ne.s32.totalorder %s69, %s70
      %p84 = scmp.eq.s32.totalorder %s48, 1
      %p85 = por %p83, %p84
      %p87 = scmp.ne.s32.totalorder %s70, %s86
      %p88 = scmp.eq.s32.totalorder %s48, 0
      %p89 = por %p87, %p88
      %s90 = ssub.s32 %s49, %s61
      %p91 = scmp.eq.s32.totalorder %s90, 0
      %s93 = sadd.s32 %s92, 1
      %s94 = scalar_select %p91, %s92, %s93
      %p97 = pneg %p91
      %p98 = scmp.eq.s32.totalorder %s42, 1
      %p99 = por %p97, %p98
      %p100 = scmp.ne.s32.totalorder %s92, %s95
      %p101 = scmp.eq.s32.totalorder %s42, 0
      %p102 = por %p100, %p101
      %p103 = scmp.ne.s32.totalorder %s92, %s95
      %p104 = scmp.eq.s32.totalorder %s47, 1
      %p105 = por %p103, %p104
      %p106 = scmp.ne.s32.totalorder %s95, %s96
      %p107 = scmp.eq.s32.totalorder %s47, 0
      %p108 = por %p106, %p107
      %p109 = scmp.ne.s32.totalorder %s95, %s96
      %p110 = scmp.eq.s32.totalorder %s48, 1
      %p111 = por %p109, %p110
      %p113 = scmp.ne.s32.totalorder %s96, %s112
      %p114 = scmp.eq.s32.totalorder %s48, 0
      %p115 = por %p113, %p114
      %s116 = ssub.s32 %s49, %s61
      %p117 = scmp.eq.s32.totalorder %s116, 0
      %s119 = sadd.s32 %s118, 1
      %s120 = scalar_select %p117, %s118, %s119
      %p123 = pneg %p117
      %p124 = scmp.eq.s32.totalorder %s42, 1
      %p125 = por %p123, %p124
      %p126 = scmp.ne.s32.totalorder %s118, %s121
      %p127 = scmp.eq.s32.totalorder %s42, 0
      %p128 = por %p126, %p127
      %p129 = scmp.ne.s32.totalorder %s118, %s121
      %p130 = scmp.eq.s32.totalorder %s47, 1
      %p131 = por %p129, %p130
      %p132 = scmp.ne.s32.totalorder %s121, %s122
      %p133 = scmp.eq.s32.totalorder %s47, 0
      %p134 = por %p132, %p133
      %p135 = scmp.ne.s32.totalorder %s121, %s122
      %p136 = scmp.eq.s32.totalorder %s48, 1
      %p137 = por %p135, %p136
      %p139 = scmp.ne.s32.totalorder %s122, %s138
      %p140 = scmp.eq.s32.totalorder %s48, 0
      %p141 = por %p139, %p140
      %s143 = sadd.s32 %s142, 1
      %p146 = scmp.eq.s32.totalorder %s42, 1
      %p147 = scmp.ne.s32.totalorder %s142, %s144
      %p148 = scmp.eq.s32.totalorder %s42, 0
      %p149 = por %p147, %p148
      %p150 = scmp.ne.s32.totalorder %s142, %s144
      %p151 = scmp.eq.s32.totalorder %s47, 1
      %p152 = por %p150, %p151
      %p153 = scmp.ne.s32.totalorder %s144, %s145
      %p154 = scmp.eq.s32.totalorder %s47, 0
      %p155 = por %p153, %p154
      %p156 = scmp.ne.s32.totalorder %s144, %s145
      %p157 = scmp.eq.s32.totalorder %s48, 1
      %p158 = por %p156, %p157
      %p160 = scmp.ne.s32.totalorder %s145, %s159
      %p161 = scmp.eq.s32.totalorder %s48, 0
      %p162 = por %p160, %p161
      %s164 = sadd.s32 %s163, 1
      %p167 = scmp.eq.s32.totalorder %s42, 1
      %p168 = scmp.ne.s32.totalorder %s163, %s165
      %p169 = scmp.eq.s32.totalorder %s42, 0
      %p170 = por %p168, %p169
      %p171 = scmp.ne.s32.totalorder %s163, %s165
      %p172 = scmp.eq.s32.totalorder %s47, 1
      %p173 = por %p171, %p172
      %p174 = scmp.ne.s32.totalorder %s165, %s166
      %p175 = scmp.eq.s32.totalorder %s47, 0
      %p176 = por %p174, %p175
      %p177 = scmp.ne.s32.totalorder %s165, %s166
      %p178 = scmp.eq.s32.totalorder %s48, 1
      %p179 = por %p177, %p178
      %p181 = scmp.ne.s32.totalorder %s166, %s180
      %p182 = scmp.eq.s32.totalorder %s48, 0
      %p183 = por %p181, %p182
      %s185 = sadd.s32 %s184, 1
      %p188 = scmp.eq.s32.totalorder %s42, 1
      %p189 = scmp.ne.s32.totalorder %s184, %s186
      %p190 = scmp.eq.s32.totalorder %s42, 0
      %p191 = por %p189, %p190
      %p192 = scmp.ne.s32.totalorder %s184, %s186
      %p193 = scmp.eq.s32.totalorder %s47, 1
      %p194 = por %p192, %p193
      %p195 = scmp.ne.s32.totalorder %s186, %s187
      %p196 = scmp.eq.s32.totalorder %s47, 0
      %p197 = por %p195, %p196
      %p198 = scmp.ne.s32.totalorder %s186, %s187
      %p199 = scmp.eq.s32.totalorder %s48, 1
      %p200 = por %p198, %p199
      %p202 = scmp.ne.s32.totalorder %s187, %s201
      %p203 = scmp.eq.s32.totalorder %s48, 0
      %p204 = por %p202, %p203
      %s206 = sadd.s32 %s205, 1
      %p209 = scmp.eq.s32.totalorder %s42, 1
      %p210 = scmp.ne.s32.totalorder %s205, %s207
      %p211 = scmp.eq.s32.totalorder %s42, 0
      %p212 = por %p210, %p211
      %p213 = scmp.ne.s32.totalorder %s205, %s207
      %p214 = scmp.eq.s32.totalorder %s47, 1
      %p215 = por %p213, %p214
      %p216 = scmp.ne.s32.totalorder %s207, %s208
      %p217 = scmp.eq.s32.totalorder %s47, 0
      %p218 = por %p216, %p217
      %p219 = scmp.ne.s32.totalorder %s207, %s208
      %p220 = scmp.eq.s32.totalorder %s48, 1
      %p221 = por %p219, %p220
      %p223 = scmp.ne.s32.totalorder %s208, %s222
      %p224 = scmp.eq.s32.totalorder %s48, 0
      %p225 = por %p223, %p224
      %s227 = sadd.s32 %s226, 1
      %p230 = scmp.eq.s32.totalorder %s42, 1
      %p231 = scmp.ne.s32.totalorder %s226, %s228
      %p232 = scmp.eq.s32.totalorder %s42, 0
      %p233 = por %p231, %p232
      %p234 = scmp.ne.s32.totalorder %s226, %s228
      %p235 = scmp.eq.s32.totalorder %s47, 1
      %p236 = por %p234, %p235
      %p237 = scmp.ne.s32.totalorder %s228, %s229
      %p238 = scmp.eq.s32.totalorder %s47, 0
      %p239 = por %p237, %p238
      %p240 = scmp.ne.s32.totalorder %s228, %s229
      %p241 = scmp.eq.s32.totalorder %s48, 1
      %p242 = por %p240, %p241
      %p244 = scmp.ne.s32.totalorder %s229, %s243
      %p245 = scmp.eq.s32.totalorder %s48, 0
      %p246 = por %p244, %p245
      %s248 = sadd.s32 %s247, 1
      %p251 = scmp.eq.s32.totalorder %s42, 1
      %p252 = scmp.ne.s32.totalorder %s247, %s249
      %p253 = scmp.eq.s32.totalorder %s42, 0
      %p254 = por %p252, %p253
      %p255 = scmp.ne.s32.totalorder %s247, %s249
      %p256 = scmp.eq.s32.totalorder %s47, 1
      %p257 = por %p255, %p256
      %p258 = scmp.ne.s32.totalorder %s249, %s250
      %p259 = scmp.eq.s32.totalorder %s47, 0
      %p260 = por %p258, %p259
      %p261 = scmp.ne.s32.totalorder %s249, %s250
      %p262 = scmp.eq.s32.totalorder %s48, 1
      %p263 = por %p261, %p262
      %p265 = scmp.ne.s32.totalorder %s250, %s264
      %p266 = scmp.eq.s32.totalorder %s48, 0
      %p267 = por %p265, %p266
      %s269 = sadd.s32 %s268, 1
      %p272 = scmp.eq.s32.totalorder %s42, 1
      %p273 = scmp.ne.s32.totalorder %s268, %s270
      %p274 = scmp.eq.s32.totalorder %s42, 0
      %p275 = por %p273, %p274
      %p276 = scmp.ne.s32.totalorder %s268, %s270
      %p277 = scmp.eq.s32.totalorder %s47, 1
      %p278 = por %p276, %p277
      %p279 = scmp.ne.s32.totalorder %s270, %s271
      %p280 = scmp.eq.s32.totalorder %s47, 0
      %p281 = por %p279, %p280
      %p282 = scmp.ne.s32.totalorder %s270, %s271
      %p283 = scmp.eq.s32.totalorder %s48, 1
      %p284 = por %p282, %p283
      %p286 = scmp.ne.s32.totalorder %s271, %s285
      %p287 = scmp.eq.s32.totalorder %s48, 0
      %p288 = por %p286, %p287
      %s290 = sadd.s32 %s289, 1
      %p293 = scmp.eq.s32.totalorder %s42, 1
      %p294 = scmp.ne.s32.totalorder %s289, %s291
      %p295 = scmp.eq.s32.totalorder %s42, 0
      %p296 = por %p294, %p295
      %p297 = scmp.ne.s32.totalorder %s289, %s291
      %p298 = scmp.eq.s32.totalorder %s47, 1
      %p299 = por %p297, %p298
      %p300 = scmp.ne.s32.totalorder %s291, %s292
      %p301 = scmp.eq.s32.totalorder %s47, 0
      %p302 = por %p300, %p301
      %p303 = scmp.ne.s32.totalorder %s291, %s292
      %p304 = scmp.eq.s32.totalorder %s48, 1
      %p305 = por %p303, %p304
      %p307 = scmp.ne.s32.totalorder %s292, %s306
      %p308 = scmp.eq.s32.totalorder %s48, 0
      %p309 = por %p307, %p308
      %s311 = sadd.s32 %s310, 1
      %p314 = scmp.eq.s32.totalorder %s42, 1
      %p315 = scmp.ne.s32.totalorder %s310, %s312
      %p316 = scmp.eq.s32.totalorder %s42, 0
      %p317 = por %p315, %p316
      %p318 = scmp.ne.s32.totalorder %s310, %s312
      %p319 = scmp.eq.s32.totalorder %s47, 1
      %p320 = por %p318, %p319
      %p321 = scmp.ne.s32.totalorder %s312, %s313
      %p322 = scmp.eq.s32.totalorder %s47, 0
      %p323 = por %p321, %p322
      %p324 = scmp.ne.s32.totalorder %s312, %s313
      %p325 = scmp.eq.s32.totalorder %s48, 1
      %p326 = por %p324, %p325
      %p328 = scmp.ne.s32.totalorder %s313, %s327
      %p329 = scmp.eq.s32.totalorder %s48, 0
      %p330 = por %p328, %p329
      %s332 = sadd.s32 %s331, 1
      %p335 = scmp.eq.s32.totalorder %s42, 1
      %p336 = scmp.ne.s32.totalorder %s331, %s333
      %p337 = scmp.eq.s32.totalorder %s42, 0
      %p338 = por %p336, %p337
      %p339 = scmp.ne.s32.totalorder %s331, %s333
      %p340 = scmp.eq.s32.totalorder %s47, 1
      %p341 = por %p339, %p340
      %p342 = scmp.ne.s32.totalorder %s333, %s334
      %p343 = scmp.eq.s32.totalorder %s47, 0
      %p344 = por %p342, %p343
      %p345 = scmp.ne.s32.totalorder %s333, %s334
      %p346 = scmp.eq.s32.totalorder %s48, 1
      %p347 = por %p345, %p346
      %p349 = scmp.ne.s32.totalorder %s334, %s348
      %p350 = scmp.eq.s32.totalorder %s48, 0
      %p351 = por %p349, %p350
      %s353 = sadd.s32 %s352, 1
      %p356 = scmp.eq.s32.totalorder %s42, 1
      %p357 = scmp.ne.s32.totalorder %s352, %s354
      %p358 = scmp.eq.s32.totalorder %s42, 0
      %p359 = por %p357, %p358
      %p360 = scmp.ne.s32.totalorder %s352, %s354
      %p361 = scmp.eq.s32.totalorder %s47, 1
      %p362 = por %p360, %p361
      %p363 = scmp.ne.s32.totalorder %s354, %s355
      %p364 = scmp.eq.s32.totalorder %s47, 0
      %p365 = por %p363, %p364
      %p366 = scmp.ne.s32.totalorder %s354, %s355
      %p367 = scmp.eq.s32.totalorder %s48, 1
      %p368 = por %p366, %p367
      %p370 = scmp.ne.s32.totalorder %s355, %s369
      %p371 = scmp.eq.s32.totalorder %s48, 0
      %p372 = por %p370, %p371
      %s374 = sadd.s32 %s373, 1
      %p377 = scmp.eq.s32.totalorder %s42, 1
      %p378 = scmp.ne.s32.totalorder %s373, %s375
      %p379 = scmp.eq.s32.totalorder %s42, 0
      %p380 = por %p378, %p379
      %p381 = scmp.ne.s32.totalorder %s373, %s375
      %p382 = scmp.eq.s32.totalorder %s47, 1
      %p383 = por %p381, %p382
      %p384 = scmp.ne.s32.totalorder %s375, %s376
      %p385 = scmp.eq.s32.totalorder %s47, 0
      %p386 = por %p384, %p385
      %p387 = scmp.ne.s32.totalorder %s375, %s376
      %p388 = scmp.eq.s32.totalorder %s48, 1
      %p389 = por %p387, %p388
      %p391 = scmp.ne.s32.totalorder %s376, %s390
      %p392 = scmp.eq.s32.totalorder %s48, 0
      %p393 = por %p391, %p392
      %s395 = sadd.s32 %s394, 1
      %p398 = scmp.eq.s32.totalorder %s42, 1
      %p399 = scmp.ne.s32.totalorder %s394, %s396
      %p400 = scmp.eq.s32.totalorder %s42, 0
      %p401 = por %p399, %p400
      %p402 = scmp.ne.s32.totalorder %s394, %s396
      %p403 = scmp.eq.s32.totalorder %s47, 1
      %p404 = por %p402, %p403
      %p405 = scmp.ne.s32.totalorder %s396, %s397
      %p406 = scmp.eq.s32.totalorder %s47, 0
      %p407 = por %p405, %p406
      %p408 = scmp.ne.s32.totalorder %s396, %s397
      %p409 = scmp.eq.s32.totalorder %s48, 1
      %p410 = por %p408, %p409
      %p412 = scmp.ne.s32.totalorder %s397, %s411
      %p413 = scmp.eq.s32.totalorder %s48, 0
      %p414 = por %p412, %p413
      %s416 = sadd.s32 %s415, 1
      %p419 = scmp.eq.s32.totalorder %s42, 1
      %p420 = scmp.ne.s32.totalorder %s415, %s417
      %p421 = scmp.eq.s32.totalorder %s42, 0
      %p422 = por %p420, %p421
      %p423 = scmp.ne.s32.totalorder %s415, %s417
      %p424 = scmp.eq.s32.totalorder %s47, 1
      %p425 = por %p423, %p424
      %p426 = scmp.ne.s32.totalorder %s417, %s418
      %p427 = scmp.eq.s32.totalorder %s47, 0
      %p428 = por %p426, %p427
      %p429 = scmp.ne.s32.totalorder %s417, %s418
      %p430 = scmp.eq.s32.totalorder %s48, 1
      %p431 = por %p429, %p430
      %p433 = scmp.ne.s32.totalorder %s418, %s432
      %p434 = scmp.eq.s32.totalorder %s48, 0
      %p435 = por %p433, %p434
      %s437 = sadd.s32 %s436, 1
      %p440 = scmp.eq.s32.totalorder %s42, 1
      %p441 = scmp.ne.s32.totalorder %s436, %s438
      %p442 = scmp.eq.s32.totalorder %s42, 0
      %p443 = por %p441, %p442
      %p444 = scmp.ne.s32.totalorder %s436, %s438
      %p445 = scmp.eq.s32.totalorder %s47, 1
      %p446 = por %p444, %p445
      %p447 = scmp.ne.s32.totalorder %s438, %s439
      %p448 = scmp.eq.s32.totalorder %s47, 0
      %p449 = por %p447, %p448
      %p450 = scmp.ne.s32.totalorder %s438, %s439
      %p451 = scmp.eq.s32.totalorder %s48, 1
      %p452 = por %p450, %p451
      %p454 = scmp.ne.s32.totalorder %s439, %s453
      %p455 = scmp.eq.s32.totalorder %s48, 0
      %p456 = por %p454, %p455
      %s458 = sadd.s32 %s457, 1
      %p461 = scmp.eq.s32.totalorder %s42, 1
      %p462 = scmp.ne.s32.totalorder %s457, %s459
      %p463 = scmp.eq.s32.totalorder %s42, 0
      %p464 = por %p462, %p463
      %p465 = scmp.ne.s32.totalorder %s457, %s459
      %p466 = scmp.eq.s32.totalorder %s47, 1
      %p467 = por %p465, %p466
      %p468 = scmp.ne.s32.totalorder %s459, %s460
      %p469 = scmp.eq.s32.totalorder %s47, 0
      %p470 = por %p468, %p469
      %p471 = scmp.ne.s32.totalorder %s459, %s460
      %p472 = scmp.eq.s32.totalorder %s48, 1
      %p473 = por %p471, %p472
      %p475 = scmp.ne.s32.totalorder %s460, %s474
      %p476 = scmp.eq.s32.totalorder %s48, 0
      %p477 = por %p475, %p476
      %s478 = ssub.s32 %s49, %s61
      %s479 = ssub.s32 %s50, %s57
      %s480 = sor.u32 %s478, %s479
      %p481 = scmp.eq.s32.totalorder %s480, 0
      %s483 = sadd.s32 %s482, 1
      %s484 = scalar_select %p481, %s482, %s483
      %p487 = pneg %p481
      %p488 = scmp.eq.s32.totalorder %s42, 1
      %p489 = por %p487, %p488
      %p490 = scmp.ne.s32.totalorder %s482, %s485
      %p491 = scmp.eq.s32.totalorder %s42, 0
      %p492 = por %p490, %p491
      %p493 = scmp.ne.s32.totalorder %s482, %s485
      %p494 = scmp.eq.s32.totalorder %s47, 1
      %p495 = por %p493, %p494
      %p496 = scmp.ne.s32.totalorder %s485, %s486
      %p497 = scmp.eq.s32.totalorder %s47, 0
      %p498 = por %p496, %p497
      %p499 = scmp.ne.s32.totalorder %s485, %s486
      %p500 = scmp.eq.s32.totalorder %s48, 1
      %p501 = por %p499, %p500
      %p503 = scmp.ne.s32.totalorder %s486, %s502
      %p504 = scmp.eq.s32.totalorder %s48, 0
      %p505 = por %p503, %p504
      %p506 = scmp.le.s32.totalorder 1, %s42
      %p507 = scmp.lt.s32.totalorder %s42, 3
      %p508 = pnand %p506, %p507
      %p509 = pneg %p508
      // Predicated region
      $region9: #{tpu_custom_call.1} parent=5 // pred_check
        _
      $region10: #{tpu_custom_call.1} parent=5 // pred_check_branch
        %511 = sbr.rel (%p508) target = $region12
      $region11: #{tpu_custom_call.1} parent=5 // pred_region
        %s512 = ssub.s32 %s42, 1
        // Predicated region
        $region13: #{tpu_custom_call.1} parent=11 // pred_check
          %p513 = pneg %p155
        $region14: #{tpu_custom_call.1} parent=11 // pred_check_branch
          %515 = sbr.rel (%p513) target = $region16
        $region15: #{tpu_custom_call.1} parent=11 // pred_region
          %s517 = ssub.s32 16, 16
          %518 = vsyncadd [#allocation11], %s517
          %s520 = sshll.u32 [#allocation10], 4
          %s521 = int_to_ptr.vmem [resolvable:$true] %s520
          %523 = dma.hbm_to_vmem [thread:$0]  %s3, 16, %s521, [#allocation11]
        $region16: #{tpu_custom_call.1} parent=11 // pred_fallthru
          _
        // Predicated region
        $region17: #{tpu_custom_call.1} parent=11 // pred_check
          %p524 = pneg %p176
        $region18: #{tpu_custom_call.1} parent=11 // pred_check_branch
          %526 = sbr.rel (%p524) target = $region20
        $region19: #{tpu_custom_call.1} parent=11 // pred_region
          %s528 = ssub.s32 1024, 1024
          %529 = vsyncadd [#allocation11], %s528
          %s530 = sshll.u32 [#allocation12], 4
          %s531 = int_to_ptr.vmem [resolvable:$true] %s530
          %536 = dma.hbm_to_vmem [thread:$0]  %s4, 1024, %s531, [#allocation11], 64, 64, 4
        $region20: #{tpu_custom_call.1} parent=11 // pred_fallthru
          _
        // Predicated region
        $region21: #{tpu_custom_call.1} parent=11 // pred_check
          %p537 = pneg %p197
        $region22: #{tpu_custom_call.1} parent=11 // pred_check_branch
          %539 = sbr.rel (%p537) target = $region24
        $region23: #{tpu_custom_call.1} parent=11 // pred_region
          %s541 = ssub.s32 64, 64
          %542 = vsyncadd [#allocation14], %s541
          %s543 = sshll.u32 [#allocation13], 4
          %s544 = int_to_ptr.vmem [resolvable:$true] %s543
          %549 = dma.hbm_to_vmem [thread:$0]  %s5, 64, %s544, [#allocation14], 16, 16, 1
        $region24: #{tpu_custom_call.1} parent=11 // pred_fallthru
          _
        // Predicated region
        $region25: #{tpu_custom_call.1} parent=11 // pred_check
          %p550 = pneg %p218
        $region26: #{tpu_custom_call.1} parent=11 // pred_check_branch
          %552 = sbr.rel (%p550) target = $region28
        $region27: #{tpu_custom_call.1} parent=11 // pred_region
          %s554 = ssub.s32 1024, 1024
          %555 = vsyncadd [#allocation14], %s554
          %s556 = sshll.u32 [#allocation15], 4
          %s557 = int_to_ptr.vmem [resolvable:$true] %s556
          %562 = dma.hbm_to_vmem [thread:$0]  %s6, 1024, %s557, [#allocation14], 64, 64, 4
        $region28: #{tpu_custom_call.1} parent=11 // pred_fallthru
          _
        // Predicated region
        $region29: #{tpu_custom_call.1} parent=11 // pred_check
          %p563 = pneg %p239
        $region30: #{tpu_custom_call.1} parent=11 // pred_check_branch
          %565 = sbr.rel (%p563) target = $region32
        $region31: #{tpu_custom_call.1} parent=11 // pred_region
          %s567 = ssub.s32 64, 64
          %568 = vsyncadd [#allocation17], %s567
          %s569 = sshll.u32 [#allocation16], 4
          %s570 = int_to_ptr.vmem [resolvable:$true] %s569
          %575 = dma.hbm_to_vmem [thread:$0]  %s7, 64, %s570, [#allocation17], 16, 16, 1
        $region32: #{tpu_custom_call.1} parent=11 // pred_fallthru
          _
        // Predicated region
        $region33: #{tpu_custom_call.1} parent=11 // pred_check
          %p576 = pneg %p260
        $region34: #{tpu_custom_call.1} parent=11 // pred_check_branch
          %578 = sbr.rel (%p576) target = $region36
        $region35: #{tpu_custom_call.1} parent=11 // pred_region
          %s580 = ssub.s32 1024, 1024
          %581 = vsyncadd [#allocation17], %s580
          %s582 = sshll.u32 [#allocation18], 4
          %s583 = int_to_ptr.vmem [resolvable:$true] %s582
          %588 = dma.hbm_to_vmem [thread:$0]  %s8, 1024, %s583, [#allocation17], 64, 64, 4
        $region36: #{tpu_custom_call.1} parent=11 // pred_fallthru
          _
        // Predicated region
        $region37: #{tpu_custom_call.1} parent=11 // pred_check
          %p589 = pneg %p281
        $region38: #{tpu_custom_call.1} parent=11 // pred_check_branch
          %591 = sbr.rel (%p589) target = $region40
        $region39: #{tpu_custom_call.1} parent=11 // pred_region
          %s593 = ssub.s32 64, 64
          %594 = vsyncadd [#allocation20], %s593
          %s595 = sshll.u32 [#allocation19], 4
          %s596 = int_to_ptr.vmem [resolvable:$true] %s595
          %601 = dma.hbm_to_vmem [thread:$0]  %s9, 64, %s596, [#allocation20], 16, 16, 1
        $region40: #{tpu_custom_call.1} parent=11 // pred_fallthru
          _
        // Predicated region
        $region41: #{tpu_custom_call.1} parent=11 // pred_check
          %p602 = pneg %p302
        $region42: #{tpu_custom_call.1} parent=11 // pred_check_branch
          %604 = sbr.rel (%p602) target = $region44
        $region43: #{tpu_custom_call.1} parent=11 // pred_region
          %s606 = ssub.s32 256, 256
          %607 = vsyncadd [#allocation20], %s606
          %s608 = sshll.u32 [#allocation21], 4
          %s609 = int_to_ptr.vmem [resolvable:$true] %s608
          %614 = dma.hbm_to_vmem [thread:$0]  %s10, 256, %s609, [#allocation20], 64, 64, 4
        $region44: #{tpu_custom_call.1} parent=11 // pred_fallthru
          _
        // Predicated region
        $region45: #{tpu_custom_call.1} parent=11 // pred_check
          %p615 = pneg %p323
        $region46: #{tpu_custom_call.1} parent=11 // pred_check_branch
          %617 = sbr.rel (%p615) target = $region48
        $region47: #{tpu_custom_call.1} parent=11 // pred_region
          %s619 = ssub.s32 16, 16
          %620 = vsyncadd [#allocation23], %s619
          %s622 = sshll.u32 [#allocation22], 4
          %s623 = int_to_ptr.vmem [resolvable:$true] %s622
          %625 = dma.hbm_to_vmem [thread:$0]  %s11, 16, %s623, [#allocation23]
        $region48: #{tpu_custom_call.1} parent=11 // pred_fallthru
          _
        // Predicated region
        $region49: #{tpu_custom_call.1} parent=11 // pred_check
          %p626 = pneg %p344
        $region50: #{tpu_custom_call.1} parent=11 // pred_check_branch
          %628 = sbr.rel (%p626) target = $region52
        $region51: #{tpu_custom_call.1} parent=11 // pred_region
          %s630 = ssub.s32 16, 16
          %631 = vsyncadd [#allocation23], %s630
          %s633 = sshll.u32 [#allocation24], 4
          %s634 = int_to_ptr.vmem [resolvable:$true] %s633
          %636 = dma.hbm_to_vmem [thread:$0]  %s12, 16, %s634, [#allocation23]
        $region52: #{tpu_custom_call.1} parent=11 // pred_fallthru
          _
        // Predicated region
        $region53: #{tpu_custom_call.1} parent=11 // pred_check
          %p637 = pneg %p365
        $region54: #{tpu_custom_call.1} parent=11 // pred_check_branch
          %639 = sbr.rel (%p637) target = $region56
        $region55: #{tpu_custom_call.1} parent=11 // pred_region
          %s641 = ssub.s32 256, 256
          %642 = vsyncadd [#allocation26], %s641
          %s643 = sshll.u32 [#allocation25], 4
          %s644 = int_to_ptr.vmem [resolvable:$true] %s643
          %649 = dma.hbm_to_vmem [thread:$0]  %s13, 256, %s644, [#allocation26], 64, 64, 4
        $region56: #{tpu_custom_call.1} parent=11 // pred_fallthru
          _
        // Predicated region
        $region57: #{tpu_custom_call.1} parent=11 // pred_check
          %p650 = pneg %p386
        $region58: #{tpu_custom_call.1} parent=11 // pred_check_branch
          %652 = sbr.rel (%p650) target = $region60
        $region59: #{tpu_custom_call.1} parent=11 // pred_region
          %s654 = ssub.s32 16, 16
          %655 = vsyncadd [#allocation26], %s654
          %s657 = sshll.u32 [#allocation27], 4
          %s658 = int_to_ptr.vmem [resolvable:$true] %s657
          %660 = dma.hbm_to_vmem [thread:$0]  %s14, 16, %s658, [#allocation26]
        $region60: #{tpu_custom_call.1} parent=11 // pred_fallthru
          _
        // Predicated region
        $region61: #{tpu_custom_call.1} parent=11 // pred_check
          %p661 = pneg %p407
        $region62: #{tpu_custom_call.1} parent=11 // pred_check_branch
          %663 = sbr.rel (%p661) target = $region64
        $region63: #{tpu_custom_call.1} parent=11 // pred_region
          %s665 = ssub.s32 256, 256
          %666 = vsyncadd [#allocation29], %s665
          %s667 = sshll.u32 [#allocation28], 4
          %s668 = int_to_ptr.vmem [resolvable:$true] %s667
          %673 = dma.hbm_to_vmem [thread:$0]  %s15, 256, %s668, [#allocation29], 64, 64, 4
        $region64: #{tpu_custom_call.1} parent=11 // pred_fallthru
          _
        // Predicated region
        $region65: #{tpu_custom_call.1} parent=11 // pred_check
          %p674 = pneg %p428
        $region66: #{tpu_custom_call.1} parent=11 // pred_check_branch
          %676 = sbr.rel (%p674) target = $region68
        $region67: #{tpu_custom_call.1} parent=11 // pred_region
          %s678 = ssub.s32 16, 16
          %679 = vsyncadd [#allocation29], %s678
          %s681 = sshll.u32 [#allocation30], 4
          %s682 = int_to_ptr.vmem [resolvable:$true] %s681
          %684 = dma.hbm_to_vmem [thread:$0]  %s16, 16, %s682, [#allocation29]
        $region68: #{tpu_custom_call.1} parent=11 // pred_fallthru
          _
        // Predicated region
        $region69: #{tpu_custom_call.1} parent=11 // pred_check
          %p685 = pneg %p449
        $region70: #{tpu_custom_call.1} parent=11 // pred_check_branch
          %687 = sbr.rel (%p685) target = $region72
        $region71: #{tpu_custom_call.1} parent=11 // pred_region
          %s689 = ssub.s32 1024, 1024
          %690 = vsyncadd [#allocation32], %s689
          %s691 = sshll.u32 [#allocation31], 4
          %s692 = int_to_ptr.vmem [resolvable:$true] %s691
          %697 = dma.hbm_to_vmem [thread:$0]  %s17, 1024, %s692, [#allocation32], 64, 64, 4
        $region72: #{tpu_custom_call.1} parent=11 // pred_fallthru
          _
        // Predicated region
        $region73: #{tpu_custom_call.1} parent=11 // pred_check
          %p698 = pneg %p470
        $region74: #{tpu_custom_call.1} parent=11 // pred_check_branch
          %700 = sbr.rel (%p698) target = $region76
        $region75: #{tpu_custom_call.1} parent=11 // pred_region
          %s702 = ssub.s32 16, 16
          %703 = vsyncadd [#allocation32], %s702
          %s705 = sshll.u32 [#allocation33], 4
          %s706 = int_to_ptr.vmem [resolvable:$true] %s705
          %708 = dma.hbm_to_vmem [thread:$0]  %s18, 16, %s706, [#allocation32]
        $region76: #{tpu_custom_call.1} parent=11 // pred_fallthru
          _
      $region12: #{tpu_custom_call.1} parent=5 // pred_fallthru
        _
      %p709 = scmp.lt.s32.totalorder %s42, 2
      // Predicated region
      $region77: #{tpu_custom_call.1} parent=5 // pred_check
        %p710 = pneg %p709
      $region78: #{tpu_custom_call.1} parent=5 // pred_check_branch
        %712 = sbr.rel (%p710) target = $region80
      $region79: #{tpu_custom_call.1} parent=5 // pred_region
        // Predicated region
        $region81: #{tpu_custom_call.1} parent=79 // pred_check
          %p713 = pneg %p76
        $region82: #{tpu_custom_call.1} parent=79 // pred_check_branch
          %715 = sbr.rel (%p713) target = $region84
        $region83: #{tpu_custom_call.1} parent=79 // pred_region
          %s716 = sand.u32 %s66, 1
          %s717 = scalar_lea.sflag [#allocation5], %s716
          %s718 = sand.u32 %s66, 1
          %s719 = smul.addr %s718, 8
          %s720 = scalar_lea.vmem [#allocation4], %s719
          %s722 = ssub.s32 128, 128
          %723 = vsyncadd %s717, %s722
          %s724 = sadd.s32 %s50, %s49
          %s725 = smul.addr %s724, 128
          %s726 = scalar_lea.hbm %s0, %s725
          %s728 = sshll.u32 %s720, 4
          %s729 = int_to_ptr.vmem [resolvable:$true] %s728
          %731 = dma.hbm_to_vmem [thread:$0]  %s726, 128, %s729, %s717
        $region84: #{tpu_custom_call.1} parent=79 // pred_fallthru
          _
        // Predicated region
        $region85: #{tpu_custom_call.1} parent=79 // pred_check
          %p732 = pneg %p102
        $region86: #{tpu_custom_call.1} parent=79 // pred_check_branch
          %734 = sbr.rel (%p732) target = $region88
        $region87: #{tpu_custom_call.1} parent=79 // pred_region
          %s735 = sand.u32 %s42, 1
          %s736 = scalar_lea.sflag [#allocation8], %s735
          %s737 = sand.u32 %s92, 1
          %s738 = smul.addr %s737, 8
          %s739 = scalar_lea.vmem [#allocation7], %s738
          %s741 = ssub.s32 128, 128
          %742 = vsyncadd %s736, %s741
          %s743 = smul.addr %s49, 128
          %s744 = scalar_lea.hbm %s1, %s743
          %s746 = sshll.u32 %s739, 4
          %s747 = int_to_ptr.vmem [resolvable:$true] %s746
          %749 = dma.hbm_to_vmem [thread:$0]  %s744, 128, %s747, %s736
        $region88: #{tpu_custom_call.1} parent=79 // pred_fallthru
          _
        // Predicated region
        $region89: #{tpu_custom_call.1} parent=79 // pred_check
          %p750 = pneg %p128
        $region90: #{tpu_custom_call.1} parent=79 // pred_check_branch
          %752 = sbr.rel (%p750) target = $region92
        $region91: #{tpu_custom_call.1} parent=79 // pred_region
          %s753 = sand.u32 %s42, 1
          %s754 = scalar_lea.sflag [#allocation8], %s753
          %s755 = sand.u32 %s118, 1
          %s756 = smul.addr %s755, 8
          %s757 = scalar_lea.vmem [#allocation9], %s756
          %s759 = ssub.s32 128, 128
          %760 = vsyncadd %s754, %s759
          %s761 = smul.addr %s49, 128
          %s762 = scalar_lea.hbm %s2, %s761
          %s764 = sshll.u32 %s757, 4
          %s765 = int_to_ptr.vmem [resolvable:$true] %s764
          %767 = dma.hbm_to_vmem [thread:$0]  %s762, 128, %s765, %s754
        $region92: #{tpu_custom_call.1} parent=79 // pred_fallthru
          _
      $region80: #{tpu_custom_call.1} parent=5 // pred_fallthru
        _
      %p768 = scmp.le.s32.totalorder 1, %s42
      %p769 = scmp.lt.s32.totalorder %s42, 3
      %p770 = pnand %p768, %p769
      %p771 = pneg %p770
      // Predicated region
      $region93: #{tpu_custom_call.1} parent=5 // pred_check
        _
      $region94: #{tpu_custom_call.1} parent=5 // pred_check_branch
        %773 = sbr.rel (%p770) target = $region96
      $region95: #{tpu_custom_call.1} parent=5 // pred_region
        %s774 = ssub.s32 %s42, 1
        %s775 = sand.u32 %s69, 1
        %s776 = scalar_lea.sflag [#allocation5], %s775
        %s777 = sand.u32 %s69, 1
        %s778 = smul.addr %s777, 8
        %s779 = scalar_lea.vmem [#allocation4], %s778
        // Predicated region
        $region97: #{tpu_custom_call.1} parent=95 // pred_check
          %p780 = pneg %p82
        $region98: #{tpu_custom_call.1} parent=95 // pred_check_branch
          %782 = sbr.rel (%p780) target = $region100
        $region99: #{tpu_custom_call.1} parent=95 // pred_region
          %783 = dma.done %s776, 128
        $region100: #{tpu_custom_call.1} parent=95 // pred_fallthru
          _
        %s784 = sand.u32 %s47, 1
        %s785 = scalar_lea.sflag [#allocation8], %s784
        %s786 = sand.u32 %s95, 1
        %s787 = smul.addr %s786, 8
        %s788 = scalar_lea.vmem [#allocation7], %s787
        // Predicated region
        $region101: #{tpu_custom_call.1} parent=95 // pred_check
          %p789 = pneg %p108
        $region102: #{tpu_custom_call.1} parent=95 // pred_check_branch
          %791 = sbr.rel (%p789) target = $region104
        $region103: #{tpu_custom_call.1} parent=95 // pred_region
          %792 = dma.done %s785, 128
        $region104: #{tpu_custom_call.1} parent=95 // pred_fallthru
          _
        %s793 = sand.u32 %s47, 1
        %s794 = scalar_lea.sflag [#allocation8], %s793
        %s795 = sand.u32 %s121, 1
        %s796 = smul.addr %s795, 8
        %s797 = scalar_lea.vmem [#allocation9], %s796
        // Predicated region
        $region105: #{tpu_custom_call.1} parent=95 // pred_check
          %p798 = pneg %p134
        $region106: #{tpu_custom_call.1} parent=95 // pred_check_branch
          %800 = sbr.rel (%p798) target = $region108
        $region107: #{tpu_custom_call.1} parent=95 // pred_region
          %801 = dma.done %s794, 128
        $region108: #{tpu_custom_call.1} parent=95 // pred_fallthru
          _
        // Predicated region
        $region109: #{tpu_custom_call.1} parent=95 // pred_check
          %p802 = pneg %p155
        $region110: #{tpu_custom_call.1} parent=95 // pred_check_branch
          %804 = sbr.rel (%p802) target = $region112
        $region111: #{tpu_custom_call.1} parent=95 // pred_region
          %805 = dma.done [#allocation11], 16
        $region112: #{tpu_custom_call.1} parent=95 // pred_fallthru
          _
        // Predicated region
        $region113: #{tpu_custom_call.1} parent=95 // pred_check
          %p806 = pneg %p176
        $region114: #{tpu_custom_call.1} parent=95 // pred_check_branch
          %808 = sbr.rel (%p806) target = $region116
        $region115: #{tpu_custom_call.1} parent=95 // pred_region
          %809 = dma.done [#allocation11], 1024
        $region116: #{tpu_custom_call.1} parent=95 // pred_fallthru
          _
        // Predicated region
        $region117: #{tpu_custom_call.1} parent=95 // pred_check
          %p810 = pneg %p197
        $region118: #{tpu_custom_call.1} parent=95 // pred_check_branch
          %812 = sbr.rel (%p810) target = $region120
        $region119: #{tpu_custom_call.1} parent=95 // pred_region
          %813 = dma.done [#allocation14], 64
        $region120: #{tpu_custom_call.1} parent=95 // pred_fallthru
          _
        // Predicated region
        $region121: #{tpu_custom_call.1} parent=95 // pred_check
          %p814 = pneg %p218
        $region122: #{tpu_custom_call.1} parent=95 // pred_check_branch
          %816 = sbr.rel (%p814) target = $region124
        $region123: #{tpu_custom_call.1} parent=95 // pred_region
          %817 = dma.done [#allocation14], 1024
        $region124: #{tpu_custom_call.1} parent=95 // pred_fallthru
          _
        // Predicated region
        $region125: #{tpu_custom_call.1} parent=95 // pred_check
          %p818 = pneg %p239
        $region126: #{tpu_custom_call.1} parent=95 // pred_check_branch
          %820 = sbr.rel (%p818) target = $region128
        $region127: #{tpu_custom_call.1} parent=95 // pred_region
          %821 = dma.done [#allocation17], 64
        $region128: #{tpu_custom_call.1} parent=95 // pred_fallthru
          _
        // Predicated region
        $region129: #{tpu_custom_call.1} parent=95 // pred_check
          %p822 = pneg %p260
        $region130: #{tpu_custom_call.1} parent=95 // pred_check_branch
          %824 = sbr.rel (%p822) target = $region132
        $region131: #{tpu_custom_call.1} parent=95 // pred_region
          %825 = dma.done [#allocation17], 1024
        $region132: #{tpu_custom_call.1} parent=95 // pred_fallthru
          _
        // Predicated region
        $region133: #{tpu_custom_call.1} parent=95 // pred_check
          %p826 = pneg %p281
        $region134: #{tpu_custom_call.1} parent=95 // pred_check_branch
          %828 = sbr.rel (%p826) target = $region136
        $region135: #{tpu_custom_call.1} parent=95 // pred_region
          %829 = dma.done [#allocation20], 64
        $region136: #{tpu_custom_call.1} parent=95 // pred_fallthru
          _
        // Predicated region
        $region137: #{tpu_custom_call.1} parent=95 // pred_check
          %p830 = pneg %p302
        $region138: #{tpu_custom_call.1} parent=95 // pred_check_branch
          %832 = sbr.rel (%p830) target = $region140
        $region139: #{tpu_custom_call.1} parent=95 // pred_region
          %833 = dma.done [#allocation20], 256
        $region140: #{tpu_custom_call.1} parent=95 // pred_fallthru
          _
        // Predicated region
        $region141: #{tpu_custom_call.1} parent=95 // pred_check
          %p834 = pneg %p323
        $region142: #{tpu_custom_call.1} parent=95 // pred_check_branch
          %836 = sbr.rel (%p834) target = $region144
        $region143: #{tpu_custom_call.1} parent=95 // pred_region
          %837 = dma.done [#allocation23], 16
        $region144: #{tpu_custom_call.1} parent=95 // pred_fallthru
          _
        // Predicated region
        $region145: #{tpu_custom_call.1} parent=95 // pred_check
          %p838 = pneg %p344
        $region146: #{tpu_custom_call.1} parent=95 // pred_check_branch
          %840 = sbr.rel (%p838) target = $region148
        $region147: #{tpu_custom_call.1} parent=95 // pred_region
          %841 = dma.done [#allocation23], 16
        $region148: #{tpu_custom_call.1} parent=95 // pred_fallthru
          _
        // Predicated region
        $region149: #{tpu_custom_call.1} parent=95 // pred_check
          %p842 = pneg %p365
        $region150: #{tpu_custom_call.1} parent=95 // pred_check_branch
          %844 = sbr.rel (%p842) target = $region152
        $region151: #{tpu_custom_call.1} parent=95 // pred_region
          %845 = dma.done [#allocation26], 256
        $region152: #{tpu_custom_call.1} parent=95 // pred_fallthru
          _
        // Predicated region
        $region153: #{tpu_custom_call.1} parent=95 // pred_check
          %p846 = pneg %p386
        $region154: #{tpu_custom_call.1} parent=95 // pred_check_branch
          %848 = sbr.rel (%p846) target = $region156
        $region155: #{tpu_custom_call.1} parent=95 // pred_region
          %849 = dma.done [#allocation26], 16
        $region156: #{tpu_custom_call.1} parent=95 // pred_fallthru
          _
        // Predicated region
        $region157: #{tpu_custom_call.1} parent=95 // pred_check
          %p850 = pneg %p407
        $region158: #{tpu_custom_call.1} parent=95 // pred_check_branch
          %852 = sbr.rel (%p850) target = $region160
        $region159: #{tpu_custom_call.1} parent=95 // pred_region
          %853 = dma.done [#allocation29], 256
        $region160: #{tpu_custom_call.1} parent=95 // pred_fallthru
          _
        // Predicated region
        $region161: #{tpu_custom_call.1} parent=95 // pred_check
          %p854 = pneg %p428
        $region162: #{tpu_custom_call.1} parent=95 // pred_check_branch
          %856 = sbr.rel (%p854) target = $region164
        $region163: #{tpu_custom_call.1} parent=95 // pred_region
          %857 = dma.done [#allocation29], 16
        $region164: #{tpu_custom_call.1} parent=95 // pred_fallthru
          _
        // Predicated region
        $region165: #{tpu_custom_call.1} parent=95 // pred_check
          %p858 = pneg %p449
        $region166: #{tpu_custom_call.1} parent=95 // pred_check_branch
          %860 = sbr.rel (%p858) target = $region168
        $region167: #{tpu_custom_call.1} parent=95 // pred_region
          %861 = dma.done [#allocation32], 1024
        $region168: #{tpu_custom_call.1} parent=95 // pred_fallthru
          _
        // Predicated region
        $region169: #{tpu_custom_call.1} parent=95 // pred_check
          %p862 = pneg %p470
        $region170: #{tpu_custom_call.1} parent=95 // pred_check_branch
          %864 = sbr.rel (%p862) target = $region172
        $region171: #{tpu_custom_call.1} parent=95 // pred_region
          %865 = dma.done [#allocation32], 16
        $region172: #{tpu_custom_call.1} parent=95 // pred_fallthru
          _
        %s866 = sand.u32 %s69, 1
        %s867 = scalar_lea.sflag [#allocation5], %s866
        %s868 = sand.u32 %s69, 1
        %s869 = smul.addr %s868, 8
        %s870 = scalar_lea.vmem [#allocation4], %s869
        %p871 = pneg %p82
        %p872 = pneg %p79
        %s873 = sand.u32 %s47, 1
        %s874 = scalar_lea.sflag [#allocation8], %s873
        %s875 = sand.u32 %s95, 1
        %s876 = smul.addr %s875, 8
        %s877 = scalar_lea.vmem [#allocation7], %s876
        %p878 = pneg %p108
        %p879 = pneg %p105
        %s880 = sand.u32 %s47, 1
        %s881 = scalar_lea.sflag [#allocation8], %s880
        %s882 = sand.u32 %s121, 1
        %s883 = smul.addr %s882, 8
        %s884 = scalar_lea.vmem [#allocation9], %s883
        %p885 = pneg %p134
        %p886 = pneg %p131
        %p887 = pneg %p155
        %p888 = pneg %p152
        %p889 = pneg %p176
        %p890 = pneg %p173
        %p891 = pneg %p197
        %p892 = pneg %p194
        %p893 = pneg %p218
        %p894 = pneg %p215
        %p895 = pneg %p239
        %p896 = pneg %p236
        %p897 = pneg %p260
        %p898 = pneg %p257
        %p899 = pneg %p281
        %p900 = pneg %p278
        %p901 = pneg %p302
        %p902 = pneg %p299
        %p903 = pneg %p323
        %p904 = pneg %p320
        %p905 = pneg %p344
        %p906 = pneg %p341
        %p907 = pneg %p365
        %p908 = pneg %p362
        %p909 = pneg %p386
        %p910 = pneg %p383
        %p911 = pneg %p407
        %p912 = pneg %p404
        %p913 = pneg %p428
        %p914 = pneg %p425
        %p915 = pneg %p449
        %p916 = pneg %p446
        %p917 = pneg %p470
        %p918 = pneg %p467
        %p919 = pneg %p498
        %p920 = pneg %p495
        %s921 = sand.u32 %s485, 1
        %s922 = scalar_lea.sflag [#allocation6], %s921
        %s923 = sand.u32 %s485, 1
        %s924 = smul.addr %s923, 8
        %s925 = scalar_lea.vmem [#allocation34], %s924
        %v927 = vld [vmem:[#allocation10] sm:$0x1]
        %p928 = scmp.eq.s32.totalorder %s52, 0
        // Predicated region
        $region173: #{tpu_custom_call.1} parent=95 // pred_check
          %p929 = pneg %p928
        $region174: #{tpu_custom_call.1} parent=95 // pred_check_branch
          %931 = sbr.rel (%p929) target = $region176
        $region175: #{tpu_custom_call.1} parent=95 // pred_region
          %v932 = vld [vmem:[%s788] sm:$0xff]
          %v933 = vmul.f32 %v932, %v932
          %vm934 = vcmask 261120
          %v935 = vsel %vm934, %v933, 0.0
          %936 = vadd.xlane.f32.xlu0 %v935
          %v937 = vpop.xlane.xlu0 %936
          %v938 = vrcp.pop 32.0
          %v939 = vmul.f32 %v937, %v938
          %v940 = vadd.f32 %v939, 1e-06
          %v941 = vrsqrt.pop %v940
          %v942 = vmul.f32 %v932, %v941
          %v944 = vlaneseq
          %v945 = vshrl.u32 %v944, 7
          %v946 = vsub.s32 0, %v945
          %v947 = vrot.slane %v927, %v946
          %v949 = vmul.f32 %v942, %v947
          %v950 = vpack.c.bf16 %v949, %v949
          %v951 = vld [vmem:[%s797] sm:$0xff]
          %v952 = vmul.f32 %v951, %v951
          %v953 = vsel %vm934, %v952, 0.0
          %954 = vadd.xlane.f32.xlu0 %v953
          %v955 = vpop.xlane.xlu0 %954
          %v956 = vmul.f32 %v955, %v938
          %v957 = vadd.f32 %v956, 1e-06
          %v958 = vrsqrt.pop %v957
          %v959 = vmul.f32 %v951, %v958
          %v960 = vmul.f32 %v959, %v947
          %v961 = vpack.c.bf16 %v960, %v960
          %v962 = vld [vmem:[#allocation15] sm:$0xf]
          %v963 = vld [vmem:[#allocation15 + $0x4] sm:$0xf]
          %v964 = vld [vmem:[#allocation15 + $0x8] sm:$0xf]
          %v965 = vld [vmem:[#allocation15 + $0xc] sm:$0xf]
          %v966 = vld [vmem:[#allocation16] sm:$0x1]
          %v968 = vlaneseq
          %v969 = vshrl.u32 %v968, 7
          %v970 = vsub.s32 0, %v969
          %v971 = vrot.slane %v966, %v970
          %v977 = vunpack.c.l.b16 %v962
          %v978 = vunpack.c.l.b16 %v963
          %v979 = vunpack.c.l.b16 %v964
          %v980 = vunpack.c.l.b16 %v965
          %v981 = vpack.c.b16 %v978, %v977
          %v982 = vpack.c.b16 %v980, %v979
          %v986 = vsel %vm934, %v950, 0
          %988 = vmatprep.subr.bf16.mxu0 0
          %989 = vmatpush1.bf16.msra.mxu0 %v981
          %990 = vmatprep.subr.bf16.mxu0 0
          %991 = vmatpush1.bf16.msra.mxu0 %v982
          %992 = vmatprep.subr.bf16.mxu0 0
          %993 = vmatpush1.bf16.msra.mxu0 0
          %994 = vmatprep.subr.bf16.mxu0 0
          %995 = vmatpush1.bf16.msra.mxu0 0
          %996 = vmatprep.subr.bf16.mxu0 0
          %997 = vmatpush1.bf16.msra.mxu0 0
          %998 = vmatprep.subr.bf16.mxu0 0
          %999 = vmatpush1.bf16.msra.mxu0 0
          %1000 = vmatprep.subr.bf16.mxu0 0
          %1001 = vmatpush1.bf16.msra.mxu0 0
          %1002 = vmatprep.subr.bf16.mxu0 0
          %1003 = vmatpush1.bf16.msra.mxu0 0
          %1004 = vmatprep.subr.bf16.mxu0 0
          %1005 = vmatpush1.bf16.msra.mxu0 0
          %1006 = vmatprep.subr.bf16.mxu0 0
          %1007 = vmatpush1.bf16.msra.mxu0 0
          %1008 = vmatprep.subr.bf16.mxu0 0
          %1009 = vmatpush1.bf16.msra.mxu0 0
          %1010 = vmatprep.subr.bf16.mxu0 0
          %1011 = vmatpush1.bf16.msra.mxu0 0
          %1012 = vmatprep.subr.bf16.mxu0 0
          %1013 = vmatpush1.bf16.msra.mxu0 0
          %1014 = vmatprep.subr.bf16.mxu0 0
          %1015 = vmatpush1.bf16.msra.mxu0 0
          %1016 = vmatprep.subr.bf16.mxu0 0
          %1017 = vmatpush1.bf16.msra.mxu0 0
          %1018 = vmatprep.subr.bf16.mxu0 0
          %1019 = vmatpush1.bf16.msra.mxu0 0
          %1020 = vmatprep.mubr.bf16.mxu0 0
          %1021 = vmatmul.mubr.bf16.gmra.mrb[0].mxu0 %v986
          %v1022 = vpop.f32.mrb[0].mxu0
          %v1023 = vadd.f32 %v971, %v1022
          %v1024 = vpop.f32.mrb[0].mxu0
          %v1025 = vpop.f32.mrb[0].mxu0
          %v1026 = vpop.f32.mrb[0].mxu0
          %1027 = vdwg.mxu0
          %v1028 = vld [vmem:[#allocation18] sm:$0xf]
          %v1029 = vld [vmem:[#allocation18 + $0x4] sm:$0xf]
          %v1030 = vld [vmem:[#allocation18 + $0x8] sm:$0xf]
          %v1031 = vld [vmem:[#allocation18 + $0xc] sm:$0xf]
          %v1032 = vld [vmem:[#allocation19] sm:$0x1]
          %v1034 = vlaneseq
          %v1035 = vshrl.u32 %v1034, 7
          %v1036 = vsub.s32 0, %v1035
          %v1037 = vrot.slane %v1032, %v1036
          %v1043 = vunpack.c.l.b16 %v1028
          %v1044 = vunpack.c.l.b16 %v1029
          %v1045 = vunpack.c.l.b16 %v1030
          %v1046 = vunpack.c.l.b16 %v1031
          %v1047 = vpack.c.b16 %v1044, %v1043
          %v1048 = vpack.c.b16 %v1046, %v1045
          %v1052 = vsel %vm934, %v961, 0
          %1054 = vmatprep.subr.bf16.mxu0 0
          %1055 = vmatpush1.bf16.msra.mxu0 %v1047
          %1056 = vmatprep.subr.bf16.mxu0 0
          %1057 = vmatpush1.bf16.msra.mxu0 %v1048
          %1058 = vmatprep.subr.bf16.mxu0 0
          %1059 = vmatpush1.bf16.msra.mxu0 0
          %1060 = vmatprep.subr.bf16.mxu0 0
          %1061 = vmatpush1.bf16.msra.mxu0 0
          %1062 = vmatprep.subr.bf16.mxu0 0
          %1063 = vmatpush1.bf16.msra.mxu0 0
          %1064 = vmatprep.subr.bf16.mxu0 0
          %1065 = vmatpush1.bf16.msra.mxu0 0
          %1066 = vmatprep.subr.bf16.mxu0 0
          %1067 = vmatpush1.bf16.msra.mxu0 0
          %1068 = vmatprep.subr.bf16.mxu0 0
          %1069 = vmatpush1.bf16.msra.mxu0 0
          %1070 = vmatprep.subr.bf16.mxu0 0
          %1071 = vmatpush1.bf16.msra.mxu0 0
          %1072 = vmatprep.subr.bf16.mxu0 0
          %1073 = vmatpush1.bf16.msra.mxu0 0
          %1074 = vmatprep.subr.bf16.mxu0 0
          %1075 = vmatpush1.bf16.msra.mxu0 0
          %1076 = vmatprep.subr.bf16.mxu0 0
          %1077 = vmatpush1.bf16.msra.mxu0 0
          %1078 = vmatprep.subr.bf16.mxu0 0
          %1079 = vmatpush1.bf16.msra.mxu0 0
          %1080 = vmatprep.subr.bf16.mxu0 0
          %1081 = vmatpush1.bf16.msra.mxu0 0
          %1082 = vmatprep.subr.bf16.mxu0 0
          %1083 = vmatpush1.bf16.msra.mxu0 0
          %1084 = vmatprep.subr.bf16.mxu0 0
          %1085 = vmatpush1.bf16.msra.mxu0 0
          %1086 = vmatprep.mubr.bf16.mxu0 0
          %1087 = vmatmul.mubr.bf16.gmra.mrb[0].mxu0 %v1052
          %v1088 = vpop.f32.mrb[0].mxu0
          %v1089 = vadd.f32 %v1037, %v1088
          %v1090 = vpop.f32.mrb[0].mxu0
          %v1091 = vpop.f32.mrb[0].mxu0
          %v1092 = vpop.f32.mrb[0].mxu0
          %1093 = vdwg.mxu0
          %v1094 = vpack.c.bf16 %v1023, %v1023
          %vm1095 = vcmask 60416
          %1096 = vst.msk [vmem:[#allocation2] sm:$0xf] %vm1095, %v1094
          %v1097 = vpack.c.bf16 %v1089, %v1089
          %1098 = vst.msk [vmem:[#allocation3] sm:$0xf] %vm1095, %v1097
          %s1099 = scalar_lea.vmem [#allocation15], 16
          %v1100 = vld [vmem:[%s1099] sm:$0xf]
          %v1101 = vld [vmem:[%s1099 + $0x4] sm:$0xf]
          %v1102 = vld [vmem:[%s1099 + $0x8] sm:$0xf]
          %v1103 = vld [vmem:[%s1099 + $0xc] sm:$0xf]
          %s1104 = scalar_lea.vmem [#allocation16], 1
          %v1105 = vld [vmem:[%s1104] sm:$0x1]
          %v1107 = vlaneseq
          %v1108 = vshrl.u32 %v1107, 7
          %v1109 = vsub.s32 0, %v1108
          %v1110 = vrot.slane %v1105, %v1109
          %v1116 = vunpack.c.l.b16 %v1100
          %v1117 = vunpack.c.l.b16 %v1101
          %v1118 = vunpack.c.l.b16 %v1102
          %v1119 = vunpack.c.l.b16 %v1103
          %v1120 = vpack.c.b16 %v1117, %v1116
          %v1121 = vpack.c.b16 %v1119, %v1118
          %1124 = vmatprep.subr.bf16.mxu0 0
          %1125 = vmatpush1.bf16.msra.mxu0 %v1120
          %1126 = vmatprep.subr.bf16.mxu0 0
          %1127 = vmatpush1.bf16.msra.mxu0 %v1121
          %1128 = vmatprep.subr.bf16.mxu0 0
          %1129 = vmatpush1.bf16.msra.mxu0 0
          %1130 = vmatprep.subr.bf16.mxu0 0
          %1131 = vmatpush1.bf16.msra.mxu0 0
          %1132 = vmatprep.subr.bf16.mxu0 0
          %1133 = vmatpush1.bf16.msra.mxu0 0
          %1134 = vmatprep.subr.bf16.mxu0 0
          %1135 = vmatpush1.bf16.msra.mxu0 0
          %1136 = vmatprep.subr.bf16.mxu0 0
          %1137 = vmatpush1.bf16.msra.mxu0 0
          %1138 = vmatprep.subr.bf16.mxu0 0
          %1139 = vmatpush1.bf16.msra.mxu0 0
          %1140 = vmatprep.subr.bf16.mxu0 0
          %1141 = vmatpush1.bf16.msra.mxu0 0
          %1142 = vmatprep.subr.bf16.mxu0 0
          %1143 = vmatpush1.bf16.msra.mxu0 0
          %1144 = vmatprep.subr.bf16.mxu0 0
          %1145 = vmatpush1.bf16.msra.mxu0 0
          %1146 = vmatprep.subr.bf16.mxu0 0
          %1147 = vmatpush1.bf16.msra.mxu0 0
          %1148 = vmatprep.subr.bf16.mxu0 0
          %1149 = vmatpush1.bf16.msra.mxu0 0
          %1150 = vmatprep.subr.bf16.mxu0 0
          %1151 = vmatpush1.bf16.msra.mxu0 0
          %1152 = vmatprep.subr.bf16.mxu0 0
          %1153 = vmatpush1.bf16.msra.mxu0 0
          %1154 = vmatprep.subr.bf16.mxu0 0
          %1155 = vmatpush1.bf16.msra.mxu0 0
          %1156 = vmatprep.mubr.bf16.mxu0 0
          %1157 = vmatmul.mubr.bf16.gmra.mrb[0].mxu0 %v986
          %v1158 = vpop.f32.mrb[0].mxu0
          %v1159 = vadd.f32 %v1110, %v1158
          %v1160 = vpop.f32.mrb[0].mxu0
          %v1161 = vpop.f32.mrb[0].mxu0
          %v1162 = vpop.f32.mrb[0].mxu0
          %1163 = vdwg.mxu0
          %s1164 = scalar_lea.vmem [#allocation18], 16
          %v1165 = vld [vmem:[%s1164] sm:$0xf]
          %v1166 = vld [vmem:[%s1164 + $0x4] sm:$0xf]
          %v1167 = vld [vmem:[%s1164 + $0x8] sm:$0xf]
          %v1168 = vld [vmem:[%s1164 + $0xc] sm:$0xf]
          %s1169 = scalar_lea.vmem [#allocation19], 1
          %v1170 = vld [vmem:[%s1169] sm:$0x1]
          %v1172 = vlaneseq
          %v1173 = vshrl.u32 %v1172, 7
          %v1174 = vsub.s32 0, %v1173
          %v1175 = vrot.slane %v1170, %v1174
          %v1181 = vunpack.c.l.b16 %v1165
          %v1182 = vunpack.c.l.b16 %v1166
          %v1183 = vunpack.c.l.b16 %v1167
          %v1184 = vunpack.c.l.b16 %v1168
          %v1185 = vpack.c.b16 %v1182, %v1181
          %v1186 = vpack.c.b16 %v1184, %v1183
          %1189 = vmatprep.subr.bf16.mxu0 0
          %1190 = vmatpush1.bf16.msra.mxu0 %v1185
          %1191 = vmatprep.subr.bf16.mxu0 0
          %1192 = vmatpush1.bf16.msra.mxu0 %v1186
          %1193 = vmatprep.subr.bf16.mxu0 0
          %1194 = vmatpush1.bf16.msra.mxu0 0
          %1195 = vmatprep.subr.bf16.mxu0 0
          %1196 = vmatpush1.bf16.msra.mxu0 0
          %1197 = vmatprep.subr.bf16.mxu0 0
          %1198 = vmatpush1.bf16.msra.mxu0 0
          %1199 = vmatprep.subr.bf16.mxu0 0
          %1200 = vmatpush1.bf16.msra.mxu0 0
          %1201 = vmatprep.subr.bf16.mxu0 0
          %1202 = vmatpush1.bf16.msra.mxu0 0
          %1203 = vmatprep.subr.bf16.mxu0 0
          %1204 = vmatpush1.bf16.msra.mxu0 0
          %1205 = vmatprep.subr.bf16.mxu0 0
          %1206 = vmatpush1.bf16.msra.mxu0 0
          %1207 = vmatprep.subr.bf16.mxu0 0
          %1208 = vmatpush1.bf16.msra.mxu0 0
          %1209 = vmatprep.subr.bf16.mxu0 0
          %1210 = vmatpush1.bf16.msra.mxu0 0
          %1211 = vmatprep.subr.bf16.mxu0 0
          %1212 = vmatpush1.bf16.msra.mxu0 0
          %1213 = vmatprep.subr.bf16.mxu0 0
          %1214 = vmatpush1.bf16.msra.mxu0 0
          %1215 = vmatprep.subr.bf16.mxu0 0
          %1216 = vmatpush1.bf16.msra.mxu0 0
          %1217 = vmatprep.subr.bf16.mxu0 0
          %1218 = vmatpush1.bf16.msra.mxu0 0
          %1219 = vmatprep.subr.bf16.mxu0 0
          %1220 = vmatpush1.bf16.msra.mxu0 0
          %1221 = vmatprep.mubr.bf16.mxu0 0
          %1222 = vmatmul.mubr.bf16.gmra.mrb[0].mxu0 %v1052
          %v1223 = vpop.f32.mrb[0].mxu0
          %v1224 = vadd.f32 %v1175, %v1223
          %v1225 = vpop.f32.mrb[0].mxu0
          %v1226 = vpop.f32.mrb[0].mxu0
          %v1227 = vpop.f32.mrb[0].mxu0
          %1228 = vdwg.mxu0
          %v1229 = vpack.c.bf16 %v1159, %v1159
          %s1230 = scalar_lea.vmem [#allocation2], 4
          %1231 = vst.msk [vmem:[%s1230] sm:$0xf] %vm1095, %v1229
          %v1232 = vpack.c.bf16 %v1224, %v1224
          %s1233 = scalar_lea.vmem [#allocation3], 4
          %1234 = vst.msk [vmem:[%s1233] sm:$0xf] %vm1095, %v1232
          %s1235 = scalar_lea.vmem [#allocation15], 32
          %v1236 = vld [vmem:[%s1235] sm:$0xf]
          %v1237 = vld [vmem:[%s1235 + $0x4] sm:$0xf]
          %v1238 = vld [vmem:[%s1235 + $0x8] sm:$0xf]
          %v1239 = vld [vmem:[%s1235 + $0xc] sm:$0xf]
          %s1240 = scalar_lea.vmem [#allocation16], 2
          %v1241 = vld [vmem:[%s1240] sm:$0x1]
          %v1243 = vlaneseq
          %v1244 = vshrl.u32 %v1243, 7
          %v1245 = vsub.s32 0, %v1244
          %v1246 = vrot.slane %v1241, %v1245
          %v1252 = vunpack.c.l.b16 %v1236
          %v1253 = vunpack.c.l.b16 %v1237
          %v1254 = vunpack.c.l.b16 %v1238
          %v1255 = vunpack.c.l.b16 %v1239
          %v1256 = vpack.c.b16 %v1253, %v1252
          %v1257 = vpack.c.b16 %v1255, %v1254
          %1260 = vmatprep.subr.bf16.mxu0 0
          %1261 = vmatpush1.bf16.msra.mxu0 %v1256
          %1262 = vmatprep.subr.bf16.mxu0 0
          %1263 = vmatpush1.bf16.msra.mxu0 %v1257
          %1264 = vmatprep.subr.bf16.mxu0 0
          %1265 = vmatpush1.bf16.msra.mxu0 0
          %1266 = vmatprep.subr.bf16.mxu0 0
          %1267 = vmatpush1.bf16.msra.mxu0 0
          %1268 = vmatprep.subr.bf16.mxu0 0
          %1269 = vmatpush1.bf16.msra.mxu0 0
          %1270 = vmatprep.subr.bf16.mxu0 0
          %1271 = vmatpush1.bf16.msra.mxu0 0
          %1272 = vmatprep.subr.bf16.mxu0 0
          %1273 = vmatpush1.bf16.msra.mxu0 0
          %1274 = vmatprep.subr.bf16.mxu0 0
          %1275 = vmatpush1.bf16.msra.mxu0 0
          %1276 = vmatprep.subr.bf16.mxu0 0
          %1277 = vmatpush1.bf16.msra.mxu0 0
          %1278 = vmatprep.subr.bf16.mxu0 0
          %1279 = vmatpush1.bf16.msra.mxu0 0
          %1280 = vmatprep.subr.bf16.mxu0 0
          %1281 = vmatpush1.bf16.msra.mxu0 0
          %1282 = vmatprep.subr.bf16.mxu0 0
          %1283 = vmatpush1.bf16.msra.mxu0 0
          %1284 = vmatprep.subr.bf16.mxu0 0
          %1285 = vmatpush1.bf16.msra.mxu0 0
          %1286 = vmatprep.subr.bf16.mxu0 0
          %1287 = vmatpush1.bf16.msra.mxu0 0
          %1288 = vmatprep.subr.bf16.mxu0 0
          %1289 = vmatpush1.bf16.msra.mxu0 0
          %1290 = vmatprep.subr.bf16.mxu0 0
          %1291 = vmatpush1.bf16.msra.mxu0 0
          %1292 = vmatprep.mubr.bf16.mxu0 0
          %1293 = vmatmul.mubr.bf16.gmra.mrb[0].mxu0 %v986
          %v1294 = vpop.f32.mrb[0].mxu0
          %v1295 = vadd.f32 %v1246, %v1294
          %v1296 = vpop.f32.mrb[0].mxu0
          %v1297 = vpop.f32.mrb[0].mxu0
          %v1298 = vpop.f32.mrb[0].mxu0
          %1299 = vdwg.mxu0
          %s1300 = scalar_lea.vmem [#allocation18], 32
          %v1301 = vld [vmem:[%s1300] sm:$0xf]
          %v1302 = vld [vmem:[%s1300 + $0x4] sm:$0xf]
          %v1303 = vld [vmem:[%s1300 + $0x8] sm:$0xf]
          %v1304 = vld [vmem:[%s1300 + $0xc] sm:$0xf]
          %s1305 = scalar_lea.vmem [#allocation19], 2
          %v1306 = vld [vmem:[%s1305] sm:$0x1]
          %v1308 = vlaneseq
          %v1309 = vshrl.u32 %v1308, 7
          %v1310 = vsub.s32 0, %v1309
          %v1311 = vrot.slane %v1306, %v1310
          %v1317 = vunpack.c.l.b16 %v1301
          %v1318 = vunpack.c.l.b16 %v1302
          %v1319 = vunpack.c.l.b16 %v1303
          %v1320 = vunpack.c.l.b16 %v1304
          %v1321 = vpack.c.b16 %v1318, %v1317
          %v1322 = vpack.c.b16 %v1320, %v1319
          %1325 = vmatprep.subr.bf16.mxu0 0
          %1326 = vmatpush1.bf16.msra.mxu0 %v1321
          %1327 = vmatprep.subr.bf16.mxu0 0
          %1328 = vmatpush1.bf16.msra.mxu0 %v1322
          %1329 = vmatprep.subr.bf16.mxu0 0
          %1330 = vmatpush1.bf16.msra.mxu0 0
          %1331 = vmatprep.subr.bf16.mxu0 0
          %1332 = vmatpush1.bf16.msra.mxu0 0
          %1333 = vmatprep.subr.bf16.mxu0 0
          %1334 = vmatpush1.bf16.msra.mxu0 0
          %1335 = vmatprep.subr.bf16.mxu0 0
          %1336 = vmatpush1.bf16.msra.mxu0 0
          %1337 = vmatprep.subr.bf16.mxu0 0
          %1338 = vmatpush1.bf16.msra.mxu0 0
          %1339 = vmatprep.subr.bf16.mxu0 0
          %1340 = vmatpush1.bf16.msra.mxu0 0
          %1341 = vmatprep.subr.bf16.mxu0 0
          %1342 = vmatpush1.bf16.msra.mxu0 0
          %1343 = vmatprep.subr.bf16.mxu0 0
          %1344 = vmatpush1.bf16.msra.mxu0 0
          %1345 = vmatprep.subr.bf16.mxu0 0
          %1346 = vmatpush1.bf16.msra.mxu0 0
          %1347 = vmatprep.subr.bf16.mxu0 0
          %1348 = vmatpush1.bf16.msra.mxu0 0
          %1349 = vmatprep.subr.bf16.mxu0 0
          %1350 = vmatpush1.bf16.msra.mxu0 0
          %1351 = vmatprep.subr.bf16.mxu0 0
          %1352 = vmatpush1.bf16.msra.mxu0 0
          %1353 = vmatprep.subr.bf16.mxu0 0
          %1354 = vmatpush1.bf16.msra.mxu0 0
          %1355 = vmatprep.subr.bf16.mxu0 0
          %1356 = vmatpush1.bf16.msra.mxu0 0
          %1357 = vmatprep.mubr.bf16.mxu0 0
          %1358 = vmatmul.mubr.bf16.gmra.mrb[0].mxu0 %v1052
          %v1359 = vpop.f32.mrb[0].mxu0
          %v1360 = vadd.f32 %v1311, %v1359
          %v1361 = vpop.f32.mrb[0].mxu0
          %v1362 = vpop.f32.mrb[0].mxu0
          %v1363 = vpop.f32.mrb[0].mxu0
          %1364 = vdwg.mxu0
          %v1365 = vpack.c.bf16 %v1295, %v1295
          %s1366 = scalar_lea.vmem [#allocation2], 8
          %1367 = vst.msk [vmem:[%s1366] sm:$0xf] %vm1095, %v1365
          %v1368 = vpack.c.bf16 %v1360, %v1360
          %s1369 = scalar_lea.vmem [#allocation3], 8
          %1370 = vst.msk [vmem:[%s1369] sm:$0xf] %vm1095, %v1368
          %s1371 = scalar_lea.vmem [#allocation15], 48
          %v1372 = vld [vmem:[%s1371] sm:$0xf]
          %v1373 = vld [vmem:[%s1371 + $0x4] sm:$0xf]
          %v1374 = vld [vmem:[%s1371 + $0x8] sm:$0xf]
          %v1375 = vld [vmem:[%s1371 + $0xc] sm:$0xf]
          %s1376 = scalar_lea.vmem [#allocation16], 3
          %v1377 = vld [vmem:[%s1376] sm:$0x1]
          %v1379 = vlaneseq
          %v1380 = vshrl.u32 %v1379, 7
          %v1381 = vsub.s32 0, %v1380
          %v1382 = vrot.slane %v1377, %v1381
          %v1388 = vunpack.c.l.b16 %v1372
          %v1389 = vunpack.c.l.b16 %v1373
          %v1390 = vunpack.c.l.b16 %v1374
          %v1391 = vunpack.c.l.b16 %v1375
          %v1392 = vpack.c.b16 %v1389, %v1388
          %v1393 = vpack.c.b16 %v1391, %v1390
          %1396 = vmatprep.subr.bf16.mxu0 0
          %1397 = vmatpush1.bf16.msra.mxu0 %v1392
          %1398 = vmatprep.subr.bf16.mxu0 0
          %1399 = vmatpush1.bf16.msra.mxu0 %v1393
          %1400 = vmatprep.subr.bf16.mxu0 0
          %1401 = vmatpush1.bf16.msra.mxu0 0
          %1402 = vmatprep.subr.bf16.mxu0 0
          %1403 = vmatpush1.bf16.msra.mxu0 0
          %1404 = vmatprep.subr.bf16.mxu0 0
          %1405 = vmatpush1.bf16.msra.mxu0 0
          %1406 = vmatprep.subr.bf16.mxu0 0
          %1407 = vmatpush1.bf16.msra.mxu0 0
          %1408 = vmatprep.subr.bf16.mxu0 0
          %1409 = vmatpush1.bf16.msra.mxu0 0
          %1410 = vmatprep.subr.bf16.mxu0 0
          %1411 = vmatpush1.bf16.msra.mxu0 0
          %1412 = vmatprep.subr.bf16.mxu0 0
          %1413 = vmatpush1.bf16.msra.mxu0 0
          %1414 = vmatprep.subr.bf16.mxu0 0
          %1415 = vmatpush1.bf16.msra.mxu0 0
          %1416 = vmatprep.subr.bf16.mxu0 0
          %1417 = vmatpush1.bf16.msra.mxu0 0
          %1418 = vmatprep.subr.bf16.mxu0 0
          %1419 = vmatpush1.bf16.msra.mxu0 0
          %1420 = vmatprep.subr.bf16.mxu0 0
          %1421 = vmatpush1.bf16.msra.mxu0 0
          %1422 = vmatprep.subr.bf16.mxu0 0
          %1423 = vmatpush1.bf16.msra.mxu0 0
          %1424 = vmatprep.subr.bf16.mxu0 0
          %1425 = vmatpush1.bf16.msra.mxu0 0
          %1426 = vmatprep.subr.bf16.mxu0 0
          %1427 = vmatpush1.bf16.msra.mxu0 0
          %1428 = vmatprep.mubr.bf16.mxu0 0
          %1429 = vmatmul.mubr.bf16.gmra.mrb[0].mxu0 %v986
          %v1430 = vpop.f32.mrb[0].mxu0
          %v1431 = vadd.f32 %v1382, %v1430
          %v1432 = vpop.f32.mrb[0].mxu0
          %v1433 = vpop.f32.mrb[0].mxu0
          %v1434 = vpop.f32.mrb[0].mxu0
          %1435 = vdwg.mxu0
          %s1436 = scalar_lea.vmem [#allocation18], 48
          %v1437 = vld [vmem:[%s1436] sm:$0xf]
          %v1438 = vld [vmem:[%s1436 + $0x4] sm:$0xf]
          %v1439 = vld [vmem:[%s1436 + $0x8] sm:$0xf]
          %v1440 = vld [vmem:[%s1436 + $0xc] sm:$0xf]
          %s1441 = scalar_lea.vmem [#allocation19], 3
          %v1442 = vld [vmem:[%s1441] sm:$0x1]
          %v1444 = vlaneseq
          %v1445 = vshrl.u32 %v1444, 7
          %v1446 = vsub.s32 0, %v1445
          %v1447 = vrot.slane %v1442, %v1446
          %v1453 = vunpack.c.l.b16 %v1437
          %v1454 = vunpack.c.l.b16 %v1438
          %v1455 = vunpack.c.l.b16 %v1439
          %v1456 = vunpack.c.l.b16 %v1440
          %v1457 = vpack.c.b16 %v1454, %v1453
          %v1458 = vpack.c.b16 %v1456, %v1455
          %1461 = vmatprep.subr.bf16.mxu0 0
          %1462 = vmatpush1.bf16.msra.mxu0 %v1457
          %1463 = vmatprep.subr.bf16.mxu0 0
          %1464 = vmatpush1.bf16.msra.mxu0 %v1458
          %1465 = vmatprep.subr.bf16.mxu0 0
          %1466 = vmatpush1.bf16.msra.mxu0 0
          %1467 = vmatprep.subr.bf16.mxu0 0
          %1468 = vmatpush1.bf16.msra.mxu0 0
          %1469 = vmatprep.subr.bf16.mxu0 0
          %1470 = vmatpush1.bf16.msra.mxu0 0
          %1471 = vmatprep.subr.bf16.mxu0 0
          %1472 = vmatpush1.bf16.msra.mxu0 0
          %1473 = vmatprep.subr.bf16.mxu0 0
          %1474 = vmatpush1.bf16.msra.mxu0 0
          %1475 = vmatprep.subr.bf16.mxu0 0
          %1476 = vmatpush1.bf16.msra.mxu0 0
          %1477 = vmatprep.subr.bf16.mxu0 0
          %1478 = vmatpush1.bf16.msra.mxu0 0
          %1479 = vmatprep.subr.bf16.mxu0 0
          %1480 = vmatpush1.bf16.msra.mxu0 0
          %1481 = vmatprep.subr.bf16.mxu0 0
          %1482 = vmatpush1.bf16.msra.mxu0 0
          %1483 = vmatprep.subr.bf16.mxu0 0
          %1484 = vmatpush1.bf16.msra.mxu0 0
          %1485 = vmatprep.subr.bf16.mxu0 0
          %1486 = vmatpush1.bf16.msra.mxu0 0
          %1487 = vmatprep.subr.bf16.mxu0 0
          %1488 = vmatpush1.bf16.msra.mxu0 0
          %1489 = vmatprep.subr.bf16.mxu0 0
          %1490 = vmatpush1.bf16.msra.mxu0 0
          %1491 = vmatprep.subr.bf16.mxu0 0
          %1492 = vmatpush1.bf16.msra.mxu0 0
          %1493 = vmatprep.mubr.bf16.mxu0 0
          %1494 = vmatmul.mubr.bf16.gmra.mrb[0].mxu0 %v1052
          %v1495 = vpop.f32.mrb[0].mxu0
          %v1496 = vadd.f32 %v1447, %v1495
          %v1497 = vpop.f32.mrb[0].mxu0
          %v1498 = vpop.f32.mrb[0].mxu0
          %v1499 = vpop.f32.mrb[0].mxu0
          %1500 = vdwg.mxu0
          %v1501 = vpack.c.bf16 %v1431, %v1431
          %s1502 = scalar_lea.vmem [#allocation2], 12
          %1503 = vst.msk [vmem:[%s1502] sm:$0xf] %vm1095, %v1501
          %v1504 = vpack.c.bf16 %v1496, %v1496
          %s1505 = scalar_lea.vmem [#allocation3], 12
          %1506 = vst.msk [vmem:[%s1505] sm:$0xf] %vm1095, %v1504
        $region176: #{tpu_custom_call.1} parent=95 // pred_fallthru
          _
        %v1507 = vld [vmem:[%s779] sm:$0xff]
        %v1508 = vmul.f32 %v1507, %v1507
        %vm1509 = vcmask 261120
        %v1510 = vsel %vm1509, %v1508, 0.0
        %1511 = vadd.xlane.f32.xlu0 %v1510
        %v1512 = vpop.xlane.xlu0 %1511
        %v1513 = vrcp.pop 32.0
        %v1514 = vmul.f32 %v1512, %v1513
        %v1515 = vadd.f32 %v1514, 1e-06
        %v1516 = vrsqrt.pop %v1515
        %v1517 = vmul.f32 %v1507, %v1516
        %v1519 = vlaneseq
        %v1520 = vshrl.u32 %v1519, 7
        %v1521 = vsub.s32 0, %v1520
        %v1522 = vrot.slane %v927, %v1521
        %v1524 = vmul.f32 %v1517, %v1522
        %v1525 = vpack.c.bf16 %v1524, %v1524
        %v1526 = vld [vmem:[#allocation12] sm:$0xf]
        %v1527 = vld [vmem:[#allocation12 + $0x4] sm:$0xf]
        %v1528 = vld [vmem:[#allocation12 + $0x8] sm:$0xf]
        %v1529 = vld [vmem:[#allocation12 + $0xc] sm:$0xf]
        %v1530 = vld [vmem:[#allocation13] sm:$0x1]
        %v1532 = vlaneseq
        %v1533 = vshrl.u32 %v1532, 7
        %v1534 = vsub.s32 0, %v1533
        %v1535 = vrot.slane %v1530, %v1534
        %v1541 = vunpack.c.l.b16 %v1526
        %v1542 = vunpack.c.l.b16 %v1527
        %v1543 = vunpack.c.l.b16 %v1528
        %v1544 = vunpack.c.l.b16 %v1529
        %v1545 = vpack.c.b16 %v1542, %v1541
        %v1546 = vpack.c.b16 %v1544, %v1543
        %v1550 = vsel %vm1509, %v1525, 0
        %1552 = vmatprep.subr.bf16.mxu0 0
        %1553 = vmatpush1.bf16.msra.mxu0 %v1545
        %1554 = vmatprep.subr.bf16.mxu0 0
        %1555 = vmatpush1.bf16.msra.mxu0 %v1546
        %1556 = vmatprep.subr.bf16.mxu0 0
        %1557 = vmatpush1.bf16.msra.mxu0 0
        %1558 = vmatprep.subr.bf16.mxu0 0
        %1559 = vmatpush1.bf16.msra.mxu0 0
        %1560 = vmatprep.subr.bf16.mxu0 0
        %1561 = vmatpush1.bf16.msra.mxu0 0
        %1562 = vmatprep.subr.bf16.mxu0 0
        %1563 = vmatpush1.bf16.msra.mxu0 0
        %1564 = vmatprep.subr.bf16.mxu0 0
        %1565 = vmatpush1.bf16.msra.mxu0 0
        %1566 = vmatprep.subr.bf16.mxu0 0
        %1567 = vmatpush1.bf16.msra.mxu0 0
        %1568 = vmatprep.subr.bf16.mxu0 0
        %1569 = vmatpush1.bf16.msra.mxu0 0
        %1570 = vmatprep.subr.bf16.mxu0 0
        %1571 = vmatpush1.bf16.msra.mxu0 0
        %1572 = vmatprep.subr.bf16.mxu0 0
        %1573 = vmatpush1.bf16.msra.mxu0 0
        %1574 = vmatprep.subr.bf16.mxu0 0
        %1575 = vmatpush1.bf16.msra.mxu0 0
        %1576 = vmatprep.subr.bf16.mxu0 0
        %1577 = vmatpush1.bf16.msra.mxu0 0
        %1578 = vmatprep.subr.bf16.mxu0 0
        %1579 = vmatpush1.bf16.msra.mxu0 0
        %1580 = vmatprep.subr.bf16.mxu0 0
        %1581 = vmatpush1.bf16.msra.mxu0 0
        %1582 = vmatprep.subr.bf16.mxu0 0
        %1583 = vmatpush1.bf16.msra.mxu0 0
        %1584 = vmatprep.mubr.bf16.mxu0 0
        %1585 = vmatmul.mubr.bf16.gmra.mrb[0].mxu0 %v1550
        %v1586 = vpop.f32.mrb[0].mxu0
        %v1587 = vadd.f32 %v1535, %v1586
        %v1588 = vpop.f32.mrb[0].mxu0
        %v1589 = vpop.f32.mrb[0].mxu0
        %v1590 = vpop.f32.mrb[0].mxu0
        %1591 = vdwg.mxu0
        %v1592 = vld [vmem:[#allocation2] sm:$0xf]
        %v1593 = vld [vmem:[#allocation3] sm:$0xf]
        %v1594 = vpack.c.bf16 %v1587, %v1587
        %vm1595 = vcmask 64512
        %v1597 = vsel %vm1595, %v1594, 0
        %v1600 = vsel %vm1595, %v1592, 0
        %1602 = vmatprep.subr.bf16.mxu0 0
        %1603 = vmatpush1.bf16.xpose.msra.mxu0 %v1600
        %1604 = vmatprep.subr.bf16.mxu0 0
        %1605 = vmatpush1.bf16.xpose.msra.mxu0 0
        %1606 = vmatprep.subr.bf16.mxu0 0
        %1607 = vmatpush1.bf16.xpose.msra.mxu0 0
        %1608 = vmatprep.subr.bf16.mxu0 0
        %1609 = vmatpush1.bf16.xpose.msra.mxu0 0
        %1610 = vmatprep.subr.bf16.mxu0 0
        %1611 = vmatpush1.bf16.xpose.msra.mxu0 0
        %1612 = vmatprep.subr.bf16.mxu0 0
        %1613 = vmatpush1.bf16.xpose.msra.mxu0 0
        %1614 = vmatprep.subr.bf16.mxu0 0
        %1615 = vmatpush1.bf16.xpose.msra.mxu0 0
        %1616 = vmatprep.subr.bf16.mxu0 0
        %1617 = vmatpush1.bf16.xpose.msra.mxu0 0
        %1618 = vmatprep.subr.bf16.mxu0 0
        %1619 = vmatpush1.bf16.xpose.msra.mxu0 0
        %1620 = vmatprep.subr.bf16.mxu0 0
        %1621 = vmatpush1.bf16.xpose.msra.mxu0 0
        %1622 = vmatprep.subr.bf16.mxu0 0
        %1623 = vmatpush1.bf16.xpose.msra.mxu0 0
        %1624 = vmatprep.subr.bf16.mxu0 0
        %1625 = vmatpush1.bf16.xpose.msra.mxu0 0
        %1626 = vmatprep.subr.bf16.mxu0 0
        %1627 = vmatpush1.bf16.xpose.msra.mxu0 0
        %1628 = vmatprep.subr.bf16.mxu0 0
        %1629 = vmatpush1.bf16.xpose.msra.mxu0 0
        %1630 = vmatprep.subr.bf16.mxu0 0
        %1631 = vmatpush1.bf16.xpose.msra.mxu0 0
        %1632 = vmatprep.subr.bf16.mxu0 0
        %1633 = vmatpush1.bf16.xpose.msra.mxu0 0
        %1634 = vmatprep.mubr.bf16.mxu0 0
        %1635 = vmatmul.mubr.bf16.gmra.mrb[0].mxu0 %v1597
        %v1636 = vpop.f32.mrb[0].mxu0
        %v1637 = vadd.f32 0.0, %v1636
        %v1638 = vpop.f32.mrb[0].mxu0
        %v1639 = vpop.f32.mrb[0].mxu0
        %v1640 = vpop.f32.mrb[0].mxu0
        %1641 = vdwg.mxu0
        %v1642 = vmul.f32 %v1637, 0.35355338
        %v1643 = vsel %vm1595, %v1642, -inf
        %1644 = vmax.xlane.f32.xlu0 %v1643
        %v1645 = vpop.xlane.xlu0 %1644
        %v1646 = vsub.f32 %v1642, %v1645
        %v1647 = vmul.f32 %v1646, 1.442695
        %v1648 = vpow.pop %v1647
        %v1649 = vsel %vm1595, %v1648, 0.0
        %1650 = vadd.xlane.f32.xlu0 %v1649
        %v1651 = vpop.xlane.xlu0 %1650
        %v1652 = vrcp.pop %v1651
        %v1653 = vmul.f32 %v1648, %v1652
        %v1654 = vpack.c.bf16 %v1653, %v1653
        %v1656 = vsel %vm1595, %v1654, 0
        %vm1658 = vcmask 1043456
        %v1660 = vsel %vm1658, %v1593, 0
        %1662 = vmatprep.subr.bf16.mxu0 0
        %1663 = vmatpush1.bf16.msra.mxu0 %v1660
        %1664 = vmatprep.subr.bf16.mxu0 0
        %1665 = vmatpush1.bf16.msra.mxu0 0
        %1666 = vmatprep.subr.bf16.mxu0 0
        %1667 = vmatpush1.bf16.msra.mxu0 0
        %1668 = vmatprep.subr.bf16.mxu0 0
        %1669 = vmatpush1.bf16.msra.mxu0 0
        %1670 = vmatprep.subr.bf16.mxu0 0
        %1671 = vmatpush1.bf16.msra.mxu0 0
        %1672 = vmatprep.subr.bf16.mxu0 0
        %1673 = vmatpush1.bf16.msra.mxu0 0
        %1674 = vmatprep.subr.bf16.mxu0 0
        %1675 = vmatpush1.bf16.msra.mxu0 0
        %1676 = vmatprep.subr.bf16.mxu0 0
        %1677 = vmatpush1.bf16.msra.mxu0 0
        %1678 = vmatprep.subr.bf16.mxu0 0
        %1679 = vmatpush1.bf16.msra.mxu0 0
        %1680 = vmatprep.subr.bf16.mxu0 0
        %1681 = vmatpush1.bf16.msra.mxu0 0
        %1682 = vmatprep.subr.bf16.mxu0 0
        %1683 = vmatpush1.bf16.msra.mxu0 0
        %1684 = vmatprep.subr.bf16.mxu0 0
        %1685 = vmatpush1.bf16.msra.mxu0 0
        %1686 = vmatprep.subr.bf16.mxu0 0
        %1687 = vmatpush1.bf16.msra.mxu0 0
        %1688 = vmatprep.subr.bf16.mxu0 0
        %1689 = vmatpush1.bf16.msra.mxu0 0
        %1690 = vmatprep.subr.bf16.mxu0 0
        %1691 = vmatpush1.bf16.msra.mxu0 0
        %1692 = vmatprep.subr.bf16.mxu0 0
        %1693 = vmatpush1.bf16.msra.mxu0 0
        %1694 = vmatprep.mubr.bf16.mxu0 0
        %1695 = vmatmul.mubr.bf16.gmra.mrb[0].mxu0 %v1656
        %v1696 = vpop.f32.mrb[0].mxu0
        %v1697 = vadd.f32 0.0, %v1696
        %v1698 = vpop.f32.mrb[0].mxu0
        %v1699 = vpop.f32.mrb[0].mxu0
        %v1700 = vpop.f32.mrb[0].mxu0
        %1701 = vdwg.mxu0
        %v1702 = vpack.c.bf16 %v1697, %v1697
        %v1703 = vld [vmem:[#allocation21] sm:$0xf]
        %s1704 = scalar_lea.vmem [#allocation12], 16
        %v1705 = vld [vmem:[%s1704] sm:$0xf]
        %v1706 = vld [vmem:[%s1704 + $0x4] sm:$0xf]
        %v1707 = vld [vmem:[%s1704 + $0x8] sm:$0xf]
        %v1708 = vld [vmem:[%s1704 + $0xc] sm:$0xf]
        %s1709 = scalar_lea.vmem [#allocation13], 1
        %v1710 = vld [vmem:[%s1709] sm:$0x1]
        %v1712 = vlaneseq
        %v1713 = vshrl.u32 %v1712, 7
        %v1714 = vsub.s32 0, %v1713
        %v1715 = vrot.slane %v1710, %v1714
        %v1721 = vunpack.c.l.b16 %v1705
        %v1722 = vunpack.c.l.b16 %v1706
        %v1723 = vunpack.c.l.b16 %v1707
        %v1724 = vunpack.c.l.b16 %v1708
        %v1725 = vpack.c.b16 %v1722, %v1721
        %v1726 = vpack.c.b16 %v1724, %v1723
        %1729 = vmatprep.subr.bf16.mxu0 0
        %1730 = vmatpush1.bf16.msra.mxu0 %v1725
        %1731 = vmatprep.subr.bf16.mxu0 0
        %1732 = vmatpush1.bf16.msra.mxu0 %v1726
        %1733 = vmatprep.subr.bf16.mxu0 0
        %1734 = vmatpush1.bf16.msra.mxu0 0
        %1735 = vmatprep.subr.bf16.mxu0 0
        %1736 = vmatpush1.bf16.msra.mxu0 0
        %1737 = vmatprep.subr.bf16.mxu0 0
        %1738 = vmatpush1.bf16.msra.mxu0 0
        %1739 = vmatprep.subr.bf16.mxu0 0
        %1740 = vmatpush1.bf16.msra.mxu0 0
        %1741 = vmatprep.subr.bf16.mxu0 0
        %1742 = vmatpush1.bf16.msra.mxu0 0
        %1743 = vmatprep.subr.bf16.mxu0 0
        %1744 = vmatpush1.bf16.msra.mxu0 0
        %1745 = vmatprep.subr.bf16.mxu0 0
        %1746 = vmatpush1.bf16.msra.mxu0 0
        %1747 = vmatprep.subr.bf16.mxu0 0
        %1748 = vmatpush1.bf16.msra.mxu0 0
        %1749 = vmatprep.subr.bf16.mxu0 0
        %1750 = vmatpush1.bf16.msra.mxu0 0
        %1751 = vmatprep.subr.bf16.mxu0 0
        %1752 = vmatpush1.bf16.msra.mxu0 0
        %1753 = vmatprep.subr.bf16.mxu0 0
        %1754 = vmatpush1.bf16.msra.mxu0 0
        %1755 = vmatprep.subr.bf16.mxu0 0
        %1756 = vmatpush1.bf16.msra.mxu0 0
        %1757 = vmatprep.subr.bf16.mxu0 0
        %1758 = vmatpush1.bf16.msra.mxu0 0
        %1759 = vmatprep.subr.bf16.mxu0 0
        %1760 = vmatpush1.bf16.msra.mxu0 0
        %1761 = vmatprep.mubr.bf16.mxu0 0
        %1762 = vmatmul.mubr.bf16.gmra.mrb[0].mxu0 %v1550
        %v1763 = vpop.f32.mrb[0].mxu0
        %v1764 = vadd.f32 %v1715, %v1763
        %v1765 = vpop.f32.mrb[0].mxu0
        %v1766 = vpop.f32.mrb[0].mxu0
        %v1767 = vpop.f32.mrb[0].mxu0
        %1768 = vdwg.mxu0
        %s1769 = scalar_lea.vmem [#allocation2], 4
        %v1770 = vld [vmem:[%s1769] sm:$0xf]
        %s1771 = scalar_lea.vmem [#allocation3], 4
        %v1772 = vld [vmem:[%s1771] sm:$0xf]
        %v1773 = vpack.c.bf16 %v1764, %v1764
        %v1775 = vsel %vm1595, %v1773, 0
        %v1778 = vsel %vm1595, %v1770, 0
        %1780 = vmatprep.subr.bf16.mxu0 0
        %1781 = vmatpush1.bf16.xpose.msra.mxu0 %v1778
        %1782 = vmatprep.subr.bf16.mxu0 0
        %1783 = vmatpush1.bf16.xpose.msra.mxu0 0
        %1784 = vmatprep.subr.bf16.mxu0 0
        %1785 = vmatpush1.bf16.xpose.msra.mxu0 0
        %1786 = vmatprep.subr.bf16.mxu0 0
        %1787 = vmatpush1.bf16.xpose.msra.mxu0 0
        %1788 = vmatprep.subr.bf16.mxu0 0
        %1789 = vmatpush1.bf16.xpose.msra.mxu0 0
        %1790 = vmatprep.subr.bf16.mxu0 0
        %1791 = vmatpush1.bf16.xpose.msra.mxu0 0
        %1792 = vmatprep.subr.bf16.mxu0 0
        %1793 = vmatpush1.bf16.xpose.msra.mxu0 0
        %1794 = vmatprep.subr.bf16.mxu0 0
        %1795 = vmatpush1.bf16.xpose.msra.mxu0 0
        %1796 = vmatprep.subr.bf16.mxu0 0
        %1797 = vmatpush1.bf16.xpose.msra.mxu0 0
        %1798 = vmatprep.subr.bf16.mxu0 0
        %1799 = vmatpush1.bf16.xpose.msra.mxu0 0
        %1800 = vmatprep.subr.bf16.mxu0 0
        %1801 = vmatpush1.bf16.xpose.msra.mxu0 0
        %1802 = vmatprep.subr.bf16.mxu0 0
        %1803 = vmatpush1.bf16.xpose.msra.mxu0 0
        %1804 = vmatprep.subr.bf16.mxu0 0
        %1805 = vmatpush1.bf16.xpose.msra.mxu0 0
        %1806 = vmatprep.subr.bf16.mxu0 0
        %1807 = vmatpush1.bf16.xpose.msra.mxu0 0
        %1808 = vmatprep.subr.bf16.mxu0 0
        %1809 = vmatpush1.bf16.xpose.msra.mxu0 0
        %1810 = vmatprep.subr.bf16.mxu0 0
        %1811 = vmatpush1.bf16.xpose.msra.mxu0 0
        %1812 = vmatprep.mubr.bf16.mxu0 0
        %1813 = vmatmul.mubr.bf16.gmra.mrb[0].mxu0 %v1775
        %v1814 = vpop.f32.mrb[0].mxu0
        %v1815 = vadd.f32 0.0, %v1814
        %v1816 = vpop.f32.mrb[0].mxu0
        %v1817 = vpop.f32.mrb[0].mxu0
        %v1818 = vpop.f32.mrb[0].mxu0
        %1819 = vdwg.mxu0
        %v1820 = vmul.f32 %v1815, 0.35355338
        %v1821 = vsel %vm1595, %v1820, -inf
        %1822 = vmax.xlane.f32.xlu0 %v1821
        %v1823 = vpop.xlane.xlu0 %1822
        %v1824 = vsub.f32 %v1820, %v1823
        %v1825 = vmul.f32 %v1824, 1.442695
        %v1826 = vpow.pop %v1825
        %v1827 = vsel %vm1595, %v1826, 0.0
        %1828 = vadd.xlane.f32.xlu0 %v1827
        %v1829 = vpop.xlane.xlu0 %1828
        %v1830 = vrcp.pop %v1829
        %v1831 = vmul.f32 %v1826, %v1830
        %v1832 = vpack.c.bf16 %v1831, %v1831
        %v1834 = vsel %vm1595, %v1832, 0
        %v1837 = vsel %vm1658, %v1772, 0
        %1839 = vmatprep.subr.bf16.mxu0 0
        %1840 = vmatpush1.bf16.msra.mxu0 %v1837
        %1841 = vmatprep.subr.bf16.mxu0 0
        %1842 = vmatpush1.bf16.msra.mxu0 0
        %1843 = vmatprep.subr.bf16.mxu0 0
        %1844 = vmatpush1.bf16.msra.mxu0 0
        %1845 = vmatprep.subr.bf16.mxu0 0
        %1846 = vmatpush1.bf16.msra.mxu0 0
        %1847 = vmatprep.subr.bf16.mxu0 0
        %1848 = vmatpush1.bf16.msra.mxu0 0
        %1849 = vmatprep.subr.bf16.mxu0 0
        %1850 = vmatpush1.bf16.msra.mxu0 0
        %1851 = vmatprep.subr.bf16.mxu0 0
        %1852 = vmatpush1.bf16.msra.mxu0 0
        %1853 = vmatprep.subr.bf16.mxu0 0
        %1854 = vmatpush1.bf16.msra.mxu0 0
        %1855 = vmatprep.subr.bf16.mxu0 0
        %1856 = vmatpush1.bf16.msra.mxu0 0
        %1857 = vmatprep.subr.bf16.mxu0 0
        %1858 = vmatpush1.bf16.msra.mxu0 0
        %1859 = vmatprep.subr.bf16.mxu0 0
        %1860 = vmatpush1.bf16.msra.mxu0 0
        %1861 = vmatprep.subr.bf16.mxu0 0
        %1862 = vmatpush1.bf16.msra.mxu0 0
        %1863 = vmatprep.subr.bf16.mxu0 0
        %1864 = vmatpush1.bf16.msra.mxu0 0
        %1865 = vmatprep.subr.bf16.mxu0 0
        %1866 = vmatpush1.bf16.msra.mxu0 0
        %1867 = vmatprep.subr.bf16.mxu0 0
        %1868 = vmatpush1.bf16.msra.mxu0 0
        %1869 = vmatprep.subr.bf16.mxu0 0
        %1870 = vmatpush1.bf16.msra.mxu0 0
        %1871 = vmatprep.mubr.bf16.mxu0 0
        %1872 = vmatmul.mubr.bf16.gmra.mrb[0].mxu0 %v1834
        %v1873 = vpop.f32.mrb[0].mxu0
        %v1874 = vadd.f32 0.0, %v1873
        %v1875 = vpop.f32.mrb[0].mxu0
        %v1876 = vpop.f32.mrb[0].mxu0
        %v1877 = vpop.f32.mrb[0].mxu0
        %1878 = vdwg.mxu0
        %v1879 = vpack.c.bf16 %v1874, %v1874
        %s1880 = scalar_lea.vmem [#allocation21], 4
        %v1881 = vld [vmem:[%s1880] sm:$0xf]
        %v1883 = vsel %vm1595, %v1879, 0
        %v1886 = vsel %vm1658, %v1881, 0
        %1888 = vmatprep.subr.bf16.mxu0 0
        %1889 = vmatpush1.bf16.msra.mxu0 %v1886
        %1890 = vmatprep.subr.bf16.mxu0 0
        %1891 = vmatpush1.bf16.msra.mxu0 0
        %1892 = vmatprep.subr.bf16.mxu0 0
        %1893 = vmatpush1.bf16.msra.mxu0 0
        %1894 = vmatprep.subr.bf16.mxu0 0
        %1895 = vmatpush1.bf16.msra.mxu0 0
        %1896 = vmatprep.subr.bf16.mxu0 0
        %1897 = vmatpush1.bf16.msra.mxu0 0
        %1898 = vmatprep.subr.bf16.mxu0 0
        %1899 = vmatpush1.bf16.msra.mxu0 0
        %1900 = vmatprep.subr.bf16.mxu0 0
        %1901 = vmatpush1.bf16.msra.mxu0 0
        %1902 = vmatprep.subr.bf16.mxu0 0
        %1903 = vmatpush1.bf16.msra.mxu0 0
        %1904 = vmatprep.subr.bf16.mxu0 0
        %1905 = vmatpush1.bf16.msra.mxu0 0
        %1906 = vmatprep.subr.bf16.mxu0 0
        %1907 = vmatpush1.bf16.msra.mxu0 0
        %1908 = vmatprep.subr.bf16.mxu0 0
        %1909 = vmatpush1.bf16.msra.mxu0 0
        %1910 = vmatprep.subr.bf16.mxu0 0
        %1911 = vmatpush1.bf16.msra.mxu0 0
        %1912 = vmatprep.subr.bf16.mxu0 0
        %1913 = vmatpush1.bf16.msra.mxu0 0
        %1914 = vmatprep.subr.bf16.mxu0 0
        %1915 = vmatpush1.bf16.msra.mxu0 0
        %1916 = vmatprep.subr.bf16.mxu0 0
        %1917 = vmatpush1.bf16.msra.mxu0 0
        %1918 = vmatprep.subr.bf16.mxu0 0
        %1919 = vmatpush1.bf16.msra.mxu0 0
        %1920 = vmatprep.mubr.bf16.mxu0 0
        %1921 = vmatmul.mubr.bf16.gmra.mrb[0].mxu0 %v1883
        %v1922 = vpop.f32.mrb[0].mxu0
        %v1923 = vadd.f32 0.0, %v1922
        %v1924 = vpop.f32.mrb[0].mxu0
        %v1925 = vpop.f32.mrb[0].mxu0
        %v1926 = vpop.f32.mrb[0].mxu0
        %1927 = vdwg.mxu0
        %v1929 = vsel %vm1595, %v1702, 0
        %v1932 = vsel %vm1658, %v1703, 0
        %1934 = vmatprep.subr.bf16.mxu0 0
        %1935 = vmatpush1.bf16.msra.mxu0 %v1932
        %1936 = vmatprep.subr.bf16.mxu0 0
        %1937 = vmatpush1.bf16.msra.mxu0 0
        %1938 = vmatprep.subr.bf16.mxu0 0
        %1939 = vmatpush1.bf16.msra.mxu0 0
        %1940 = vmatprep.subr.bf16.mxu0 0
        %1941 = vmatpush1.bf16.msra.mxu0 0
        %1942 = vmatprep.subr.bf16.mxu0 0
        %1943 = vmatpush1.bf16.msra.mxu0 0
        %1944 = vmatprep.subr.bf16.mxu0 0
        %1945 = vmatpush1.bf16.msra.mxu0 0
        %1946 = vmatprep.subr.bf16.mxu0 0
        %1947 = vmatpush1.bf16.msra.mxu0 0
        %1948 = vmatprep.subr.bf16.mxu0 0
        %1949 = vmatpush1.bf16.msra.mxu0 0
        %1950 = vmatprep.subr.bf16.mxu0 0
        %1951 = vmatpush1.bf16.msra.mxu0 0
        %1952 = vmatprep.subr.bf16.mxu0 0
        %1953 = vmatpush1.bf16.msra.mxu0 0
        %1954 = vmatprep.subr.bf16.mxu0 0
        %1955 = vmatpush1.bf16.msra.mxu0 0
        %1956 = vmatprep.subr.bf16.mxu0 0
        %1957 = vmatpush1.bf16.msra.mxu0 0
        %1958 = vmatprep.subr.bf16.mxu0 0
        %1959 = vmatpush1.bf16.msra.mxu0 0
        %1960 = vmatprep.subr.bf16.mxu0 0
        %1961 = vmatpush1.bf16.msra.mxu0 0
        %1962 = vmatprep.subr.bf16.mxu0 0
        %1963 = vmatpush1.bf16.msra.mxu0 0
        %1964 = vmatprep.subr.bf16.mxu0 0
        %1965 = vmatpush1.bf16.msra.mxu0 0
        %1966 = vmatprep.mubr.bf16.mxu0 0
        %1967 = vmatmul.mubr.bf16.gmra.mrb[0].mxu0 %v1929
        %v1968 = vpop.f32.mrb[0].mxu0
        %v1969 = vadd.f32 %v1923, %v1968
        %v1970 = vpop.f32.mrb[0].mxu0
        %v1971 = vpop.f32.mrb[0].mxu0
        %v1972 = vpop.f32.mrb[0].mxu0
        %1973 = vdwg.mxu0
        %s1974 = scalar_lea.vmem [#allocation12], 32
        %v1975 = vld [vmem:[%s1974] sm:$0xf]
        %v1976 = vld [vmem:[%s1974 + $0x4] sm:$0xf]
        %v1977 = vld [vmem:[%s1974 + $0x8] sm:$0xf]
        %v1978 = vld [vmem:[%s1974 + $0xc] sm:$0xf]
        %s1979 = scalar_lea.vmem [#allocation13], 2
        %v1980 = vld [vmem:[%s1979] sm:$0x1]
        %v1982 = vlaneseq
        %v1983 = vshrl.u32 %v1982, 7
        %v1984 = vsub.s32 0, %v1983
        %v1985 = vrot.slane %v1980, %v1984
        %v1991 = vunpack.c.l.b16 %v1975
        %v1992 = vunpack.c.l.b16 %v1976
        %v1993 = vunpack.c.l.b16 %v1977
        %v1994 = vunpack.c.l.b16 %v1978
        %v1995 = vpack.c.b16 %v1992, %v1991
        %v1996 = vpack.c.b16 %v1994, %v1993
        %1999 = vmatprep.subr.bf16.mxu0 0
        %2000 = vmatpush1.bf16.msra.mxu0 %v1995
        %2001 = vmatprep.subr.bf16.mxu0 0
        %2002 = vmatpush1.bf16.msra.mxu0 %v1996
        %2003 = vmatprep.subr.bf16.mxu0 0
        %2004 = vmatpush1.bf16.msra.mxu0 0
        %2005 = vmatprep.subr.bf16.mxu0 0
        %2006 = vmatpush1.bf16.msra.mxu0 0
        %2007 = vmatprep.subr.bf16.mxu0 0
        %2008 = vmatpush1.bf16.msra.mxu0 0
        %2009 = vmatprep.subr.bf16.mxu0 0
        %2010 = vmatpush1.bf16.msra.mxu0 0
        %2011 = vmatprep.subr.bf16.mxu0 0
        %2012 = vmatpush1.bf16.msra.mxu0 0
        %2013 = vmatprep.subr.bf16.mxu0 0
        %2014 = vmatpush1.bf16.msra.mxu0 0
        %2015 = vmatprep.subr.bf16.mxu0 0
        %2016 = vmatpush1.bf16.msra.mxu0 0
        %2017 = vmatprep.subr.bf16.mxu0 0
        %2018 = vmatpush1.bf16.msra.mxu0 0
        %2019 = vmatprep.subr.bf16.mxu0 0
        %2020 = vmatpush1.bf16.msra.mxu0 0
        %2021 = vmatprep.subr.bf16.mxu0 0
        %2022 = vmatpush1.bf16.msra.mxu0 0
        %2023 = vmatprep.subr.bf16.mxu0 0
        %2024 = vmatpush1.bf16.msra.mxu0 0
        %2025 = vmatprep.subr.bf16.mxu0 0
        %2026 = vmatpush1.bf16.msra.mxu0 0
        %2027 = vmatprep.subr.bf16.mxu0 0
        %2028 = vmatpush1.bf16.msra.mxu0 0
        %2029 = vmatprep.subr.bf16.mxu0 0
        %2030 = vmatpush1.bf16.msra.mxu0 0
        %2031 = vmatprep.mubr.bf16.mxu0 0
        %2032 = vmatmul.mubr.bf16.gmra.mrb[0].mxu0 %v1550
        %v2033 = vpop.f32.mrb[0].mxu0
        %v2034 = vadd.f32 %v1985, %v2033
        %v2035 = vpop.f32.mrb[0].mxu0
        %v2036 = vpop.f32.mrb[0].mxu0
        %v2037 = vpop.f32.mrb[0].mxu0
        %2038 = vdwg.mxu0
        %s2039 = scalar_lea.vmem [#allocation2], 8
        %v2040 = vld [vmem:[%s2039] sm:$0xf]
        %s2041 = scalar_lea.vmem [#allocation3], 8
        %v2042 = vld [vmem:[%s2041] sm:$0xf]
        %v2043 = vpack.c.bf16 %v2034, %v2034
        %v2045 = vsel %vm1595, %v2043, 0
        %v2048 = vsel %vm1595, %v2040, 0
        %2050 = vmatprep.subr.bf16.mxu0 0
        %2051 = vmatpush1.bf16.xpose.msra.mxu0 %v2048
        %2052 = vmatprep.subr.bf16.mxu0 0
        %2053 = vmatpush1.bf16.xpose.msra.mxu0 0
        %2054 = vmatprep.subr.bf16.mxu0 0
        %2055 = vmatpush1.bf16.xpose.msra.mxu0 0
        %2056 = vmatprep.subr.bf16.mxu0 0
        %2057 = vmatpush1.bf16.xpose.msra.mxu0 0
        %2058 = vmatprep.subr.bf16.mxu0 0
        %2059 = vmatpush1.bf16.xpose.msra.mxu0 0
        %2060 = vmatprep.subr.bf16.mxu0 0
        %2061 = vmatpush1.bf16.xpose.msra.mxu0 0
        %2062 = vmatprep.subr.bf16.mxu0 0
        %2063 = vmatpush1.bf16.xpose.msra.mxu0 0
        %2064 = vmatprep.subr.bf16.mxu0 0
        %2065 = vmatpush1.bf16.xpose.msra.mxu0 0
        %2066 = vmatprep.subr.bf16.mxu0 0
        %2067 = vmatpush1.bf16.xpose.msra.mxu0 0
        %2068 = vmatprep.subr.bf16.mxu0 0
        %2069 = vmatpush1.bf16.xpose.msra.mxu0 0
        %2070 = vmatprep.subr.bf16.mxu0 0
        %2071 = vmatpush1.bf16.xpose.msra.mxu0 0
        %2072 = vmatprep.subr.bf16.mxu0 0
        %2073 = vmatpush1.bf16.xpose.msra.mxu0 0
        %2074 = vmatprep.subr.bf16.mxu0 0
        %2075 = vmatpush1.bf16.xpose.msra.mxu0 0
        %2076 = vmatprep.subr.bf16.mxu0 0
        %2077 = vmatpush1.bf16.xpose.msra.mxu0 0
        %2078 = vmatprep.subr.bf16.mxu0 0
        %2079 = vmatpush1.bf16.xpose.msra.mxu0 0
        %2080 = vmatprep.subr.bf16.mxu0 0
        %2081 = vmatpush1.bf16.xpose.msra.mxu0 0
        %2082 = vmatprep.mubr.bf16.mxu0 0
        %2083 = vmatmul.mubr.bf16.gmra.mrb[0].mxu0 %v2045
        %v2084 = vpop.f32.mrb[0].mxu0
        %v2085 = vadd.f32 0.0, %v2084
        %v2086 = vpop.f32.mrb[0].mxu0
        %v2087 = vpop.f32.mrb[0].mxu0
        %v2088 = vpop.f32.mrb[0].mxu0
        %2089 = vdwg.mxu0
        %v2090 = vmul.f32 %v2085, 0.35355338
        %v2091 = vsel %vm1595, %v2090, -inf
        %2092 = vmax.xlane.f32.xlu0 %v2091
        %v2093 = vpop.xlane.xlu0 %2092
        %v2094 = vsub.f32 %v2090, %v2093
        %v2095 = vmul.f32 %v2094, 1.442695
        %v2096 = vpow.pop %v2095
        %v2097 = vsel %vm1595, %v2096, 0.0
        %2098 = vadd.xlane.f32.xlu0 %v2097
        %v2099 = vpop.xlane.xlu0 %2098
        %v2100 = vrcp.pop %v2099
        %v2101 = vmul.f32 %v2096, %v2100
        %v2102 = vpack.c.bf16 %v2101, %v2101
        %v2104 = vsel %vm1595, %v2102, 0
        %v2107 = vsel %vm1658, %v2042, 0
        %2109 = vmatprep.subr.bf16.mxu0 0
        %2110 = vmatpush1.bf16.msra.mxu0 %v2107
        %2111 = vmatprep.subr.bf16.mxu0 0
        %2112 = vmatpush1.bf16.msra.mxu0 0
        %2113 = vmatprep.subr.bf16.mxu0 0
        %2114 = vmatpush1.bf16.msra.mxu0 0
        %2115 = vmatprep.subr.bf16.mxu0 0
        %2116 = vmatpush1.bf16.msra.mxu0 0
        %2117 = vmatprep.subr.bf16.mxu0 0
        %2118 = vmatpush1.bf16.msra.mxu0 0
        %2119 = vmatprep.subr.bf16.mxu0 0
        %2120 = vmatpush1.bf16.msra.mxu0 0
        %2121 = vmatprep.subr.bf16.mxu0 0
        %2122 = vmatpush1.bf16.msra.mxu0 0
        %2123 = vmatprep.subr.bf16.mxu0 0
        %2124 = vmatpush1.bf16.msra.mxu0 0
        %2125 = vmatprep.subr.bf16.mxu0 0
        %2126 = vmatpush1.bf16.msra.mxu0 0
        %2127 = vmatprep.subr.bf16.mxu0 0
        %2128 = vmatpush1.bf16.msra.mxu0 0
        %2129 = vmatprep.subr.bf16.mxu0 0
        %2130 = vmatpush1.bf16.msra.mxu0 0
        %2131 = vmatprep.subr.bf16.mxu0 0
        %2132 = vmatpush1.bf16.msra.mxu0 0
        %2133 = vmatprep.subr.bf16.mxu0 0
        %2134 = vmatpush1.bf16.msra.mxu0 0
        %2135 = vmatprep.subr.bf16.mxu0 0
        %2136 = vmatpush1.bf16.msra.mxu0 0
        %2137 = vmatprep.subr.bf16.mxu0 0
        %2138 = vmatpush1.bf16.msra.mxu0 0
        %2139 = vmatprep.subr.bf16.mxu0 0
        %2140 = vmatpush1.bf16.msra.mxu0 0
        %2141 = vmatprep.mubr.bf16.mxu0 0
        %2142 = vmatmul.mubr.bf16.gmra.mrb[0].mxu0 %v2104
        %v2143 = vpop.f32.mrb[0].mxu0
        %v2144 = vadd.f32 0.0, %v2143
        %v2145 = vpop.f32.mrb[0].mxu0
        %v2146 = vpop.f32.mrb[0].mxu0
        %v2147 = vpop.f32.mrb[0].mxu0
        %2148 = vdwg.mxu0
        %v2149 = vpack.c.bf16 %v2144, %v2144
        %s2150 = scalar_lea.vmem [#allocation21], 8
        %v2151 = vld [vmem:[%s2150] sm:$0xf]
        %v2153 = vsel %vm1595, %v2149, 0
        %v2156 = vsel %vm1658, %v2151, 0
        %2158 = vmatprep.subr.bf16.mxu0 0
        %2159 = vmatpush1.bf16.msra.mxu0 %v2156
        %2160 = vmatprep.subr.bf16.mxu0 0
        %2161 = vmatpush1.bf16.msra.mxu0 0
        %2162 = vmatprep.subr.bf16.mxu0 0
        %2163 = vmatpush1.bf16.msra.mxu0 0
        %2164 = vmatprep.subr.bf16.mxu0 0
        %2165 = vmatpush1.bf16.msra.mxu0 0
        %2166 = vmatprep.subr.bf16.mxu0 0
        %2167 = vmatpush1.bf16.msra.mxu0 0
        %2168 = vmatprep.subr.bf16.mxu0 0
        %2169 = vmatpush1.bf16.msra.mxu0 0
        %2170 = vmatprep.subr.bf16.mxu0 0
        %2171 = vmatpush1.bf16.msra.mxu0 0
        %2172 = vmatprep.subr.bf16.mxu0 0
        %2173 = vmatpush1.bf16.msra.mxu0 0
        %2174 = vmatprep.subr.bf16.mxu0 0
        %2175 = vmatpush1.bf16.msra.mxu0 0
        %2176 = vmatprep.subr.bf16.mxu0 0
        %2177 = vmatpush1.bf16.msra.mxu0 0
        %2178 = vmatprep.subr.bf16.mxu0 0
        %2179 = vmatpush1.bf16.msra.mxu0 0
        %2180 = vmatprep.subr.bf16.mxu0 0
        %2181 = vmatpush1.bf16.msra.mxu0 0
        %2182 = vmatprep.subr.bf16.mxu0 0
        %2183 = vmatpush1.bf16.msra.mxu0 0
        %2184 = vmatprep.subr.bf16.mxu0 0
        %2185 = vmatpush1.bf16.msra.mxu0 0
        %2186 = vmatprep.subr.bf16.mxu0 0
        %2187 = vmatpush1.bf16.msra.mxu0 0
        %2188 = vmatprep.subr.bf16.mxu0 0
        %2189 = vmatpush1.bf16.msra.mxu0 0
        %2190 = vmatprep.mubr.bf16.mxu0 0
        %2191 = vmatmul.mubr.bf16.gmra.mrb[0].mxu0 %v2153
        %v2192 = vpop.f32.mrb[0].mxu0
        %v2193 = vadd.f32 0.0, %v2192
        %v2194 = vpop.f32.mrb[0].mxu0
        %v2195 = vpop.f32.mrb[0].mxu0
        %v2196 = vpop.f32.mrb[0].mxu0
        %2197 = vdwg.mxu0
        %v2198 = vadd.f32 %v1969, %v2193
        %s2199 = scalar_lea.vmem [#allocation12], 48
        %v2200 = vld [vmem:[%s2199] sm:$0xf]
        %v2201 = vld [vmem:[%s2199 + $0x4] sm:$0xf]
        %v2202 = vld [vmem:[%s2199 + $0x8] sm:$0xf]
        %v2203 = vld [vmem:[%s2199 + $0xc] sm:$0xf]
        %s2204 = scalar_lea.vmem [#allocation13], 3
        %v2205 = vld [vmem:[%s2204] sm:$0x1]
        %v2207 = vlaneseq
        %v2208 = vshrl.u32 %v2207, 7
        %v2209 = vsub.s32 0, %v2208
        %v2210 = vrot.slane %v2205, %v2209
        %v2216 = vunpack.c.l.b16 %v2200
        %v2217 = vunpack.c.l.b16 %v2201
        %v2218 = vunpack.c.l.b16 %v2202
        %v2219 = vunpack.c.l.b16 %v2203
        %v2220 = vpack.c.b16 %v2217, %v2216
        %v2221 = vpack.c.b16 %v2219, %v2218
        %2224 = vmatprep.subr.bf16.mxu0 0
        %2225 = vmatpush1.bf16.msra.mxu0 %v2220
        %2226 = vmatprep.subr.bf16.mxu0 0
        %2227 = vmatpush1.bf16.msra.mxu0 %v2221
        %2228 = vmatprep.subr.bf16.mxu0 0
        %2229 = vmatpush1.bf16.msra.mxu0 0
        %2230 = vmatprep.subr.bf16.mxu0 0
        %2231 = vmatpush1.bf16.msra.mxu0 0
        %2232 = vmatprep.subr.bf16.mxu0 0
        %2233 = vmatpush1.bf16.msra.mxu0 0
        %2234 = vmatprep.subr.bf16.mxu0 0
        %2235 = vmatpush1.bf16.msra.mxu0 0
        %2236 = vmatprep.subr.bf16.mxu0 0
        %2237 = vmatpush1.bf16.msra.mxu0 0
        %2238 = vmatprep.subr.bf16.mxu0 0
        %2239 = vmatpush1.bf16.msra.mxu0 0
        %2240 = vmatprep.subr.bf16.mxu0 0
        %2241 = vmatpush1.bf16.msra.mxu0 0
        %2242 = vmatprep.subr.bf16.mxu0 0
        %2243 = vmatpush1.bf16.msra.mxu0 0
        %2244 = vmatprep.subr.bf16.mxu0 0
        %2245 = vmatpush1.bf16.msra.mxu0 0
        %2246 = vmatprep.subr.bf16.mxu0 0
        %2247 = vmatpush1.bf16.msra.mxu0 0
        %2248 = vmatprep.subr.bf16.mxu0 0
        %2249 = vmatpush1.bf16.msra.mxu0 0
        %2250 = vmatprep.subr.bf16.mxu0 0
        %2251 = vmatpush1.bf16.msra.mxu0 0
        %2252 = vmatprep.subr.bf16.mxu0 0
        %2253 = vmatpush1.bf16.msra.mxu0 0
        %2254 = vmatprep.subr.bf16.mxu0 0
        %2255 = vmatpush1.bf16.msra.mxu0 0
        %2256 = vmatprep.mubr.bf16.mxu0 0
        %2257 = vmatmul.mubr.bf16.gmra.mrb[0].mxu0 %v1550
        %v2258 = vpop.f32.mrb[0].mxu0
        %v2259 = vadd.f32 %v2210, %v2258
        %v2260 = vpop.f32.mrb[0].mxu0
        %v2261 = vpop.f32.mrb[0].mxu0
        %v2262 = vpop.f32.mrb[0].mxu0
        %2263 = vdwg.mxu0
        %s2264 = scalar_lea.vmem [#allocation2], 12
        %v2265 = vld [vmem:[%s2264] sm:$0xf]
        %s2266 = scalar_lea.vmem [#allocation3], 12
        %v2267 = vld [vmem:[%s2266] sm:$0xf]
        %v2268 = vpack.c.bf16 %v2259, %v2259
        %v2270 = vsel %vm1595, %v2268, 0
        %v2273 = vsel %vm1595, %v2265, 0
        %2275 = vmatprep.subr.bf16.mxu0 0
        %2276 = vmatpush1.bf16.xpose.msra.mxu0 %v2273
        %2277 = vmatprep.subr.bf16.mxu0 0
        %2278 = vmatpush1.bf16.xpose.msra.mxu0 0
        %2279 = vmatprep.subr.bf16.mxu0 0
        %2280 = vmatpush1.bf16.xpose.msra.mxu0 0
        %2281 = vmatprep.subr.bf16.mxu0 0
        %2282 = vmatpush1.bf16.xpose.msra.mxu0 0
        %2283 = vmatprep.subr.bf16.mxu0 0
        %2284 = vmatpush1.bf16.xpose.msra.mxu0 0
        %2285 = vmatprep.subr.bf16.mxu0 0
        %2286 = vmatpush1.bf16.xpose.msra.mxu0 0
        %2287 = vmatprep.subr.bf16.mxu0 0
        %2288 = vmatpush1.bf16.xpose.msra.mxu0 0
        %2289 = vmatprep.subr.bf16.mxu0 0
        %2290 = vmatpush1.bf16.xpose.msra.mxu0 0
        %2291 = vmatprep.subr.bf16.mxu0 0
        %2292 = vmatpush1.bf16.xpose.msra.mxu0 0
        %2293 = vmatprep.subr.bf16.mxu0 0
        %2294 = vmatpush1.bf16.xpose.msra.mxu0 0
        %2295 = vmatprep.subr.bf16.mxu0 0
        %2296 = vmatpush1.bf16.xpose.msra.mxu0 0
        %2297 = vmatprep.subr.bf16.mxu0 0
        %2298 = vmatpush1.bf16.xpose.msra.mxu0 0
        %2299 = vmatprep.subr.bf16.mxu0 0
        %2300 = vmatpush1.bf16.xpose.msra.mxu0 0
        %2301 = vmatprep.subr.bf16.mxu0 0
        %2302 = vmatpush1.bf16.xpose.msra.mxu0 0
        %2303 = vmatprep.subr.bf16.mxu0 0
        %2304 = vmatpush1.bf16.xpose.msra.mxu0 0
        %2305 = vmatprep.subr.bf16.mxu0 0
        %2306 = vmatpush1.bf16.xpose.msra.mxu0 0
        %2307 = vmatprep.mubr.bf16.mxu0 0
        %2308 = vmatmul.mubr.bf16.gmra.mrb[0].mxu0 %v2270
        %v2309 = vpop.f32.mrb[0].mxu0
        %v2310 = vadd.f32 0.0, %v2309
        %v2311 = vpop.f32.mrb[0].mxu0
        %v2312 = vpop.f32.mrb[0].mxu0
        %v2313 = vpop.f32.mrb[0].mxu0
        %2314 = vdwg.mxu0
        %v2315 = vmul.f32 %v2310, 0.35355338
        %v2316 = vsel %vm1595, %v2315, -inf
        %2317 = vmax.xlane.f32.xlu0 %v2316
        %v2318 = vpop.xlane.xlu0 %2317
        %v2319 = vsub.f32 %v2315, %v2318
        %v2320 = vmul.f32 %v2319, 1.442695
        %v2321 = vpow.pop %v2320
        %v2322 = vsel %vm1595, %v2321, 0.0
        %2323 = vadd.xlane.f32.xlu0 %v2322
        %v2324 = vpop.xlane.xlu0 %2323
        %v2325 = vrcp.pop %v2324
        %v2326 = vmul.f32 %v2321, %v2325
        %v2327 = vpack.c.bf16 %v2326, %v2326
        %v2329 = vsel %vm1595, %v2327, 0
        %v2332 = vsel %vm1658, %v2267, 0
        %2334 = vmatprep.subr.bf16.mxu0 0
        %2335 = vmatpush1.bf16.msra.mxu0 %v2332
        %2336 = vmatprep.subr.bf16.mxu0 0
        %2337 = vmatpush1.bf16.msra.mxu0 0
        %2338 = vmatprep.subr.bf16.mxu0 0
        %2339 = vmatpush1.bf16.msra.mxu0 0
        %2340 = vmatprep.subr.bf16.mxu0 0
        %2341 = vmatpush1.bf16.msra.mxu0 0
        %2342 = vmatprep.subr.bf16.mxu0 0
        %2343 = vmatpush1.bf16.msra.mxu0 0
        %2344 = vmatprep.subr.bf16.mxu0 0
        %2345 = vmatpush1.bf16.msra.mxu0 0
        %2346 = vmatprep.subr.bf16.mxu0 0
        %2347 = vmatpush1.bf16.msra.mxu0 0
        %2348 = vmatprep.subr.bf16.mxu0 0
        %2349 = vmatpush1.bf16.msra.mxu0 0
        %2350 = vmatprep.subr.bf16.mxu0 0
        %2351 = vmatpush1.bf16.msra.mxu0 0
        %2352 = vmatprep.subr.bf16.mxu0 0
        %2353 = vmatpush1.bf16.msra.mxu0 0
        %2354 = vmatprep.subr.bf16.mxu0 0
        %2355 = vmatpush1.bf16.msra.mxu0 0
        %2356 = vmatprep.subr.bf16.mxu0 0
        %2357 = vmatpush1.bf16.msra.mxu0 0
        %2358 = vmatprep.subr.bf16.mxu0 0
        %2359 = vmatpush1.bf16.msra.mxu0 0
        %2360 = vmatprep.subr.bf16.mxu0 0
        %2361 = vmatpush1.bf16.msra.mxu0 0
        %2362 = vmatprep.subr.bf16.mxu0 0
        %2363 = vmatpush1.bf16.msra.mxu0 0
        %2364 = vmatprep.subr.bf16.mxu0 0
        %2365 = vmatpush1.bf16.msra.mxu0 0
        %2366 = vmatprep.mubr.bf16.mxu0 0
        %2367 = vmatmul.mubr.bf16.gmra.mrb[0].mxu0 %v2329
        %v2368 = vpop.f32.mrb[0].mxu0
        %v2369 = vadd.f32 0.0, %v2368
        %v2370 = vpop.f32.mrb[0].mxu0
        %v2371 = vpop.f32.mrb[0].mxu0
        %v2372 = vpop.f32.mrb[0].mxu0
        %2373 = vdwg.mxu0
        %v2374 = vpack.c.bf16 %v2369, %v2369
        %s2375 = scalar_lea.vmem [#allocation21], 12
        %v2376 = vld [vmem:[%s2375] sm:$0xf]
        %v2378 = vsel %vm1595, %v2374, 0
        %v2381 = vsel %vm1658, %v2376, 0
        %2383 = vmatprep.subr.bf16.mxu0 0
        %2384 = vmatpush1.bf16.msra.mxu0 %v2381
        %2385 = vmatprep.subr.bf16.mxu0 0
        %2386 = vmatpush1.bf16.msra.mxu0 0
        %2387 = vmatprep.subr.bf16.mxu0 0
        %2388 = vmatpush1.bf16.msra.mxu0 0
        %2389 = vmatprep.subr.bf16.mxu0 0
        %2390 = vmatpush1.bf16.msra.mxu0 0
        %2391 = vmatprep.subr.bf16.mxu0 0
        %2392 = vmatpush1.bf16.msra.mxu0 0
        %2393 = vmatprep.subr.bf16.mxu0 0
        %2394 = vmatpush1.bf16.msra.mxu0 0
        %2395 = vmatprep.subr.bf16.mxu0 0
        %2396 = vmatpush1.bf16.msra.mxu0 0
        %2397 = vmatprep.subr.bf16.mxu0 0
        %2398 = vmatpush1.bf16.msra.mxu0 0
        %2399 = vmatprep.subr.bf16.mxu0 0
        %2400 = vmatpush1.bf16.msra.mxu0 0
        %2401 = vmatprep.subr.bf16.mxu0 0
        %2402 = vmatpush1.bf16.msra.mxu0 0
        %2403 = vmatprep.subr.bf16.mxu0 0
        %2404 = vmatpush1.bf16.msra.mxu0 0
        %2405 = vmatprep.subr.bf16.mxu0 0
        %2406 = vmatpush1.bf16.msra.mxu0 0
        %2407 = vmatprep.subr.bf16.mxu0 0
        %2408 = vmatpush1.bf16.msra.mxu0 0
        %2409 = vmatprep.subr.bf16.mxu0 0
        %2410 = vmatpush1.bf16.msra.mxu0 0
        %2411 = vmatprep.subr.bf16.mxu0 0
        %2412 = vmatpush1.bf16.msra.mxu0 0
        %2413 = vmatprep.subr.bf16.mxu0 0
        %2414 = vmatpush1.bf16.msra.mxu0 0
        %2415 = vmatprep.mubr.bf16.mxu0 0
        %2416 = vmatmul.mubr.bf16.gmra.mrb[0].mxu0 %v2378
        %v2417 = vpop.f32.mrb[0].mxu0
        %v2418 = vadd.f32 0.0, %v2417
        %v2419 = vpop.f32.mrb[0].mxu0
        %v2420 = vpop.f32.mrb[0].mxu0
        %v2421 = vpop.f32.mrb[0].mxu0
        %2422 = vdwg.mxu0
        %v2423 = vadd.f32 %v2198, %v2418
        %v2424 = vld [vmem:[#allocation22] sm:$0x1]
        %v2426 = vlaneseq
        %v2427 = vshrl.u32 %v2426, 7
        %v2428 = vsub.s32 0, %v2427
        %v2429 = vrot.slane %v2424, %v2428
        %v2431 = vadd.f32 %v2423, %v2429
        %v2432 = vadd.f32 %v1507, %v2431
        %v2433 = vld [vmem:[#allocation24] sm:$0x1]
        %v2434 = vmul.f32 %v2432, %v2432
        %v2435 = vsel %vm1509, %v2434, 0.0
        %2436 = vadd.xlane.f32.xlu0 %v2435
        %v2437 = vpop.xlane.xlu0 %2436
        %v2438 = vmul.f32 %v2437, %v1513
        %v2439 = vadd.f32 %v2438, 1e-06
        %v2440 = vrsqrt.pop %v2439
        %v2441 = vmul.f32 %v2432, %v2440
        %v2443 = vlaneseq
        %v2444 = vshrl.u32 %v2443, 7
        %v2445 = vsub.s32 0, %v2444
        %v2446 = vrot.slane %v2433, %v2445
        %v2448 = vmul.f32 %v2441, %v2446
        %v2449 = vpack.c.bf16 %v2448, %v2448
        %v2450 = vld [vmem:[#allocation25] sm:$0xf]
        %v2451 = vld [vmem:[#allocation25 + $0x4] sm:$0xf]
        %v2452 = vld [vmem:[#allocation25 + $0x8] sm:$0xf]
        %v2453 = vld [vmem:[#allocation25 + $0xc] sm:$0xf]
        %v2454 = vld [vmem:[#allocation27] sm:$0x1]
        %v2456 = vlaneseq
        %v2457 = vshrl.u32 %v2456, 7
        %v2458 = vsub.s32 0, %v2457
        %v2459 = vrot.slane %v2454, %v2458
        %v2465 = vunpack.c.l.b16 %v2450
        %v2466 = vunpack.c.l.b16 %v2451
        %v2467 = vunpack.c.l.b16 %v2452
        %v2468 = vunpack.c.l.b16 %v2453
        %v2469 = vpack.c.b16 %v2466, %v2465
        %v2470 = vpack.c.b16 %v2468, %v2467
        %v2474 = vsel %vm1509, %v2449, 0
        %2476 = vmatprep.subr.bf16.mxu0 0
        %2477 = vmatpush1.bf16.msra.mxu0 %v2469
        %2478 = vmatprep.subr.bf16.mxu0 0
        %2479 = vmatpush1.bf16.msra.mxu0 %v2470
        %2480 = vmatprep.subr.bf16.mxu0 0
        %2481 = vmatpush1.bf16.msra.mxu0 0
        %2482 = vmatprep.subr.bf16.mxu0 0
        %2483 = vmatpush1.bf16.msra.mxu0 0
        %2484 = vmatprep.subr.bf16.mxu0 0
        %2485 = vmatpush1.bf16.msra.mxu0 0
        %2486 = vmatprep.subr.bf16.mxu0 0
        %2487 = vmatpush1.bf16.msra.mxu0 0
        %2488 = vmatprep.subr.bf16.mxu0 0
        %2489 = vmatpush1.bf16.msra.mxu0 0
        %2490 = vmatprep.subr.bf16.mxu0 0
        %2491 = vmatpush1.bf16.msra.mxu0 0
        %2492 = vmatprep.subr.bf16.mxu0 0
        %2493 = vmatpush1.bf16.msra.mxu0 0
        %2494 = vmatprep.subr.bf16.mxu0 0
        %2495 = vmatpush1.bf16.msra.mxu0 0
        %2496 = vmatprep.subr.bf16.mxu0 0
        %2497 = vmatpush1.bf16.msra.mxu0 0
        %2498 = vmatprep.subr.bf16.mxu0 0
        %2499 = vmatpush1.bf16.msra.mxu0 0
        %2500 = vmatprep.subr.bf16.mxu0 0
        %2501 = vmatpush1.bf16.msra.mxu0 0
        %2502 = vmatprep.subr.bf16.mxu0 0
        %2503 = vmatpush1.bf16.msra.mxu0 0
        %2504 = vmatprep.subr.bf16.mxu0 0
        %2505 = vmatpush1.bf16.msra.mxu0 0
        %2506 = vmatprep.subr.bf16.mxu0 0
        %2507 = vmatpush1.bf16.msra.mxu0 0
        %2508 = vmatprep.mubr.bf16.mxu0 0
        %2509 = vmatmul.mubr.bf16.gmra.mrb[0].mxu0 %v2474
        %v2510 = vpop.f32.mrb[0].mxu0
        %v2511 = vadd.f32 %v2459, %v2510
        %v2512 = vpop.f32.mrb[0].mxu0
        %v2513 = vpop.f32.mrb[0].mxu0
        %v2514 = vpop.f32.mrb[0].mxu0
        %2515 = vdwg.mxu0
        %v2516 = vld [vmem:[#allocation28] sm:$0xf]
        %v2517 = vld [vmem:[#allocation28 + $0x4] sm:$0xf]
        %v2518 = vld [vmem:[#allocation28 + $0x8] sm:$0xf]
        %v2519 = vld [vmem:[#allocation28 + $0xc] sm:$0xf]
        %v2520 = vld [vmem:[#allocation30] sm:$0x1]
        %v2522 = vlaneseq
        %v2523 = vshrl.u32 %v2522, 7
        %v2524 = vsub.s32 0, %v2523
        %v2525 = vrot.slane %v2520, %v2524
        %v2531 = vunpack.c.l.b16 %v2516
        %v2532 = vunpack.c.l.b16 %v2517
        %v2533 = vunpack.c.l.b16 %v2518
        %v2534 = vunpack.c.l.b16 %v2519
        %v2535 = vpack.c.b16 %v2532, %v2531
        %v2536 = vpack.c.b16 %v2534, %v2533
        %2539 = vmatprep.subr.bf16.mxu0 0
        %2540 = vmatpush1.bf16.msra.mxu0 %v2535
        %2541 = vmatprep.subr.bf16.mxu0 0
        %2542 = vmatpush1.bf16.msra.mxu0 %v2536
        %2543 = vmatprep.subr.bf16.mxu0 0
        %2544 = vmatpush1.bf16.msra.mxu0 0
        %2545 = vmatprep.subr.bf16.mxu0 0
        %2546 = vmatpush1.bf16.msra.mxu0 0
        %2547 = vmatprep.subr.bf16.mxu0 0
        %2548 = vmatpush1.bf16.msra.mxu0 0
        %2549 = vmatprep.subr.bf16.mxu0 0
        %2550 = vmatpush1.bf16.msra.mxu0 0
        %2551 = vmatprep.subr.bf16.mxu0 0
        %2552 = vmatpush1.bf16.msra.mxu0 0
        %2553 = vmatprep.subr.bf16.mxu0 0
        %2554 = vmatpush1.bf16.msra.mxu0 0
        %2555 = vmatprep.subr.bf16.mxu0 0
        %2556 = vmatpush1.bf16.msra.mxu0 0
        %2557 = vmatprep.subr.bf16.mxu0 0
        %2558 = vmatpush1.bf16.msra.mxu0 0
        %2559 = vmatprep.subr.bf16.mxu0 0
        %2560 = vmatpush1.bf16.msra.mxu0 0
        %2561 = vmatprep.subr.bf16.mxu0 0
        %2562 = vmatpush1.bf16.msra.mxu0 0
        %2563 = vmatprep.subr.bf16.mxu0 0
        %2564 = vmatpush1.bf16.msra.mxu0 0
        %2565 = vmatprep.subr.bf16.mxu0 0
        %2566 = vmatpush1.bf16.msra.mxu0 0
        %2567 = vmatprep.subr.bf16.mxu0 0
        %2568 = vmatpush1.bf16.msra.mxu0 0
        %2569 = vmatprep.subr.bf16.mxu0 0
        %2570 = vmatpush1.bf16.msra.mxu0 0
        %2571 = vmatprep.mubr.bf16.mxu0 0
        %2572 = vmatmul.mubr.bf16.gmra.mrb[0].mxu0 %v2474
        %v2573 = vpop.f32.mrb[0].mxu0
        %v2574 = vadd.f32 %v2525, %v2573
        %v2575 = vpop.f32.mrb[0].mxu0
        %v2576 = vpop.f32.mrb[0].mxu0
        %v2577 = vpop.f32.mrb[0].mxu0
        %2578 = vdwg.mxu0
        %v2579 = vmul.f32 %v2574, 0.5
        %v2580 = vmul.f32 %v2574, 0.044715
        %v2581 = vmul.f32 %v2580, %v2574
        %v2582 = vmul.f32 %v2581, %v2574
        %v2583 = vadd.f32 %v2574, %v2582
        %v2584 = vmul.f32 %v2583, 0.7978846
        %v2585 = vtanh.pop %v2584
        %v2586 = vadd.f32 %v2585, 1.0
        %v2587 = vmul.f32 %v2579, %v2586
        %v2588 = vmul.f32 %v2511, %v2587
        %v2589 = vpack.c.bf16 %v2588, %v2588
        %v2590 = vld [vmem:[#allocation31] sm:$0xf]
        %v2591 = vld [vmem:[#allocation31 + $0x4] sm:$0xf]
        %v2592 = vld [vmem:[#allocation31 + $0x8] sm:$0xf]
        %v2593 = vld [vmem:[#allocation31 + $0xc] sm:$0xf]
        %v2594 = vld [vmem:[#allocation31 + $0x10] sm:$0xf]
        %v2595 = vld [vmem:[#allocation31 + $0x14] sm:$0xf]
        %v2596 = vld [vmem:[#allocation31 + $0x18] sm:$0xf]
        %v2597 = vld [vmem:[#allocation31 + $0x1c] sm:$0xf]
        %v2598 = vld [vmem:[#allocation31 + $0x20] sm:$0xf]
        %v2599 = vld [vmem:[#allocation31 + $0x24] sm:$0xf]
        %v2600 = vld [vmem:[#allocation31 + $0x28] sm:$0xf]
        %v2601 = vld [vmem:[#allocation31 + $0x2c] sm:$0xf]
        %v2602 = vld [vmem:[#allocation31 + $0x30] sm:$0xf]
        %v2603 = vld [vmem:[#allocation31 + $0x34] sm:$0xf]
        %v2604 = vld [vmem:[#allocation31 + $0x38] sm:$0xf]
        %v2605 = vld [vmem:[#allocation31 + $0x3c] sm:$0xf]
        %v2606 = vld [vmem:[#allocation33] sm:$0x1]
        %v2608 = vlaneseq
        %v2609 = vshrl.u32 %v2608, 7
        %v2610 = vsub.s32 0, %v2609
        %v2611 = vrot.slane %v2606, %v2610
        %v2629 = vunpack.c.l.b16 %v2590
        %v2630 = vunpack.c.l.b16 %v2591
        %v2631 = vunpack.c.l.b16 %v2592
        %v2632 = vunpack.c.l.b16 %v2593
        %v2633 = vunpack.c.l.b16 %v2594
        %v2634 = vunpack.c.l.b16 %v2595
        %v2635 = vunpack.c.l.b16 %v2596
        %v2636 = vunpack.c.l.b16 %v2597
        %v2637 = vunpack.c.l.b16 %v2598
        %v2638 = vunpack.c.l.b16 %v2599
        %v2639 = vunpack.c.l.b16 %v2600
        %v2640 = vunpack.c.l.b16 %v2601
        %v2641 = vunpack.c.l.b16 %v2602
        %v2642 = vunpack.c.l.b16 %v2603
        %v2643 = vunpack.c.l.b16 %v2604
        %v2644 = vunpack.c.l.b16 %v2605
        %v2645 = vpack.c.b16 %v2630, %v2629
        %v2646 = vpack.c.b16 %v2632, %v2631
        %v2647 = vpack.c.b16 %v2634, %v2633
        %v2648 = vpack.c.b16 %v2636, %v2635
        %v2649 = vpack.c.b16 %v2638, %v2637
        %v2650 = vpack.c.b16 %v2640, %v2639
        %v2651 = vpack.c.b16 %v2642, %v2641
        %v2652 = vpack.c.b16 %v2644, %v2643
        %2661 = vmatprep.subr.bf16.mxu0 0
        %2662 = vmatpush1.bf16.msra.mxu0 %v2645
        %2663 = vmatprep.subr.bf16.mxu0 0
        %2664 = vmatpush1.bf16.msra.mxu0 %v2646
        %2665 = vmatprep.subr.bf16.mxu0 0
        %2666 = vmatpush1.bf16.msra.mxu0 %v2647
        %2667 = vmatprep.subr.bf16.mxu0 0
        %2668 = vmatpush1.bf16.msra.mxu0 %v2648
        %2669 = vmatprep.subr.bf16.mxu0 0
        %2670 = vmatpush1.bf16.msra.mxu0 %v2649
        %2671 = vmatprep.subr.bf16.mxu0 0
        %2672 = vmatpush1.bf16.msra.mxu0 %v2650
        %2673 = vmatprep.subr.bf16.mxu0 0
        %2674 = vmatpush1.bf16.msra.mxu0 %v2651
        %2675 = vmatprep.subr.bf16.mxu0 0
        %2676 = vmatpush1.bf16.msra.mxu0 %v2652
        %2677 = vmatprep.subr.bf16.mxu0 0
        %2678 = vmatpush1.bf16.msra.mxu0 0
        %2679 = vmatprep.subr.bf16.mxu0 0
        %2680 = vmatpush1.bf16.msra.mxu0 0
        %2681 = vmatprep.subr.bf16.mxu0 0
        %2682 = vmatpush1.bf16.msra.mxu0 0
        %2683 = vmatprep.subr.bf16.mxu0 0
        %2684 = vmatpush1.bf16.msra.mxu0 0
        %2685 = vmatprep.subr.bf16.mxu0 0
        %2686 = vmatpush1.bf16.msra.mxu0 0
        %2687 = vmatprep.subr.bf16.mxu0 0
        %2688 = vmatpush1.bf16.msra.mxu0 0
        %2689 = vmatprep.subr.bf16.mxu0 0
        %2690 = vmatpush1.bf16.msra.mxu0 0
        %2691 = vmatprep.subr.bf16.mxu0 0
        %2692 = vmatpush1.bf16.msra.mxu0 0
        %2693 = vmatprep.mubr.bf16.mxu0 0
        %2694 = vmatmul.mubr.bf16.gmra.mrb[0].mxu0 %v2589
        %v2695 = vpop.f32.mrb[0].mxu0
        %v2696 = vadd.f32 %v2611, %v2695
        %v2697 = vpop.f32.mrb[0].mxu0
        %v2698 = vpop.f32.mrb[0].mxu0
        %v2699 = vpop.f32.mrb[0].mxu0
        %2700 = vdwg.mxu0
        %v2701 = vadd.f32 %v2432, %v2696
        %2702 = vst.msk [vmem:[%s925] sm:$0xff] %vm1509, %v2701
        %s2703 = sand.u32 %s485, 1
        %s2704 = scalar_lea.sflag [#allocation6], %s2703
        %s2705 = sand.u32 %s485, 1
        %s2706 = smul.addr %s2705, 8
        %s2707 = scalar_lea.vmem [#allocation34], %s2706
        // Predicated region
        $region177: #{tpu_custom_call.1} parent=95 // pred_check
          %p2708 = pneg %p495
        $region178: #{tpu_custom_call.1} parent=95 // pred_check_branch
          %2710 = sbr.rel (%p2708) target = $region180
        $region179: #{tpu_custom_call.1} parent=95 // pred_region
          %s2712 = ssub.s32 128, 128
          %2713 = vsyncadd %s2704, %s2712
          %s2714 = sadd.s32 %s52, %s51
          %s2715 = smul.addr %s2714, 128
          %s2716 = scalar_lea.hbm %s19, %s2715
          %s2718 = sshll.u32 %s2707, 4
          %s2719 = int_to_ptr.vmem [resolvable:$true] %s2718
          %2721 = dma.vmem_to_hbm [thread:$0]  %s2719, 128, %s2716, %s2704
        $region180: #{tpu_custom_call.1} parent=95 // pred_fallthru
          _
      $region96: #{tpu_custom_call.1} parent=5 // pred_fallthru
        _
      %p2722 = scmp.le.s32.totalorder 2, %s42
      // Predicated region
      $region181: #{tpu_custom_call.1} parent=5 // pred_check
        %p2723 = pneg %p2722
      $region182: #{tpu_custom_call.1} parent=5 // pred_check_branch
        %2725 = sbr.rel (%p2723) target = $region184
      $region183: #{tpu_custom_call.1} parent=5 // pred_region
        %s2726 = ssub.s32 %s42, 2
        // Predicated region
        $region185: #{tpu_custom_call.1} parent=183 // pred_check
          %p2727 = pneg %p501
        $region186: #{tpu_custom_call.1} parent=183 // pred_check_branch
          %2729 = sbr.rel (%p2727) target = $region188
        $region187: #{tpu_custom_call.1} parent=183 // pred_region
          %s2730 = sand.u32 %s486, 1
          %s2731 = scalar_lea.sflag [#allocation6], %s2730
          %s2732 = sand.u32 %s486, 1
          %s2733 = smul.addr %s2732, 8
          %s2734 = scalar_lea.vmem [#allocation34], %s2733
          %2735 = dma.done %s2731, 128
        $region188: #{tpu_custom_call.1} parent=183 // pred_fallthru
          _
      $region184: #{tpu_custom_call.1} parent=5 // pred_fallthru
        _
    $region6: #{tpu_custom_call.1} parent=1 // loop_footer
      %s46 = sadd.s32 1, %s42
    $region7: #{tpu_custom_call.1} parent=1 // loop_footer_branch
      %41 = sbr.rel target = $region3
    $region8: #{tpu_custom_call.1} parent=1 // loop_exit
      _
    %2736 = vsyncpa [#allocation5], 1
    %s2737 = scalar_lea.sflag [#allocation5], 1
    %2738 = vsyncpa %s2737, 1
    %2739 = vsyncpa [#allocation8], 1
    %s2740 = scalar_lea.sflag [#allocation8], 1
    %2741 = vsyncpa %s2740, 1
    %2742 = vsyncpa [#allocation11], 1
    %2743 = vsyncpa [#allocation14], 1
    %2744 = vsyncpa [#allocation17], 1
    %2745 = vsyncpa [#allocation20], 1
    %2746 = vsyncpa [#allocation23], 1
    %2747 = vsyncpa [#allocation26], 1
    %2748 = vsyncpa [#allocation29], 1
    %2749 = vsyncpa [#allocation32], 1
    %2750 = vsyncpa [#allocation6], 1
    %s2751 = scalar_lea.sflag [#allocation6], 1
    %2752 = vsyncpa %s2751, 1

</llo_original>
